<compile_context>
chip_gen: v6e
topology: v6e:2x2x1
jax: 0.10.0
libtpu: 0.0.40
codegen_flags: <defaults>
</compile_context>

<pallas_src>
import functools

import numpy as np
import jax
import jax.numpy as jnp
from jax import lax
from jax.experimental import pallas as pl
from jax.experimental.pallas import tpu as pltpu


def _round_up(x, m):
    return ((x + m - 1) // m) * m


def _convt3d_kernel(x_ref, w_ref, b_ref, o_ref, acc_ref, *, K, d, H_out, W_out):
    # x_ref:   (H_pad, W_pad, Cin_p)   one padded depth slice of one batch element
    # w_ref:   (K*K*K, Cin_p, Cout_p)  spatially flipped ConvTranspose weights
    # b_ref:   (1, Cout_p)
    # o_ref:   (H_out, W_out, Cout_p)  one output depth slab of one batch element
    # acc_ref: (H_out*W_out, Cout_p)   f32 accumulator carried across the kd axis
    kd = pl.program_id(2)
    M = H_out * W_out
    cin_p = x_ref.shape[-1]

    @pl.when(kd == 0)
    def _():
        acc_ref[...] = jnp.zeros_like(acc_ref)

    for kh in range(K):
        for kw in range(K):
            win = x_ref[pl.ds(kh * d, H_out), pl.ds(kw * d, W_out), :]   # (H_out, W_out, Cin_p)
            lhs = win.reshape(M, cin_p)                                  # (M, Cin_p)
            acc_ref[...] += jnp.dot(lhs, w_ref[kd * K * K + kh * K + kw],
                                    preferred_element_type=jnp.float32)

    @pl.when(kd == pl.num_programs(2) - 1)
    def _():
        res = acc_ref[...] + b_ref[...]                                  # (M, Cout_p)
        o_ref[...] = res.reshape(o_ref.shape).astype(o_ref.dtype)


def _add_coords_rank3(x):
    """AddCoords(rank=3, with_r=False), faithful to the reference PyTorch code
    (including its use of dim_x for the z range and of yy_channel for zz_channel)."""
    B, C, Dz, Dy, Dx = x.shape
    if Dz != Dx:
        # torch.meshgrid([arange(dim_x), arange(dim_y), arange(dim_x)]) builds
        # (dim_x, dim_y, dim_x) grids; the concat only works when dim_z == dim_x.
        raise ValueError("AddCoords(rank=3) requires dim_z == dim_x (as in the reference)")
    i = jnp.arange(Dz, dtype=jnp.float32)             # first meshgrid axis (z position)
    j = jnp.arange(Dy, dtype=jnp.float32)             # second meshgrid axis (y position)
    ch_x = (i / (Dy - 1)) * 2.0 - 1.0                 # xx_channel
    ch_y = (j / (Dz - 1)) * 2.0 - 1.0                 # yy_channel
    ch_z = ((j / (Dz - 1)) / (Dx - 1)) * 2.0 - 1.0    # zz_channel (built from yy_channel)
    cx = jnp.broadcast_to(ch_x[:, None, None], (Dz, Dy, Dx))
    cy = jnp.broadcast_to(ch_y[None, :, None], (Dz, Dy, Dx))
    cz = jnp.broadcast_to(ch_z[None, :, None], (Dz, Dy, Dx))
    coords = jnp.broadcast_to(jnp.stack([cx, cy, cz], axis=0)[None], (B, 3, Dz, Dy, Dx))
    return jnp.concatenate([x.astype(jnp.float32), coords], axis=1)      # (B, Cin+3, Dz, Dy, Dx)


def coord_conv_transpose3d(x, weight, bias, *, stride=1, padding=0,
                           output_padding=0, dilation=1):
    """Forward of CoordConvTranspose3d.

    x:      (B, Cin, D, H, W) float32, NCDHW
    weight: (Cin + 3, Cout, K, K, K)  (PyTorch ConvTranspose3d layout)
    bias:   (Cout,)
    returns (B, Cout, D_out, H_out, W_out) NCDHW
    """
    B, Cin, Dz, Dy, Dx = x.shape
    Cin_t, Cout, K, K2, K3 = weight.shape
    assert K == K2 == K3 and Cin_t == Cin + 3
    s, p, op, d = stride, padding, output_padding, dilation

    # ---- AddCoords (rank=3, with_r=False) -- glue ----
    x_cc = _add_coords_rank3(x)                                          # (B, Cin+3, D, H, W)

    # ---- ConvTranspose3d == stride-1 correlation on zero-inserted, padded input ----
    D_out = (Dz - 1) * s - 2 * p + d * (K - 1) + op + 1
    H_out = (Dy - 1) * s - 2 * p + d * (K - 1) + op + 1
    W_out = (Dx - 1) * s - 2 * p + d * (K - 1) + op + 1
    pt = d * (K - 1) - p
    pb = d * (K - 1) - p + op

    # Lane-friendly channel padding (unmasked stores, clean MXU tiles).
    Cin_p = _round_up(Cin_t, 128)
    Cout_p = _round_up(Cout, 128)

    x_ndhwc = jnp.transpose(x_cc, (0, 2, 3, 4, 1))                       # (B, D, H, W, Cin_t)
    # interior padding = zero insertion (stride); edge padding may crop if negative;
    # channel axis zero-padded to Cin_p — all in a single lax.pad.
    x_pad = lax.pad(
        x_ndhwc, jnp.array(0.0, dtype=x_ndhwc.dtype),
        [(0, 0, 0), (pt, pb, s - 1), (pt, pb, s - 1), (pt, pb, s - 1),
         (0, Cin_p - Cin_t, 0)])
    _, D_pad, H_pad, W_pad, _ = x_pad.shape

    # w_mat[(kd*K+kh)*K+kw, ci, co] = weight[ci, co, K-1-kd, K-1-kh, K-1-kw], channel padded.
    w_flip = weight[:, :, ::-1, ::-1, ::-1]
    w_mat = jnp.transpose(w_flip, (2, 3, 4, 0, 1)).reshape(K * K * K, Cin_t, Cout)
    w_mat = jnp.pad(w_mat.astype(jnp.float32),
                    ((0, 0), (0, Cin_p - Cin_t), (0, Cout_p - Cout)))
    b_mat = jnp.pad(bias.astype(jnp.float32), (0, Cout_p - Cout)).reshape(1, Cout_p)

    kernel = functools.partial(_convt3d_kernel, K=K, d=d, H_out=H_out, W_out=W_out)

    flops = 2 * B * D_out * H_out * W_out * (K ** 3) * Cin_p * Cout_p
    bytes_accessed = (x_pad.size * 4 * K          # each padded depth slice fetched <= K times
                      + w_mat.size * 4 + b_mat.size * 4
                      + B * D_out * H_out * W_out * Cout_p * 4)

    out_ndhwc = pl.pallas_call(
        kernel,
        out_shape=jax.ShapeDtypeStruct((B, D_out, H_out, W_out, Cout_p), jnp.float32),
        grid_spec=pltpu.PrefetchScalarGridSpec(
            num_scalar_prefetch=0,
            grid=(B, D_out, K),                   # kd (reduction) innermost
            in_specs=[
                # one padded depth slice per step: block size 1 along D_pad, so the
                # block index is the element index zo + kd*dilation (bounded VMEM).
                pl.BlockSpec((None, None, H_pad, W_pad, Cin_p),
                             lambda b, zo, kd: (b, zo + kd * d, 0, 0, 0)),
                # full flipped weight stays resident (constant block index -> DMA'd once).
                pl.BlockSpec((K * K * K, Cin_p, Cout_p), lambda b, zo, kd: (0, 0, 0)),
                pl.BlockSpec((1, Cout_p), lambda b, zo, kd: (0, 0)),
            ],
            out_specs=pl.BlockSpec((None, None, H_out, W_out, Cout_p),
                                   lambda b, zo, kd: (b, zo, 0, 0, 0)),
            scratch_shapes=[pltpu.VMEM((H_out * W_out, Cout_p), jnp.float32)],
        ),
        compiler_params=pltpu.CompilerParams(
            dimension_semantics=("parallel", "parallel", "arbitrary")),
        cost_estimate=pl.CostEstimate(flops=int(flops), transcendentals=0,
                                      bytes_accessed=int(bytes_accessed)),
    )(x_pad, w_mat, b_mat)

    out = out_ndhwc[..., :Cout]                                          # drop channel padding
    return jnp.transpose(out, (0, 4, 1, 2, 3))                           # back to NCDHW


def _reference_numpy(x, w, b, s, p, op, d):
    """Direct numpy implementation of AddCoords(rank=3) + ConvTranspose3d (PyTorch semantics)."""
    B, C, Dz, Dy, Dx = x.shape
    i = np.arange(Dz, dtype=np.float32)
    j = np.arange(Dy, dtype=np.float32)
    ch_x = (i / (Dy - 1)) * 2.0 - 1.0
    ch_y = (j / (Dz - 1)) * 2.0 - 1.0
    ch_z = ((j / (Dz - 1)) / (Dx - 1)) * 2.0 - 1.0
    cx = np.broadcast_to(ch_x[:, None, None], (Dz, Dy, Dx))
    cy = np.broadcast_to(ch_y[None, :, None], (Dz, Dy, Dx))
    cz = np.broadcast_to(ch_z[None, :, None], (Dz, Dy, Dx))
    coords = np.broadcast_to(np.stack([cx, cy, cz], 0)[None], (B, 3, Dz, Dy, Dx))
    xc = np.concatenate([x.astype(np.float32), coords], axis=1)

    Cin_t, Cout, K, _, _ = w.shape
    D_out = (Dz - 1) * s - 2 * p + d * (K - 1) + op + 1
    H_out = (Dy - 1) * s - 2 * p + d * (K - 1) + op + 1
    W_out = (Dx - 1) * s - 2 * p + d * (K - 1) + op + 1
    out = np.zeros((B, Cout, D_out, H_out, W_out), np.float32)
    for zi in range(Dz):
        for yi in range(Dy):
            for xi in range(Dx):
                for kd in range(K):
                    for kh in range(K):
                        for kw in range(K):
                            oz = zi * s - p + kd * d
                            oy = yi * s - p + kh * d
                            ox = xi * s - p + kw * d
                            if 0 <= oz < D_out and 0 <= oy < H_out and 0 <= ox < W_out:
                                out[:, :, oz, oy, ox] += np.einsum(
                                    'nc,co->no', xc[:, :, zi, yi, xi], w[:, :, kd, kh, kw])
    return out + b[None, :, None, None, None]


if __name__ == "__main__":
    B, Cin, D, H, W = 2, 4, 8, 8, 8
    Cout, K = 8, 3
    stride, padding, output_padding, dilation = 2, 1, 1, 1

    key = jax.random.PRNGKey(0)
    kx, kw_, kb = jax.random.split(key, 3)
    x = jax.random.normal(kx, (B, Cin, D, H, W), dtype=jnp.float32)
    bound = 1.0 / np.sqrt(Cout * K * K * K)
    # nn.ConvTranspose3d weight layout: (in_channels, out_channels/groups, kD, kH, kW)
    weight = jax.random.uniform(kw_, (Cin + 3, Cout, K, K, K), jnp.float32,
                                minval=-bound, maxval=bound)
    bias = jax.random.uniform(kb, (Cout,), jnp.float32, minval=-bound, maxval=bound)

    out = coord_conv_transpose3d(x, weight, bias, stride=stride, padding=padding,
                                 output_padding=output_padding, dilation=dilation)
    out = jax.block_until_ready(out)

    ref = _reference_numpy(np.asarray(x), np.asarray(weight), np.asarray(bias),
                           stride, padding, output_padding, dilation)
    assert out.shape == ref.shape, (out.shape, ref.shape)
    max_err = float(np.max(np.abs(np.asarray(out) - ref)))
    assert np.allclose(np.asarray(out), ref, rtol=1e-4, atol=1e-4), max_err
    print("KERNEL_OK")
</pallas_src>

<mosaic_0001>
module attributes {stable_mosaic.version = 11 : i64} {
  func.func @_convt3d_kernel(%arg0: i32, %arg1: i32, %arg2: i32, %arg3: memref<1x1x18x18x128xf32, #tpu.memory_space<vmem>>, %arg4: memref<27x128x128xf32, #tpu.memory_space<vmem>>, %arg5: memref<1x128xf32, #tpu.memory_space<vmem>>, %arg6: memref<1x1x16x16x128xf32, #tpu.memory_space<vmem>>, %arg7: memref<256x128xf32, #tpu.memory_space<vmem>>) attributes {dimension_semantics = [#tpu.dimension_semantics<parallel>, #tpu.dimension_semantics<parallel>, #tpu.dimension_semantics<arbitrary>], iteration_bounds = array<i64: 2, 16, 3>, scalar_prefetch = 0 : i64, scratch_operands = 1 : i64, tpu.core_type = #tpu.core_type<tc>, window_params = [{transform_indices = @transform_0, window_bounds = array<i64: 1, 1, 18, 18, 128>}, {pipeline_mode = #tpu.pipeline_mode<synchronous>, transform_indices = @transform_1, window_bounds = array<i64: 27, 128, 128>}, {pipeline_mode = #tpu.pipeline_mode<synchronous>, transform_indices = @transform_2, window_bounds = array<i64: 1, 128>}, {transform_indices = @transform_3, window_bounds = array<i64: 1, 1, 16, 16, 128>}]} {
    %c0_i32 = arith.constant 0 : i32
    %0 = arith.cmpi eq, %arg2, %c0_i32 : i32
    %1 = arith.extui %0 : i1 to i32
    %c0_i32_0 = arith.constant 0 : i32
    %2 = arith.cmpi ne, %1, %c0_i32_0 : i32
    scf.if %2 {
      %cst_139 = arith.constant 0.000000e+00 : f32
      %132 = vector.broadcast %cst_139 : f32 to vector<256x128xf32>
      %c0_140 = arith.constant 0 : index
      %c0_141 = arith.constant 0 : index
      %133 = vector.load %arg7[%c0_140, %c0_141] : memref<256x128xf32, #tpu.memory_space<vmem>>, vector<256x128xf32>
      tpu.vector_store %arg7[%c0_140, %c0_141], %132 {strides = array<i32>} : memref<256x128xf32, #tpu.memory_space<vmem>>, vector<256x128xf32>,
    } else {
    }
    %c0 = arith.constant 0 : index
    %c0_1 = arith.constant 0 : index
    %c0_2 = arith.constant 0 : index
    %c0_3 = arith.constant 0 : index
    %c0_4 = arith.constant 0 : index
    %3 = vector.load %arg3[%c0, %c0_1, %c0_2, %c0_3, %c0_4] : memref<1x1x18x18x128xf32, #tpu.memory_space<vmem>>, vector<1x1x16x16x128xf32>
    %4 = vector.shape_cast %3 : vector<1x1x16x16x128xf32> to vector<16x16x128xf32>
    %5 = vector.shape_cast %4 : vector<16x16x128xf32> to vector<256x128xf32>
    %c0_5 = arith.constant 0 : index
    %c0_6 = arith.constant 0 : index
    %6 = vector.load %arg7[%c0_5, %c0_6] : memref<256x128xf32, #tpu.memory_space<vmem>>, vector<256x128xf32>
    %c3_i32 = arith.constant 3 : i32
    %7 = arith.muli %arg2, %c3_i32 : i32
    %c3_i32_7 = arith.constant 3 : i32
    %8 = arith.muli %7, %c3_i32_7 : i32
    %c0_i32_8 = arith.constant 0 : i32
    %9 = arith.addi %8, %c0_i32_8 : i32
    %c0_i32_9 = arith.constant 0 : i32
    %10 = arith.addi %9, %c0_i32_9 : i32
    %11 = arith.index_cast %10 : i32 to index
    %c0_10 = arith.constant 0 : index
    %c0_11 = arith.constant 0 : index
    %12 = vector.load %arg4[%11, %c0_10, %c0_11] : memref<27x128x128xf32, #tpu.memory_space<vmem>>, vector<1x128x128xf32>
    %13 = vector.shape_cast %12 : vector<1x128x128xf32> to vector<128x128xf32>
    %cst = arith.constant dense<0.000000e+00> : vector<256x128xf32>
    %14 = tpu.matmul %5, %13, %cst {dimension_numbers = #tpu.dot_dimension_numbers<[1], [0], [0], [1], [0, 0, 1, 1], [], []>} : vector<256x128xf32>, vector<128x128xf32>, vector<256x128xf32> -> vector<256x128xf32>
    %15 = arith.addf %6, %14 : vector<256x128xf32>
    %c0_12 = arith.constant 0 : index
    %c0_13 = arith.constant 0 : index
    %16 = vector.load %arg7[%c0_12, %c0_13] : memref<256x128xf32, #tpu.memory_space<vmem>>, vector<256x128xf32>
    tpu.vector_store %arg7[%c0_12, %c0_13], %15 {strides = array<i32>} : memref<256x128xf32, #tpu.memory_space<vmem>>, vector<256x128xf32>,
    %c0_14 = arith.constant 0 : index
    %c0_15 = arith.constant 0 : index
    %c0_16 = arith.constant 0 : index
    %c1 = arith.constant 1 : index
    %c0_17 = arith.constant 0 : index
    %17 = vector.load %arg3[%c0_14, %c0_15, %c0_16, %c1, %c0_17] : memref<1x1x18x18x128xf32, #tpu.memory_space<vmem>>, vector<1x1x16x16x128xf32>
    %18 = vector.shape_cast %17 : vector<1x1x16x16x128xf32> to vector<16x16x128xf32>
    %19 = vector.shape_cast %18 : vector<16x16x128xf32> to vector<256x128xf32>
    %c0_18 = arith.constant 0 : index
    %c0_19 = arith.constant 0 : index
    %20 = vector.load %arg7[%c0_18, %c0_19] : memref<256x128xf32, #tpu.memory_space<vmem>>, vector<256x128xf32>
    %c3_i32_20 = arith.constant 3 : i32
    %21 = arith.muli %arg2, %c3_i32_20 : i32
    %c3_i32_21 = arith.constant 3 : i32
    %22 = arith.muli %21, %c3_i32_21 : i32
    %c0_i32_22 = arith.constant 0 : i32
    %23 = arith.addi %22, %c0_i32_22 : i32
    %c1_i32 = arith.constant 1 : i32
    %24 = arith.addi %23, %c1_i32 : i32
    %25 = arith.index_cast %24 : i32 to index
    %c0_23 = arith.constant 0 : index
    %c0_24 = arith.constant 0 : index
    %26 = vector.load %arg4[%25, %c0_23, %c0_24] : memref<27x128x128xf32, #tpu.memory_space<vmem>>, vector<1x128x128xf32>
    %27 = vector.shape_cast %26 : vector<1x128x128xf32> to vector<128x128xf32>
    %cst_25 = arith.constant dense<0.000000e+00> : vector<256x128xf32>
    %28 = tpu.matmul %19, %27, %cst_25 {dimension_numbers = #tpu.dot_dimension_numbers<[1], [0], [0], [1], [0, 0, 1, 1], [], []>} : vector<256x128xf32>, vector<128x128xf32>, vector<256x128xf32> -> vector<256x128xf32>
    %29 = arith.addf %20, %28 : vector<256x128xf32>
    %c0_26 = arith.constant 0 : index
    %c0_27 = arith.constant 0 : index
    %30 = vector.load %arg7[%c0_26, %c0_27] : memref<256x128xf32, #tpu.memory_space<vmem>>, vector<256x128xf32>
    tpu.vector_store %arg7[%c0_26, %c0_27], %29 {strides = array<i32>} : memref<256x128xf32, #tpu.memory_space<vmem>>, vector<256x128xf32>,
    %c0_28 = arith.constant 0 : index
    %c0_29 = arith.constant 0 : index
    %c0_30 = arith.constant 0 : index
    %c2 = arith.constant 2 : index
    %c0_31 = arith.constant 0 : index
    %31 = vector.load %arg3[%c0_28, %c0_29, %c0_30, %c2, %c0_31] : memref<1x1x18x18x128xf32, #tpu.memory_space<vmem>>, vector<1x1x16x16x128xf32>
    %32 = vector.shape_cast %31 : vector<1x1x16x16x128xf32> to vector<16x16x128xf32>
    %33 = vector.shape_cast %32 : vector<16x16x128xf32> to vector<256x128xf32>
    %c0_32 = arith.constant 0 : index
    %c0_33 = arith.constant 0 : index
    %34 = vector.load %arg7[%c0_32, %c0_33] : memref<256x128xf32, #tpu.memory_space<vmem>>, vector<256x128xf32>
    %c3_i32_34 = arith.constant 3 : i32
    %35 = arith.muli %arg2, %c3_i32_34 : i32
    %c3_i32_35 = arith.constant 3 : i32
    %36 = arith.muli %35, %c3_i32_35 : i32
    %c0_i32_36 = arith.constant 0 : i32
    %37 = arith.addi %36, %c0_i32_36 : i32
    %c2_i32 = arith.constant 2 : i32
    %38 = arith.addi %37, %c2_i32 : i32
    %39 = arith.index_cast %38 : i32 to index
    %c0_37 = arith.constant 0 : index
    %c0_38 = arith.constant 0 : index
    %40 = vector.load %arg4[%39, %c0_37, %c0_38] : memref<27x128x128xf32, #tpu.memory_space<vmem>>, vector<1x128x128xf32>
    %41 = vector.shape_cast %40 : vector<1x128x128xf32> to vector<128x128xf32>
    %cst_39 = arith.constant dense<0.000000e+00> : vector<256x128xf32>
    %42 = tpu.matmul %33, %41, %cst_39 {dimension_numbers = #tpu.dot_dimension_numbers<[1], [0], [0], [1], [0, 0, 1, 1], [], []>} : vector<256x128xf32>, vector<128x128xf32>, vector<256x128xf32> -> vector<256x128xf32>
    %43 = arith.addf %34, %42 : vector<256x128xf32>
    %c0_40 = arith.constant 0 : index
    %c0_41 = arith.constant 0 : index
    %44 = vector.load %arg7[%c0_40, %c0_41] : memref<256x128xf32, #tpu.memory_space<vmem>>, vector<256x128xf32>
    tpu.vector_store %arg7[%c0_40, %c0_41], %43 {strides = array<i32>} : memref<256x128xf32, #tpu.memory_space<vmem>>, vector<256x128xf32>,
    %c0_42 = arith.constant 0 : index
    %c0_43 = arith.constant 0 : index
    %c1_44 = arith.constant 1 : index
    %c0_45 = arith.constant 0 : index
    %c0_46 = arith.constant 0 : index
    %45 = vector.load %arg3[%c0_42, %c0_43, %c1_44, %c0_45, %c0_46] : memref<1x1x18x18x128xf32, #tpu.memory_space<vmem>>, vector<1x1x16x16x128xf32>
    %46 = vector.shape_cast %45 : vector<1x1x16x16x128xf32> to vector<16x16x128xf32>
    %47 = vector.shape_cast %46 : vector<16x16x128xf32> to vector<256x128xf32>
    %c0_47 = arith.constant 0 : index
    %c0_48 = arith.constant 0 : index
    %48 = vector.load %arg7[%c0_47, %c0_48] : memref<256x128xf32, #tpu.memory_space<vmem>>, vector<256x128xf32>
    %c3_i32_49 = arith.constant 3 : i32
    %49 = arith.muli %arg2, %c3_i32_49 : i32
    %c3_i32_50 = arith.constant 3 : i32
    %50 = arith.muli %49, %c3_i32_50 : i32
    %c3_i32_51 = arith.constant 3 : i32
    %51 = arith.addi %50, %c3_i32_51 : i32
    %c0_i32_52 = arith.constant 0 : i32
    %52 = arith.addi %51, %c0_i32_52 : i32
    %53 = arith.index_cast %52 : i32 to index
    %c0_53 = arith.constant 0 : index
    %c0_54 = arith.constant 0 : index
    %54 = vector.load %arg4[%53, %c0_53, %c0_54] : memref<27x128x128xf32, #tpu.memory_space<vmem>>, vector<1x128x128xf32>
    %55 = vector.shape_cast %54 : vector<1x128x128xf32> to vector<128x128xf32>
    %cst_55 = arith.constant dense<0.000000e+00> : vector<256x128xf32>
    %56 = tpu.matmul %47, %55, %cst_55 {dimension_numbers = #tpu.dot_dimension_numbers<[1], [0], [0], [1], [0, 0, 1, 1], [], []>} : vector<256x128xf32>, vector<128x128xf32>, vector<256x128xf32> -> vector<256x128xf32>
    %57 = arith.addf %48, %56 : vector<256x128xf32>
    %c0_56 = arith.constant 0 : index
    %c0_57 = arith.constant 0 : index
    %58 = vector.load %arg7[%c0_56, %c0_57] : memref<256x128xf32, #tpu.memory_space<vmem>>, vector<256x128xf32>
    tpu.vector_store %arg7[%c0_56, %c0_57], %57 {strides = array<i32>} : memref<256x128xf32, #tpu.memory_space<vmem>>, vector<256x128xf32>,
    %c0_58 = arith.constant 0 : index
    %c0_59 = arith.constant 0 : index
    %c1_60 = arith.constant 1 : index
    %c1_61 = arith.constant 1 : index
    %c0_62 = arith.constant 0 : index
    %59 = vector.load %arg3[%c0_58, %c0_59, %c1_60, %c1_61, %c0_62] : memref<1x1x18x18x128xf32, #tpu.memory_space<vmem>>, vector<1x1x16x16x128xf32>
    %60 = vector.shape_cast %59 : vector<1x1x16x16x128xf32> to vector<16x16x128xf32>
    %61 = vector.shape_cast %60 : vector<16x16x128xf32> to vector<256x128xf32>
    %c0_63 = arith.constant 0 : index
    %c0_64 = arith.constant 0 : index
    %62 = vector.load %arg7[%c0_63, %c0_64] : memref<256x128xf32, #tpu.memory_space<vmem>>, vector<256x128xf32>
    %c3_i32_65 = arith.constant 3 : i32
    %63 = arith.muli %arg2, %c3_i32_65 : i32
    %c3_i32_66 = arith.constant 3 : i32
    %64 = arith.muli %63, %c3_i32_66 : i32
    %c3_i32_67 = arith.constant 3 : i32
    %65 = arith.addi %64, %c3_i32_67 : i32
    %c1_i32_68 = arith.constant 1 : i32
    %66 = arith.addi %65, %c1_i32_68 : i32
    %67 = arith.index_cast %66 : i32 to index
    %c0_69 = arith.constant 0 : index
    %c0_70 = arith.constant 0 : index
    %68 = vector.load %arg4[%67, %c0_69, %c0_70] : memref<27x128x128xf32, #tpu.memory_space<vmem>>, vector<1x128x128xf32>
    %69 = vector.shape_cast %68 : vector<1x128x128xf32> to vector<128x128xf32>
    %cst_71 = arith.constant dense<0.000000e+00> : vector<256x128xf32>
    %70 = tpu.matmul %61, %69, %cst_71 {dimension_numbers = #tpu.dot_dimension_numbers<[1], [0], [0], [1], [0, 0, 1, 1], [], []>} : vector<256x128xf32>, vector<128x128xf32>, vector<256x128xf32> -> vector<256x128xf32>
    %71 = arith.addf %62, %70 : vector<256x128xf32>
    %c0_72 = arith.constant 0 : index
    %c0_73 = arith.constant 0 : index
    %72 = vector.load %arg7[%c0_72, %c0_73] : memref<256x128xf32, #tpu.memory_space<vmem>>, vector<256x128xf32>
    tpu.vector_store %arg7[%c0_72, %c0_73], %71 {strides = array<i32>} : memref<256x128xf32, #tpu.memory_space<vmem>>, vector<256x128xf32>,
    %c0_74 = arith.constant 0 : index
    %c0_75 = arith.constant 0 : index
    %c1_76 = arith.constant 1 : index
    %c2_77 = arith.constant 2 : index
    %c0_78 = arith.constant 0 : index
    %73 = vector.load %arg3[%c0_74, %c0_75, %c1_76, %c2_77, %c0_78] : memref<1x1x18x18x128xf32, #tpu.memory_space<vmem>>, vector<1x1x16x16x128xf32>
    %74 = vector.shape_cast %73 : vector<1x1x16x16x128xf32> to vector<16x16x128xf32>
    %75 = vector.shape_cast %74 : vector<16x16x128xf32> to vector<256x128xf32>
    %c0_79 = arith.constant 0 : index
    %c0_80 = arith.constant 0 : index
    %76 = vector.load %arg7[%c0_79, %c0_80] : memref<256x128xf32, #tpu.memory_space<vmem>>, vector<256x128xf32>
    %c3_i32_81 = arith.constant 3 : i32
    %77 = arith.muli %arg2, %c3_i32_81 : i32
    %c3_i32_82 = arith.constant 3 : i32
    %78 = arith.muli %77, %c3_i32_82 : i32
    %c3_i32_83 = arith.constant 3 : i32
    %79 = arith.addi %78, %c3_i32_83 : i32
    %c2_i32_84 = arith.constant 2 : i32
    %80 = arith.addi %79, %c2_i32_84 : i32
    %81 = arith.index_cast %80 : i32 to index
    %c0_85 = arith.constant 0 : index
    %c0_86 = arith.constant 0 : index
    %82 = vector.load %arg4[%81, %c0_85, %c0_86] : memref<27x128x128xf32, #tpu.memory_space<vmem>>, vector<1x128x128xf32>
    %83 = vector.shape_cast %82 : vector<1x128x128xf32> to vector<128x128xf32>
    %cst_87 = arith.constant dense<0.000000e+00> : vector<256x128xf32>
    %84 = tpu.matmul %75, %83, %cst_87 {dimension_numbers = #tpu.dot_dimension_numbers<[1], [0], [0], [1], [0, 0, 1, 1], [], []>} : vector<256x128xf32>, vector<128x128xf32>, vector<256x128xf32> -> vector<256x128xf32>
    %85 = arith.addf %76, %84 : vector<256x128xf32>
    %c0_88 = arith.constant 0 : index
    %c0_89 = arith.constant 0 : index
    %86 = vector.load %arg7[%c0_88, %c0_89] : memref<256x128xf32, #tpu.memory_space<vmem>>, vector<256x128xf32>
    tpu.vector_store %arg7[%c0_88, %c0_89], %85 {strides = array<i32>} : memref<256x128xf32, #tpu.memory_space<vmem>>, vector<256x128xf32>,
    %c0_90 = arith.constant 0 : index
    %c0_91 = arith.constant 0 : index
    %c2_92 = arith.constant 2 : index
    %c0_93 = arith.constant 0 : index
    %c0_94 = arith.constant 0 : index
    %87 = vector.load %arg3[%c0_90, %c0_91, %c2_92, %c0_93, %c0_94] : memref<1x1x18x18x128xf32, #tpu.memory_space<vmem>>, vector<1x1x16x16x128xf32>
    %88 = vector.shape_cast %87 : vector<1x1x16x16x128xf32> to vector<16x16x128xf32>
    %89 = vector.shape_cast %88 : vector<16x16x128xf32> to vector<256x128xf32>
    %c0_95 = arith.constant 0 : index
    %c0_96 = arith.constant 0 : index
    %90 = vector.load %arg7[%c0_95, %c0_96] : memref<256x128xf32, #tpu.memory_space<vmem>>, vector<256x128xf32>
    %c3_i32_97 = arith.constant 3 : i32
    %91 = arith.muli %arg2, %c3_i32_97 : i32
    %c3_i32_98 = arith.constant 3 : i32
    %92 = arith.muli %91, %c3_i32_98 : i32
    %c6_i32 = arith.constant 6 : i32
    %93 = arith.addi %92, %c6_i32 : i32
    %c0_i32_99 = arith.constant 0 : i32
    %94 = arith.addi %93, %c0_i32_99 : i32
    %95 = arith.index_cast %94 : i32 to index
    %c0_100 = arith.constant 0 : index
    %c0_101 = arith.constant 0 : index
    %96 = vector.load %arg4[%95, %c0_100, %c0_101] : memref<27x128x128xf32, #tpu.memory_space<vmem>>, vector<1x128x128xf32>
    %97 = vector.shape_cast %96 : vector<1x128x128xf32> to vector<128x128xf32>
    %cst_102 = arith.constant dense<0.000000e+00> : vector<256x128xf32>
    %98 = tpu.matmul %89, %97, %cst_102 {dimension_numbers = #tpu.dot_dimension_numbers<[1], [0], [0], [1], [0, 0, 1, 1], [], []>} : vector<256x128xf32>, vector<128x128xf32>, vector<256x128xf32> -> vector<256x128xf32>
    %99 = arith.addf %90, %98 : vector<256x128xf32>
    %c0_103 = arith.constant 0 : index
    %c0_104 = arith.constant 0 : index
    %100 = vector.load %arg7[%c0_103, %c0_104] : memref<256x128xf32, #tpu.memory_space<vmem>>, vector<256x128xf32>
    tpu.vector_store %arg7[%c0_103, %c0_104], %99 {strides = array<i32>} : memref<256x128xf32, #tpu.memory_space<vmem>>, vector<256x128xf32>,
    %c0_105 = arith.constant 0 : index
    %c0_106 = arith.constant 0 : index
    %c2_107 = arith.constant 2 : index
    %c1_108 = arith.constant 1 : index
    %c0_109 = arith.constant 0 : index
    %101 = vector.load %arg3[%c0_105, %c0_106, %c2_107, %c1_108, %c0_109] : memref<1x1x18x18x128xf32, #tpu.memory_space<vmem>>, vector<1x1x16x16x128xf32>
    %102 = vector.shape_cast %101 : vector<1x1x16x16x128xf32> to vector<16x16x128xf32>
    %103 = vector.shape_cast %102 : vector<16x16x128xf32> to vector<256x128xf32>
    %c0_110 = arith.constant 0 : index
    %c0_111 = arith.constant 0 : index
    %104 = vector.load %arg7[%c0_110, %c0_111] : memref<256x128xf32, #tpu.memory_space<vmem>>, vector<256x128xf32>
    %c3_i32_112 = arith.constant 3 : i32
    %105 = arith.muli %arg2, %c3_i32_112 : i32
    %c3_i32_113 = arith.constant 3 : i32
    %106 = arith.muli %105, %c3_i32_113 : i32
    %c6_i32_114 = arith.constant 6 : i32
    %107 = arith.addi %106, %c6_i32_114 : i32
    %c1_i32_115 = arith.constant 1 : i32
    %108 = arith.addi %107, %c1_i32_115 : i32
    %109 = arith.index_cast %108 : i32 to index
    %c0_116 = arith.constant 0 : index
    %c0_117 = arith.constant 0 : index
    %110 = vector.load %arg4[%109, %c0_116, %c0_117] : memref<27x128x128xf32, #tpu.memory_space<vmem>>, vector<1x128x128xf32>
    %111 = vector.shape_cast %110 : vector<1x128x128xf32> to vector<128x128xf32>
    %cst_118 = arith.constant dense<0.000000e+00> : vector<256x128xf32>
    %112 = tpu.matmul %103, %111, %cst_118 {dimension_numbers = #tpu.dot_dimension_numbers<[1], [0], [0], [1], [0, 0, 1, 1], [], []>} : vector<256x128xf32>, vector<128x128xf32>, vector<256x128xf32> -> vector<256x128xf32>
    %113 = arith.addf %104, %112 : vector<256x128xf32>
    %c0_119 = arith.constant 0 : index
    %c0_120 = arith.constant 0 : index
    %114 = vector.load %arg7[%c0_119, %c0_120] : memref<256x128xf32, #tpu.memory_space<vmem>>, vector<256x128xf32>
    tpu.vector_store %arg7[%c0_119, %c0_120], %113 {strides = array<i32>} : memref<256x128xf32, #tpu.memory_space<vmem>>, vector<256x128xf32>,
    %c0_121 = arith.constant 0 : index
    %c0_122 = arith.constant 0 : index
    %c2_123 = arith.constant 2 : index
    %c2_124 = arith.constant 2 : index
    %c0_125 = arith.constant 0 : index
    %115 = vector.load %arg3[%c0_121, %c0_122, %c2_123, %c2_124, %c0_125] : memref<1x1x18x18x128xf32, #tpu.memory_space<vmem>>, vector<1x1x16x16x128xf32>
    %116 = vector.shape_cast %115 : vector<1x1x16x16x128xf32> to vector<16x16x128xf32>
    %117 = vector.shape_cast %116 : vector<16x16x128xf32> to vector<256x128xf32>
    %c0_126 = arith.constant 0 : index
    %c0_127 = arith.constant 0 : index
    %118 = vector.load %arg7[%c0_126, %c0_127] : memref<256x128xf32, #tpu.memory_space<vmem>>, vector<256x128xf32>
    %c3_i32_128 = arith.constant 3 : i32
    %119 = arith.muli %arg2, %c3_i32_128 : i32
    %c3_i32_129 = arith.constant 3 : i32
    %120 = arith.muli %119, %c3_i32_129 : i32
    %c6_i32_130 = arith.constant 6 : i32
    %121 = arith.addi %120, %c6_i32_130 : i32
    %c2_i32_131 = arith.constant 2 : i32
    %122 = arith.addi %121, %c2_i32_131 : i32
    %123 = arith.index_cast %122 : i32 to index
    %c0_132 = arith.constant 0 : index
    %c0_133 = arith.constant 0 : index
    %124 = vector.load %arg4[%123, %c0_132, %c0_133] : memref<27x128x128xf32, #tpu.memory_space<vmem>>, vector<1x128x128xf32>
    %125 = vector.shape_cast %124 : vector<1x128x128xf32> to vector<128x128xf32>
    %cst_134 = arith.constant dense<0.000000e+00> : vector<256x128xf32>
    %126 = tpu.matmul %117, %125, %cst_134 {dimension_numbers = #tpu.dot_dimension_numbers<[1], [0], [0], [1], [0, 0, 1, 1], [], []>} : vector<256x128xf32>, vector<128x128xf32>, vector<256x128xf32> -> vector<256x128xf32>
    %127 = arith.addf %118, %126 : vector<256x128xf32>
    %c0_135 = arith.constant 0 : index
    %c0_136 = arith.constant 0 : index
    %128 = vector.load %arg7[%c0_135, %c0_136] : memref<256x128xf32, #tpu.memory_space<vmem>>, vector<256x128xf32>
    tpu.vector_store %arg7[%c0_135, %c0_136], %127 {strides = array<i32>} : memref<256x128xf32, #tpu.memory_space<vmem>>, vector<256x128xf32>,
    %c2_i32_137 = arith.constant 2 : i32
    %129 = arith.cmpi eq, %arg2, %c2_i32_137 : i32
    %130 = arith.extui %129 : i1 to i32
    %c0_i32_138 = arith.constant 0 : i32
    %131 = arith.cmpi ne, %130, %c0_i32_138 : i32
    scf.if %131 {
      %c0_139 = arith.constant 0 : index
      %c0_140 = arith.constant 0 : index
      %132 = vector.load %arg7[%c0_139, %c0_140] : memref<256x128xf32, #tpu.memory_space<vmem>>, vector<256x128xf32>
      %c0_141 = arith.constant 0 : index
      %c0_142 = arith.constant 0 : index
      %133 = vector.load %arg5[%c0_141, %c0_142] : memref<1x128xf32, #tpu.memory_space<vmem>>, vector<1x128xf32>
      %134 = vector.broadcast %133 : vector<1x128xf32> to vector<256x128xf32>
      %135 = arith.addf %132, %134 : vector<256x128xf32>
      %136 = vector.shape_cast %135 : vector<256x128xf32> to vector<16x16x128xf32>
      %c0_143 = arith.constant 0 : index
      %c0_144 = arith.constant 0 : index
      %c0_145 = arith.constant 0 : index
      %c0_146 = arith.constant 0 : index
      %c0_147 = arith.constant 0 : index
      %137 = vector.load %arg6[%c0_143, %c0_144, %c0_145, %c0_146, %c0_147] : memref<1x1x16x16x128xf32, #tpu.memory_space<vmem>>, vector<1x1x16x16x128xf32>
      %138 = vector.shape_cast %137 : vector<1x1x16x16x128xf32> to vector<16x16x128xf32>
      %139 = vector.shape_cast %136 : vector<16x16x128xf32> to vector<1x1x16x16x128xf32>
      tpu.vector_store %arg6[%c0_143, %c0_144, %c0_145, %c0_146, %c0_147], %139 {strides = array<i32>} : memref<1x1x16x16x128xf32, #tpu.memory_space<vmem>>, vector<1x1x16x16x128xf32>,
    } else {
    }
    return
  }
  func.func @transform_0(%arg0: i32, %arg1: i32, %arg2: i32) -> (i32, i32, i32, i32, i32) {
    %c1_i32 = arith.constant 1 : i32
    %0 = arith.muli %arg2, %c1_i32 : i32
    %1 = arith.addi %arg1, %0 : i32
    %c0_i32 = arith.constant 0 : i32
    %c0_i32_0 = arith.constant 0 : i32
    %c0_i32_1 = arith.constant 0 : i32
    %c0_i32_2 = arith.constant 0 : i32
    return %arg0, %1, %c0_i32, %c0_i32_0, %c0_i32_1 : i32, i32, i32, i32, i32
  }
  func.func @transform_1(%arg0: i32, %arg1: i32, %arg2: i32) -> (i32, i32, i32) {
    %c0_i32 = arith.constant 0 : i32
    %c0_i32_0 = arith.constant 0 : i32
    %c0_i32_1 = arith.constant 0 : i32
    %c0_i32_2 = arith.constant 0 : i32
    return %c0_i32, %c0_i32_0, %c0_i32_1 : i32, i32, i32
  }
  func.func @transform_2(%arg0: i32, %arg1: i32, %arg2: i32) -> (i32, i32) {
    %c0_i32 = arith.constant 0 : i32
    %c0_i32_0 = arith.constant 0 : i32
    %c0_i32_1 = arith.constant 0 : i32
    return %c0_i32, %c0_i32_0 : i32, i32
  }
  func.func @transform_3(%arg0: i32, %arg1: i32, %arg2: i32) -> (i32, i32, i32, i32, i32) {
    %c0_i32 = arith.constant 0 : i32
    %c0_i32_0 = arith.constant 0 : i32
    %c0_i32_1 = arith.constant 0 : i32
    %c0_i32_2 = arith.constant 0 : i32
    return %arg0, %arg1, %c0_i32, %c0_i32_0, %c0_i32_1 : i32, i32, i32, i32, i32
  }
}

</mosaic_0001>

<llo_original>
// kernel: tpu_custom_call.1
$region0: #{tpu_custom_call.1}
  #allocation0 [shape = 'u32[]', space=smem, size = 0x4, offset = 0x4, fixed_abs, tag = 'smem constant byte address 0x4 - core index']
  #allocation1 [shape = 'u32[144,128]{1,0:T(1,128)}', space=vmem, size = 0x12000, scoped, tag = 'internal scratch']
  #allocation2 [shape = 'f32[256,128]{1,0:T(8,128)}', space=vmem, size = 0x20000, scoped, tag = 'scratch operand']
  %s0 = inlined_call_operand.vmem [shape: f32[2,18,18,18,128], index: 0, kind: input, shape index: {}]
  %s1 = inlined_call_operand.vmem [shape: f32[27,128,128], index: 1, kind: input, shape index: {}]
  %s2 = inlined_call_operand.vmem [shape: f32[1,128], index: 2, kind: input, shape index: {}]
  %s3 = inlined_call_operand.hbm [shape: f32[2,16,16,16,128], index: 3, kind: output, shape index: {}]
  %s4 = sld [smem:[#allocation0]]
  $region53: #{tpu_custom_call.1} parent=0
    _
  %s6 = ssub.s32 1, %s4
  %s7 = scalar_select 0, %s6, %s4
  $region1: #{tpu_custom_call.1} parent=0
    #allocation3 [shape = 'u8[262144]{0}', space=vmem, size = 0x40000, scoped, tag = 'output window, operand 0']
    #allocation4 [shape = 's32[2]{0}', space=sflag, size = 0x8, scoped, tag = 'scoped memory for tpu_custom_call.1']
    %8 = vsyncpa [#allocation4], 0
    %s9 = scalar_lea.sflag [#allocation4], 1
    %10 = vsyncpa %s9, 0
    loop: start=0, step=1, limit=98
    $region2: #{tpu_custom_call.1} parent=1 // loop_pre_header
      _
    $region3: #{tpu_custom_call.1} parent=1 // loop_header
      %s12 = sphi 0, %s16
      %p13 = scmp.ge.s32.totalorder %s12, 98
      %s19 = sphi 0, %s38
      %s20 = sphi 0, %s34
      %s21 = sphi 0, %s30
      %s22 = sphi 0, %s19
      %s23 = sphi 0, %s20
      %s24 = sphi 0, %s21
      %s25 = sphi 0, %s22
      %s26 = sphi 0, %s23
      %s27 = sphi 0, %s24
      %s45 = sphi 0, %s47
      %s48 = sphi 0, %s45
      %s49 = sphi 0, %s48
      %s65 = sphi 0, %s49
      %s69 = sphi 0, %s69
      %s71 = sphi 0, %s69
      %s72 = sphi 0, %s71
      %s86 = sphi 0, %s72
      %s90 = sphi 0, %s90
      %s92 = sphi 0, %s90
      %s93 = sphi 0, %s92
      %s107 = sphi 0, %s93
      %s115 = sphi 0, %s117
      %s118 = sphi 0, %s115
      %s119 = sphi 0, %s118
      %s135 = sphi 0, %s119
    $region4: #{tpu_custom_call.1} parent=1 // loop_header_branch
      %15 = sbr.rel (%p13) target = $region8
    $region5: #{tpu_custom_call.1} parent=1 // loop_body
      %s17 = ssub.s32 %s12, 1
      %s18 = ssub.s32 %s12, 2
      %s28 = sadd.s32 1, %s21
      %p29 = scmp.ge.s32.totalorder %s28, 3
      %s30 = scalar_select %p29, 0, %s28
      %s31 = sadd.s32 1, %s20
      %s32 = scalar_select %p29, %s31, %s20
      %p33 = scmp.ge.s32.totalorder %s32, 16
      %s34 = scalar_select %p33, 0, %s32
      %s35 = sadd.s32 1, %s19
      %s36 = scalar_select %p33, %s35, %s19
      %p37 = scmp.ge.s32.totalorder %s36, 2
      %s38 = scalar_select %p37, 0, %s36
      %s39 = sadd.s32 %s20, %s21
      %s40 = sadd.s32 %s34, %s30
      %s41 = ssub.s32 %s19, %s38
      %s42 = ssub.s32 %s39, %s40
      %s43 = sor.u32 %s41, %s42
      %p44 = scmp.eq.s32.totalorder %s43, 0
      %s46 = sadd.s32 %s45, 1
      %s47 = scalar_select %p44, %s45, %s46
      %p50 = pneg %p44
      %p51 = scmp.eq.s32.totalorder %s12, 95
      %p52 = por %p50, %p51
      %p53 = scmp.ne.s32.totalorder %s45, %s48
      %p54 = scmp.eq.s32.totalorder %s12, 0
      %p55 = por %p53, %p54
      %p56 = scmp.ne.s32.totalorder %s45, %s48
      %p57 = scmp.eq.s32.totalorder %s17, 95
      %p58 = por %p56, %p57
      %p59 = scmp.ne.s32.totalorder %s48, %s49
      %p60 = scmp.eq.s32.totalorder %s17, 0
      %p61 = por %p59, %p60
      %p62 = scmp.ne.s32.totalorder %s48, %s49
      %p63 = scmp.eq.s32.totalorder %s18, 95
      %p64 = por %p62, %p63
      %p66 = scmp.ne.s32.totalorder %s49, %s65
      %p67 = scmp.eq.s32.totalorder %s18, 0
      %p68 = por %p66, %p67
      %s70 = sadd.s32 %s69, 1
      %p73 = scmp.eq.s32.totalorder %s12, 95
      %p74 = scmp.ne.s32.totalorder %s69, %s71
      %p75 = scmp.eq.s32.totalorder %s12, 0
      %p76 = por %p74, %p75
      %p77 = scmp.ne.s32.totalorder %s69, %s71
      %p78 = scmp.eq.s32.totalorder %s17, 95
      %p79 = por %p77, %p78
      %p80 = scmp.ne.s32.totalorder %s71, %s72
      %p81 = scmp.eq.s32.totalorder %s17, 0
      %p82 = por %p80, %p81
      %p83 = scmp.ne.s32.totalorder %s71, %s72
      %p84 = scmp.eq.s32.totalorder %s18, 95
      %p85 = por %p83, %p84
      %p87 = scmp.ne.s32.totalorder %s72, %s86
      %p88 = scmp.eq.s32.totalorder %s18, 0
      %p89 = por %p87, %p88
      %s91 = sadd.s32 %s90, 1
      %p94 = scmp.eq.s32.totalorder %s12, 95
      %p95 = scmp.ne.s32.totalorder %s90, %s92
      %p96 = scmp.eq.s32.totalorder %s12, 0
      %p97 = por %p95, %p96
      %p98 = scmp.ne.s32.totalorder %s90, %s92
      %p99 = scmp.eq.s32.totalorder %s17, 95
      %p100 = por %p98, %p99
      %p101 = scmp.ne.s32.totalorder %s92, %s93
      %p102 = scmp.eq.s32.totalorder %s17, 0
      %p103 = por %p101, %p102
      %p104 = scmp.ne.s32.totalorder %s92, %s93
      %p105 = scmp.eq.s32.totalorder %s18, 95
      %p106 = por %p104, %p105
      %p108 = scmp.ne.s32.totalorder %s93, %s107
      %p109 = scmp.eq.s32.totalorder %s18, 0
      %p110 = por %p108, %p109
      %s111 = ssub.s32 %s19, %s38
      %s112 = ssub.s32 %s20, %s34
      %s113 = sor.u32 %s111, %s112
      %p114 = scmp.eq.s32.totalorder %s113, 0
      %s116 = sadd.s32 %s115, 1
      %s117 = scalar_select %p114, %s115, %s116
      %p120 = pneg %p114
      %p121 = scmp.eq.s32.totalorder %s12, 95
      %p122 = por %p120, %p121
      %p123 = scmp.ne.s32.totalorder %s115, %s118
      %p124 = scmp.eq.s32.totalorder %s12, 0
      %p125 = por %p123, %p124
      %p126 = scmp.ne.s32.totalorder %s115, %s118
      %p127 = scmp.eq.s32.totalorder %s17, 95
      %p128 = por %p126, %p127
      %p129 = scmp.ne.s32.totalorder %s118, %s119
      %p130 = scmp.eq.s32.totalorder %s17, 0
      %p131 = por %p129, %p130
      %p132 = scmp.ne.s32.totalorder %s118, %s119
      %p133 = scmp.eq.s32.totalorder %s18, 95
      %p134 = por %p132, %p133
      %p136 = scmp.ne.s32.totalorder %s119, %s135
      %p137 = scmp.eq.s32.totalorder %s18, 0
      %p138 = por %p136, %p137
      %p139 = scmp.le.s32.totalorder 1, %s12
      %p140 = scmp.lt.s32.totalorder %s12, 97
      %p141 = pnand %p139, %p140
      %p142 = pneg %p141
      // Predicated region
      $region9: #{tpu_custom_call.1} parent=5 // pred_check
        _
      $region10: #{tpu_custom_call.1} parent=5 // pred_check_branch
        %144 = sbr.rel (%p141) target = $region12
      $region11: #{tpu_custom_call.1} parent=5 // pred_region
        %s145 = ssub.s32 %s12, 1
        // Predicated region
        $region13: #{tpu_custom_call.1} parent=11 // pred_check
          %p146 = pneg %p82
        $region14: #{tpu_custom_call.1} parent=11 // pred_check_branch
          %148 = sbr.rel (%p146) target = $region16
        $region15: #{tpu_custom_call.1} parent=11 // pred_region
          _
        $region16: #{tpu_custom_call.1} parent=11 // pred_fallthru
          _
        // Predicated region
        $region17: #{tpu_custom_call.1} parent=11 // pred_check
          %p149 = pneg %p103
        $region18: #{tpu_custom_call.1} parent=11 // pred_check_branch
          %151 = sbr.rel (%p149) target = $region20
        $region19: #{tpu_custom_call.1} parent=11 // pred_region
          _
        $region20: #{tpu_custom_call.1} parent=11 // pred_fallthru
          _
      $region12: #{tpu_custom_call.1} parent=5 // pred_fallthru
        _
      %p152 = scmp.lt.s32.totalorder %s12, 96
      // Predicated region
      $region21: #{tpu_custom_call.1} parent=5 // pred_check
        %p153 = pneg %p152
      $region22: #{tpu_custom_call.1} parent=5 // pred_check_branch
        %155 = sbr.rel (%p153) target = $region24
      $region23: #{tpu_custom_call.1} parent=5 // pred_region
        // Predicated region
        $region25: #{tpu_custom_call.1} parent=23 // pred_check
          %p156 = pneg %p55
        $region26: #{tpu_custom_call.1} parent=23 // pred_check_branch
          %158 = sbr.rel (%p156) target = $region28
        $region27: #{tpu_custom_call.1} parent=23 // pred_region
          %s159 = sadd.s32 %s20, %s21
          %p160 = scmp.lt.s32.totalorder %s19, 1
          %s161 = scalar_select %p160, %s19, 1
          %p162 = scmp.lt.s32.totalorder %s159, 17
          %s163 = scalar_select %p162, %s159, 17
          %s164 = smul.addr %s163, 54
          %s165 = smul.addr %s161, 972
          %s166 = sadd.s32 %s164, %s165
          %s167 = smul.addr %s166, 8
          %s168 = scalar_lea.vmem %s0, %s167
          %s169 = sadd.s32 %s20, %s21
        $region28: #{tpu_custom_call.1} parent=23 // pred_fallthru
          _
      $region24: #{tpu_custom_call.1} parent=5 // pred_fallthru
        _
      %p170 = scmp.le.s32.totalorder 1, %s12
      %p171 = scmp.lt.s32.totalorder %s12, 97
      %p172 = pnand %p170, %p171
      %p173 = pneg %p172
      // Predicated region
      $region29: #{tpu_custom_call.1} parent=5 // pred_check
        _
      $region30: #{tpu_custom_call.1} parent=5 // pred_check_branch
        %175 = sbr.rel (%p172) target = $region32
      $region31: #{tpu_custom_call.1} parent=5 // pred_region
        %s176 = ssub.s32 %s12, 1
        %s177 = sadd.s32 %s23, %s24
        %p178 = scmp.lt.s32.totalorder %s22, 1
        %s179 = scalar_select %p178, %s22, 1
        %p180 = scmp.lt.s32.totalorder %s177, 17
        %s181 = scalar_select %p180, %s177, 17
        %s182 = smul.addr %s181, 54
        %s183 = smul.addr %s179, 972
        %s184 = sadd.s32 %s182, %s183
        %s185 = smul.addr %s184, 8
        %s186 = scalar_lea.vmem %s0, %s185
        %p187 = pneg %p61
        %p188 = pneg %p58
        %p189 = pneg %p82
        %p190 = pneg %p79
        %p191 = pneg %p103
        %p192 = pneg %p100
        %p193 = pneg %p131
        %p194 = pneg %p128
        %s195 = sand.u32 %s118, 1
        %s196 = scalar_lea.sflag [#allocation4], %s195
        %s197 = sand.u32 %s118, 1
        %s198 = smul.addr %s197, 256
        %s199 = scalar_lea.vmem [#allocation3], %s198
        %s200 = sadd.s32 %s23, %s24
        %p201 = scmp.lt.s32.totalorder %s22, 1
        %s202 = scalar_select %p201, %s22, 1
        %p203 = scmp.lt.s32.totalorder %s200, 17
        %s204 = scalar_select %p203, %s200, 17
        %s205 = smul.addr %s204, 54
        %s206 = smul.addr %s202, 972
        %s207 = sadd.s32 %s205, %s206
        %s208 = smul.addr %s207, 8
        %s209 = scalar_lea.vmem %s0, %s208
        %s210 = sadd.s32 %s23, %s24
        %p211 = scmp.eq.s32.totalorder %s24, 0
        // Predicated region
        $region33: #{tpu_custom_call.1} parent=31 // pred_check
          %p212 = pneg %p211
        $region34: #{tpu_custom_call.1} parent=31 // pred_check_branch
          %214 = sbr.rel (%p212) target = $region36
        $region35: #{tpu_custom_call.1} parent=31 // pred_region
          %215 = vst [vmem:[#allocation2] sm:$0xff] 0.0
          %216 = vst [vmem:[#allocation2 + $0x8] sm:$0xff] 0.0
          %217 = vst [vmem:[#allocation2 + $0x10] sm:$0xff] 0.0
          %218 = vst [vmem:[#allocation2 + $0x18] sm:$0xff] 0.0
          %219 = vst [vmem:[#allocation2 + $0x20] sm:$0xff] 0.0
          %220 = vst [vmem:[#allocation2 + $0x28] sm:$0xff] 0.0
          %221 = vst [vmem:[#allocation2 + $0x30] sm:$0xff] 0.0
          %222 = vst [vmem:[#allocation2 + $0x38] sm:$0xff] 0.0
          %223 = vst [vmem:[#allocation2 + $0x40] sm:$0xff] 0.0
          %224 = vst [vmem:[#allocation2 + $0x48] sm:$0xff] 0.0
          %225 = vst [vmem:[#allocation2 + $0x50] sm:$0xff] 0.0
          %226 = vst [vmem:[#allocation2 + $0x58] sm:$0xff] 0.0
          %227 = vst [vmem:[#allocation2 + $0x60] sm:$0xff] 0.0
          %228 = vst [vmem:[#allocation2 + $0x68] sm:$0xff] 0.0
          %229 = vst [vmem:[#allocation2 + $0x70] sm:$0xff] 0.0
          %230 = vst [vmem:[#allocation2 + $0x78] sm:$0xff] 0.0
          %231 = vst [vmem:[#allocation2 + $0x80] sm:$0xff] 0.0
          %232 = vst [vmem:[#allocation2 + $0x88] sm:$0xff] 0.0
          %233 = vst [vmem:[#allocation2 + $0x90] sm:$0xff] 0.0
          %234 = vst [vmem:[#allocation2 + $0x98] sm:$0xff] 0.0
          %235 = vst [vmem:[#allocation2 + $0xa0] sm:$0xff] 0.0
          %236 = vst [vmem:[#allocation2 + $0xa8] sm:$0xff] 0.0
          %237 = vst [vmem:[#allocation2 + $0xb0] sm:$0xff] 0.0
          %238 = vst [vmem:[#allocation2 + $0xb8] sm:$0xff] 0.0
          %239 = vst [vmem:[#allocation2 + $0xc0] sm:$0xff] 0.0
          %240 = vst [vmem:[#allocation2 + $0xc8] sm:$0xff] 0.0
          %241 = vst [vmem:[#allocation2 + $0xd0] sm:$0xff] 0.0
          %242 = vst [vmem:[#allocation2 + $0xd8] sm:$0xff] 0.0
          %243 = vst [vmem:[#allocation2 + $0xe0] sm:$0xff] 0.0
          %244 = vst [vmem:[#allocation2 + $0xe8] sm:$0xff] 0.0
          %245 = vst [vmem:[#allocation2 + $0xf0] sm:$0xff] 0.0
          %246 = vst [vmem:[#allocation2 + $0xf8] sm:$0xff] 0.0
        $region36: #{tpu_custom_call.1} parent=31 // pred_fallthru
          _
        %v247 = vld [vmem:[%s209] sm:$0xff]
        %v248 = vld [vmem:[%s209 + $0x8] sm:$0xff]
        %v249 = vld [vmem:[%s209 + $0x18] sm:$0xff]
        %v250 = vld [vmem:[%s209 + $0x20] sm:$0xff]
        %v251 = vld [vmem:[%s209 + $0x30] sm:$0xff]
        %v252 = vld [vmem:[%s209 + $0x38] sm:$0xff]
        %v253 = vld [vmem:[%s209 + $0x48] sm:$0xff]
        %v254 = vld [vmem:[%s209 + $0x50] sm:$0xff]
        %v255 = vld [vmem:[%s209 + $0x60] sm:$0xff]
        %v256 = vld [vmem:[%s209 + $0x68] sm:$0xff]
        %v257 = vld [vmem:[%s209 + $0x78] sm:$0xff]
        %v258 = vld [vmem:[%s209 + $0x80] sm:$0xff]
        %v259 = vld [vmem:[%s209 + $0x90] sm:$0xff]
        %v260 = vld [vmem:[%s209 + $0x98] sm:$0xff]
        %v261 = vld [vmem:[%s209 + $0xa8] sm:$0xff]
        %v262 = vld [vmem:[%s209 + $0xb0] sm:$0xff]
        %v263 = vld [vmem:[%s209 + $0xc0] sm:$0xff]
        %v264 = vld [vmem:[%s209 + $0xc8] sm:$0xff]
        %v265 = vld [vmem:[%s209 + $0xd8] sm:$0xff]
        %v266 = vld [vmem:[%s209 + $0xe0] sm:$0xff]
        %v267 = vld [vmem:[%s209 + $0xf0] sm:$0xff]
        %v268 = vld [vmem:[%s209 + $0xf8] sm:$0xff]
        %v269 = vld [vmem:[%s209 + $0x108] sm:$0xff]
        %v270 = vld [vmem:[%s209 + $0x110] sm:$0xff]
        %v271 = vld [vmem:[%s209 + $0x120] sm:$0xff]
        %v272 = vld [vmem:[%s209 + $0x128] sm:$0xff]
        %v273 = vld [vmem:[%s209 + $0x138] sm:$0xff]
        %v274 = vld [vmem:[%s209 + $0x140] sm:$0xff]
        %v275 = vld [vmem:[%s209 + $0x150] sm:$0xff]
        %v276 = vld [vmem:[%s209 + $0x158] sm:$0xff]
        %v277 = vld [vmem:[%s209 + $0x168] sm:$0xff]
        %v278 = vld [vmem:[%s209 + $0x170] sm:$0xff]
        %v279 = vld [vmem:[#allocation2] sm:$0xff]
        %v280 = vld [vmem:[#allocation2 + $0x8] sm:$0xff]
        %v281 = vld [vmem:[#allocation2 + $0x10] sm:$0xff]
        %v282 = vld [vmem:[#allocation2 + $0x18] sm:$0xff]
        %v283 = vld [vmem:[#allocation2 + $0x20] sm:$0xff]
        %v284 = vld [vmem:[#allocation2 + $0x28] sm:$0xff]
        %v285 = vld [vmem:[#allocation2 + $0x30] sm:$0xff]
        %v286 = vld [vmem:[#allocation2 + $0x38] sm:$0xff]
        %v287 = vld [vmem:[#allocation2 + $0x40] sm:$0xff]
        %v288 = vld [vmem:[#allocation2 + $0x48] sm:$0xff]
        %v289 = vld [vmem:[#allocation2 + $0x50] sm:$0xff]
        %v290 = vld [vmem:[#allocation2 + $0x58] sm:$0xff]
        %v291 = vld [vmem:[#allocation2 + $0x60] sm:$0xff]
        %v292 = vld [vmem:[#allocation2 + $0x68] sm:$0xff]
        %v293 = vld [vmem:[#allocation2 + $0x70] sm:$0xff]
        %v294 = vld [vmem:[#allocation2 + $0x78] sm:$0xff]
        %v295 = vld [vmem:[#allocation2 + $0x80] sm:$0xff]
        %v296 = vld [vmem:[#allocation2 + $0x88] sm:$0xff]
        %v297 = vld [vmem:[#allocation2 + $0x90] sm:$0xff]
        %v298 = vld [vmem:[#allocation2 + $0x98] sm:$0xff]
        %v299 = vld [vmem:[#allocation2 + $0xa0] sm:$0xff]
        %v300 = vld [vmem:[#allocation2 + $0xa8] sm:$0xff]
        %v301 = vld [vmem:[#allocation2 + $0xb0] sm:$0xff]
        %v302 = vld [vmem:[#allocation2 + $0xb8] sm:$0xff]
        %v303 = vld [vmem:[#allocation2 + $0xc0] sm:$0xff]
        %v304 = vld [vmem:[#allocation2 + $0xc8] sm:$0xff]
        %v305 = vld [vmem:[#allocation2 + $0xd0] sm:$0xff]
        %v306 = vld [vmem:[#allocation2 + $0xd8] sm:$0xff]
        %v307 = vld [vmem:[#allocation2 + $0xe0] sm:$0xff]
        %v308 = vld [vmem:[#allocation2 + $0xe8] sm:$0xff]
        %v309 = vld [vmem:[#allocation2 + $0xf0] sm:$0xff]
        %v310 = vld [vmem:[#allocation2 + $0xf8] sm:$0xff]
        %s311 = smul.u32 %s24, 9
        %s312 = smul.u32 %s311, 128
        %s313 = scalar_lea.vmem %s1, %s312
        %v314 = vld [vmem:[%s313] sm:$0xff]
        %v315 = vld [vmem:[%s313 + $0x8] sm:$0xff]
        %v316 = vld [vmem:[%s313 + $0x10] sm:$0xff]
        %v317 = vld [vmem:[%s313 + $0x18] sm:$0xff]
        %v318 = vld [vmem:[%s313 + $0x20] sm:$0xff]
        %v319 = vld [vmem:[%s313 + $0x28] sm:$0xff]
        %v320 = vld [vmem:[%s313 + $0x30] sm:$0xff]
        %v321 = vld [vmem:[%s313 + $0x38] sm:$0xff]
        %v322 = vld [vmem:[%s313 + $0x40] sm:$0xff]
        %v323 = vld [vmem:[%s313 + $0x48] sm:$0xff]
        %v324 = vld [vmem:[%s313 + $0x50] sm:$0xff]
        %v325 = vld [vmem:[%s313 + $0x58] sm:$0xff]
        %v326 = vld [vmem:[%s313 + $0x60] sm:$0xff]
        %v327 = vld [vmem:[%s313 + $0x68] sm:$0xff]
        %v328 = vld [vmem:[%s313 + $0x70] sm:$0xff]
        %v329 = vld [vmem:[%s313 + $0x78] sm:$0xff]
        %330 = vmatprep.subr.mxu0 0.0
        %331 = vmatpush1.msra.mxu0 %v329
        %332 = vmatprep.subr.mxu0 0.0
        %333 = vmatpush1.msra.mxu0 %v328
        %334 = vmatprep.subr.mxu0 0.0
        %335 = vmatpush1.msra.mxu0 %v327
        %336 = vmatprep.subr.mxu0 0.0
        %337 = vmatpush1.msra.mxu0 %v326
        %338 = vmatprep.subr.mxu0 0.0
        %339 = vmatpush1.msra.mxu0 %v325
        %340 = vmatprep.subr.mxu0 0.0
        %341 = vmatpush1.msra.mxu0 %v324
        %342 = vmatprep.subr.mxu0 0.0
        %343 = vmatpush1.msra.mxu0 %v323
        %344 = vmatprep.subr.mxu0 0.0
        %345 = vmatpush1.msra.mxu0 %v322
        %346 = vmatprep.subr.mxu0 0.0
        %347 = vmatpush1.msra.mxu0 %v321
        %348 = vmatprep.subr.mxu0 0.0
        %349 = vmatpush1.msra.mxu0 %v320
        %350 = vmatprep.subr.mxu0 0.0
        %351 = vmatpush1.msra.mxu0 %v319
        %352 = vmatprep.subr.mxu0 0.0
        %353 = vmatpush1.msra.mxu0 %v318
        %354 = vmatprep.subr.mxu0 0.0
        %355 = vmatpush1.msra.mxu0 %v317
        %356 = vmatprep.subr.mxu0 0.0
        %357 = vmatpush1.msra.mxu0 %v316
        %358 = vmatprep.subr.mxu0 0.0
        %359 = vmatpush1.msra.mxu0 %v315
        %360 = vmatprep.subr.mxu0 0.0
        %361 = vmatpush1.msra.mxu0 %v314
        %362 = vmatprep.subr.mxu0 0.0
        %363 = vmatpush2.msra.mxu0 0.0
        %364 = vmatprep.subr.mxu0 0.0
        %365 = vmatpush2.msra.mxu0 0.0
        %366 = vmatprep.subr.mxu0 0.0
        %367 = vmatpush2.msra.mxu0 0.0
        %368 = vmatprep.subr.mxu0 0.0
        %369 = vmatpush2.msra.mxu0 0.0
        %370 = vmatprep.subr.mxu0 0.0
        %371 = vmatpush2.msra.mxu0 0.0
        %372 = vmatprep.subr.mxu0 0.0
        %373 = vmatpush2.msra.mxu0 0.0
        %374 = vmatprep.subr.mxu0 0.0
        %375 = vmatpush2.msra.mxu0 0.0
        %376 = vmatprep.subr.mxu0 0.0
        %377 = vmatpush2.msra.mxu0 0.0
        %378 = vmatprep.subr.mxu0 0.0
        %379 = vmatpush2.msra.mxu0 0.0
        %380 = vmatprep.subr.mxu0 0.0
        %381 = vmatpush2.msra.mxu0 0.0
        %382 = vmatprep.subr.mxu0 0.0
        %383 = vmatpush2.msra.mxu0 0.0
        %384 = vmatprep.subr.mxu0 0.0
        %385 = vmatpush2.msra.mxu0 0.0
        %386 = vmatprep.subr.mxu0 0.0
        %387 = vmatpush2.msra.mxu0 0.0
        %388 = vmatprep.subr.mxu0 0.0
        %389 = vmatpush2.msra.mxu0 0.0
        %390 = vmatprep.subr.mxu0 0.0
        %391 = vmatpush2.msra.mxu0 0.0
        %392 = vmatprep.subr.mxu0 0.0
        %393 = vmatpush2.msra.mxu0 0.0
        %394 = vmatprep.mubr.f32.mxu0 0.0
        %395 = vmatmul.mubr.f32.gmra.mxu0 %v247
        %v396 = vpop.f32.mrf.mxu0
        %v397 = vadd.f32 0.0, %v396
        %v398 = vpop.f32.mrf.mxu0
        %399 = vmatprep.mubr.f32.mxu0 0.0
        %400 = vmatmul.mubr.f32.gmra.mxu0 %v248
        %v401 = vpop.f32.mrf.mxu0
        %v402 = vadd.f32 0.0, %v401
        %v403 = vpop.f32.mrf.mxu0
        %404 = vmatprep.mubr.f32.mxu0 0.0
        %405 = vmatmul.mubr.f32.gmra.mxu0 %v249
        %v406 = vpop.f32.mrf.mxu0
        %v407 = vadd.f32 0.0, %v406
        %v408 = vpop.f32.mrf.mxu0
        %409 = vmatprep.mubr.f32.mxu0 0.0
        %410 = vmatmul.mubr.f32.gmra.mxu0 %v250
        %v411 = vpop.f32.mrf.mxu0
        %v412 = vadd.f32 0.0, %v411
        %v413 = vpop.f32.mrf.mxu0
        %414 = vmatprep.mubr.f32.mxu0 0.0
        %415 = vmatmul.mubr.f32.gmra.mxu0 %v251
        %v416 = vpop.f32.mrf.mxu0
        %v417 = vadd.f32 0.0, %v416
        %v418 = vpop.f32.mrf.mxu0
        %419 = vmatprep.mubr.f32.mxu0 0.0
        %420 = vmatmul.mubr.f32.gmra.mxu0 %v252
        %v421 = vpop.f32.mrf.mxu0
        %v422 = vadd.f32 0.0, %v421
        %v423 = vpop.f32.mrf.mxu0
        %424 = vmatprep.mubr.f32.mxu0 0.0
        %425 = vmatmul.mubr.f32.gmra.mxu0 %v253
        %v426 = vpop.f32.mrf.mxu0
        %v427 = vadd.f32 0.0, %v426
        %v428 = vpop.f32.mrf.mxu0
        %429 = vmatprep.mubr.f32.mxu0 0.0
        %430 = vmatmul.mubr.f32.gmra.mxu0 %v254
        %v431 = vpop.f32.mrf.mxu0
        %v432 = vadd.f32 0.0, %v431
        %v433 = vpop.f32.mrf.mxu0
        %434 = vmatprep.mubr.f32.mxu0 0.0
        %435 = vmatmul.mubr.f32.gmra.mxu0 %v255
        %v436 = vpop.f32.mrf.mxu0
        %v437 = vadd.f32 0.0, %v436
        %v438 = vpop.f32.mrf.mxu0
        %439 = vmatprep.mubr.f32.mxu0 0.0
        %440 = vmatmul.mubr.f32.gmra.mxu0 %v256
        %v441 = vpop.f32.mrf.mxu0
        %v442 = vadd.f32 0.0, %v441
        %v443 = vpop.f32.mrf.mxu0
        %444 = vmatprep.mubr.f32.mxu0 0.0
        %445 = vmatmul.mubr.f32.gmra.mxu0 %v257
        %v446 = vpop.f32.mrf.mxu0
        %v447 = vadd.f32 0.0, %v446
        %v448 = vpop.f32.mrf.mxu0
        %449 = vmatprep.mubr.f32.mxu0 0.0
        %450 = vmatmul.mubr.f32.gmra.mxu0 %v258
        %v451 = vpop.f32.mrf.mxu0
        %v452 = vadd.f32 0.0, %v451
        %v453 = vpop.f32.mrf.mxu0
        %454 = vmatprep.mubr.f32.mxu0 0.0
        %455 = vmatmul.mubr.f32.gmra.mxu0 %v259
        %v456 = vpop.f32.mrf.mxu0
        %v457 = vadd.f32 0.0, %v456
        %v458 = vpop.f32.mrf.mxu0
        %459 = vmatprep.mubr.f32.mxu0 0.0
        %460 = vmatmul.mubr.f32.gmra.mxu0 %v260
        %v461 = vpop.f32.mrf.mxu0
        %v462 = vadd.f32 0.0, %v461
        %v463 = vpop.f32.mrf.mxu0
        %464 = vmatprep.mubr.f32.mxu0 0.0
        %465 = vmatmul.mubr.f32.gmra.mxu0 %v261
        %v466 = vpop.f32.mrf.mxu0
        %v467 = vadd.f32 0.0, %v466
        %v468 = vpop.f32.mrf.mxu0
        %469 = vmatprep.mubr.f32.mxu0 0.0
        %470 = vmatmul.mubr.f32.gmra.mxu0 %v262
        %v471 = vpop.f32.mrf.mxu0
        %v472 = vadd.f32 0.0, %v471
        %v473 = vpop.f32.mrf.mxu0
        %474 = vmatprep.mubr.f32.mxu0 0.0
        %475 = vmatmul.mubr.f32.gmra.mxu0 %v263
        %v476 = vpop.f32.mrf.mxu0
        %v477 = vadd.f32 0.0, %v476
        %v478 = vpop.f32.mrf.mxu0
        %479 = vmatprep.mubr.f32.mxu0 0.0
        %480 = vmatmul.mubr.f32.gmra.mxu0 %v264
        %v481 = vpop.f32.mrf.mxu0
        %v482 = vadd.f32 0.0, %v481
        %v483 = vpop.f32.mrf.mxu0
        %484 = vmatprep.mubr.f32.mxu0 0.0
        %485 = vmatmul.mubr.f32.gmra.mxu0 %v265
        %v486 = vpop.f32.mrf.mxu0
        %v487 = vadd.f32 0.0, %v486
        %v488 = vpop.f32.mrf.mxu0
        %489 = vmatprep.mubr.f32.mxu0 0.0
        %490 = vmatmul.mubr.f32.gmra.mxu0 %v266
        %v491 = vpop.f32.mrf.mxu0
        %v492 = vadd.f32 0.0, %v491
        %v493 = vpop.f32.mrf.mxu0
        %494 = vmatprep.mubr.f32.mxu0 0.0
        %495 = vmatmul.mubr.f32.gmra.mxu0 %v267
        %v496 = vpop.f32.mrf.mxu0
        %v497 = vadd.f32 0.0, %v496
        %v498 = vpop.f32.mrf.mxu0
        %499 = vmatprep.mubr.f32.mxu0 0.0
        %500 = vmatmul.mubr.f32.gmra.mxu0 %v268
        %v501 = vpop.f32.mrf.mxu0
        %v502 = vadd.f32 0.0, %v501
        %v503 = vpop.f32.mrf.mxu0
        %504 = vmatprep.mubr.f32.mxu0 0.0
        %505 = vmatmul.mubr.f32.gmra.mxu0 %v269
        %v506 = vpop.f32.mrf.mxu0
        %v507 = vadd.f32 0.0, %v506
        %v508 = vpop.f32.mrf.mxu0
        %509 = vmatprep.mubr.f32.mxu0 0.0
        %510 = vmatmul.mubr.f32.gmra.mxu0 %v270
        %v511 = vpop.f32.mrf.mxu0
        %v512 = vadd.f32 0.0, %v511
        %v513 = vpop.f32.mrf.mxu0
        %514 = vmatprep.mubr.f32.mxu0 0.0
        %515 = vmatmul.mubr.f32.gmra.mxu0 %v271
        %v516 = vpop.f32.mrf.mxu0
        %v517 = vadd.f32 0.0, %v516
        %v518 = vpop.f32.mrf.mxu0
        %519 = vmatprep.mubr.f32.mxu0 0.0
        %520 = vmatmul.mubr.f32.gmra.mxu0 %v272
        %v521 = vpop.f32.mrf.mxu0
        %v522 = vadd.f32 0.0, %v521
        %v523 = vpop.f32.mrf.mxu0
        %524 = vmatprep.mubr.f32.mxu0 0.0
        %525 = vmatmul.mubr.f32.gmra.mxu0 %v273
        %v526 = vpop.f32.mrf.mxu0
        %v527 = vadd.f32 0.0, %v526
        %v528 = vpop.f32.mrf.mxu0
        %529 = vmatprep.mubr.f32.mxu0 0.0
        %530 = vmatmul.mubr.f32.gmra.mxu0 %v274
        %v531 = vpop.f32.mrf.mxu0
        %v532 = vadd.f32 0.0, %v531
        %v533 = vpop.f32.mrf.mxu0
        %534 = vmatprep.mubr.f32.mxu0 0.0
        %535 = vmatmul.mubr.f32.gmra.mxu0 %v275
        %v536 = vpop.f32.mrf.mxu0
        %v537 = vadd.f32 0.0, %v536
        %v538 = vpop.f32.mrf.mxu0
        %539 = vmatprep.mubr.f32.mxu0 0.0
        %540 = vmatmul.mubr.f32.gmra.mxu0 %v276
        %v541 = vpop.f32.mrf.mxu0
        %v542 = vadd.f32 0.0, %v541
        %v543 = vpop.f32.mrf.mxu0
        %544 = vmatprep.mubr.f32.mxu0 0.0
        %545 = vmatmul.mubr.f32.gmra.mxu0 %v277
        %v546 = vpop.f32.mrf.mxu0
        %v547 = vadd.f32 0.0, %v546
        %v548 = vpop.f32.mrf.mxu0
        %549 = vmatprep.mubr.f32.mxu0 0.0
        %550 = vmatmul.mubr.f32.gmra.mxu0 %v278
        %v551 = vpop.f32.mrf.mxu0
        %v552 = vadd.f32 0.0, %v551
        %v553 = vpop.f32.mrf.mxu0
        %554 = vdwg.mxu0
        %v555 = vadd.f32 %v279, %v397
        %v556 = vadd.f32 %v280, %v402
        %v557 = vadd.f32 %v281, %v407
        %v558 = vadd.f32 %v282, %v412
        %v559 = vadd.f32 %v283, %v417
        %v560 = vadd.f32 %v284, %v422
        %v561 = vadd.f32 %v285, %v427
        %v562 = vadd.f32 %v286, %v432
        %v563 = vadd.f32 %v287, %v437
        %v564 = vadd.f32 %v288, %v442
        %v565 = vadd.f32 %v289, %v447
        %v566 = vadd.f32 %v290, %v452
        %v567 = vadd.f32 %v291, %v457
        %v568 = vadd.f32 %v292, %v462
        %v569 = vadd.f32 %v293, %v467
        %v570 = vadd.f32 %v294, %v472
        %v571 = vadd.f32 %v295, %v477
        %v572 = vadd.f32 %v296, %v482
        %v573 = vadd.f32 %v297, %v487
        %v574 = vadd.f32 %v298, %v492
        %v575 = vadd.f32 %v299, %v497
        %v576 = vadd.f32 %v300, %v502
        %v577 = vadd.f32 %v301, %v507
        %v578 = vadd.f32 %v302, %v512
        %v579 = vadd.f32 %v303, %v517
        %v580 = vadd.f32 %v304, %v522
        %v581 = vadd.f32 %v305, %v527
        %v582 = vadd.f32 %v306, %v532
        %v583 = vadd.f32 %v307, %v537
        %v584 = vadd.f32 %v308, %v542
        %v585 = vadd.f32 %v309, %v547
        %v586 = vadd.f32 %v310, %v552
        %587 = vst [vmem:[#allocation2] sm:$0xff] %v555
        %588 = vst [vmem:[#allocation2 + $0x8] sm:$0xff] %v556
        %589 = vst [vmem:[#allocation2 + $0x10] sm:$0xff] %v557
        %590 = vst [vmem:[#allocation2 + $0x18] sm:$0xff] %v558
        %591 = vst [vmem:[#allocation2 + $0x20] sm:$0xff] %v559
        %592 = vst [vmem:[#allocation2 + $0x28] sm:$0xff] %v560
        %593 = vst [vmem:[#allocation2 + $0x30] sm:$0xff] %v561
        %594 = vst [vmem:[#allocation2 + $0x38] sm:$0xff] %v562
        %595 = vst [vmem:[#allocation2 + $0x40] sm:$0xff] %v563
        %596 = vst [vmem:[#allocation2 + $0x48] sm:$0xff] %v564
        %597 = vst [vmem:[#allocation2 + $0x50] sm:$0xff] %v565
        %598 = vst [vmem:[#allocation2 + $0x58] sm:$0xff] %v566
        %599 = vst [vmem:[#allocation2 + $0x60] sm:$0xff] %v567
        %600 = vst [vmem:[#allocation2 + $0x68] sm:$0xff] %v568
        %601 = vst [vmem:[#allocation2 + $0x70] sm:$0xff] %v569
        %602 = vst [vmem:[#allocation2 + $0x78] sm:$0xff] %v570
        %603 = vst [vmem:[#allocation2 + $0x80] sm:$0xff] %v571
        %604 = vst [vmem:[#allocation2 + $0x88] sm:$0xff] %v572
        %605 = vst [vmem:[#allocation2 + $0x90] sm:$0xff] %v573
        %606 = vst [vmem:[#allocation2 + $0x98] sm:$0xff] %v574
        %607 = vst [vmem:[#allocation2 + $0xa0] sm:$0xff] %v575
        %608 = vst [vmem:[#allocation2 + $0xa8] sm:$0xff] %v576
        %609 = vst [vmem:[#allocation2 + $0xb0] sm:$0xff] %v577
        %610 = vst [vmem:[#allocation2 + $0xb8] sm:$0xff] %v578
        %611 = vst [vmem:[#allocation2 + $0xc0] sm:$0xff] %v579
        %612 = vst [vmem:[#allocation2 + $0xc8] sm:$0xff] %v580
        %613 = vst [vmem:[#allocation2 + $0xd0] sm:$0xff] %v581
        %614 = vst [vmem:[#allocation2 + $0xd8] sm:$0xff] %v582
        %615 = vst [vmem:[#allocation2 + $0xe0] sm:$0xff] %v583
        %616 = vst [vmem:[#allocation2 + $0xe8] sm:$0xff] %v584
        %617 = vst [vmem:[#allocation2 + $0xf0] sm:$0xff] %v585
        %618 = vst [vmem:[#allocation2 + $0xf8] sm:$0xff] %v586
        %v619 = vld [vmem:[%s209 + $0x1] sm:$0xff]
        %v620 = vld [vmem:[%s209 + $0x9] sm:$0xff]
        %v621 = vld [vmem:[%s209 + $0x19] sm:$0xff]
        %v622 = vld [vmem:[%s209 + $0x21] sm:$0xff]
        %v623 = vld [vmem:[%s209 + $0x31] sm:$0xff]
        %v624 = vld [vmem:[%s209 + $0x39] sm:$0xff]
        %v625 = vld [vmem:[%s209 + $0x49] sm:$0xff]
        %v626 = vld [vmem:[%s209 + $0x51] sm:$0xff]
        %v627 = vld [vmem:[%s209 + $0x61] sm:$0xff]
        %v628 = vld [vmem:[%s209 + $0x69] sm:$0xff]
        %v629 = vld [vmem:[%s209 + $0x79] sm:$0xff]
        %v630 = vld [vmem:[%s209 + $0x81] sm:$0xff]
        %v631 = vld [vmem:[%s209 + $0x91] sm:$0xff]
        %v632 = vld [vmem:[%s209 + $0x99] sm:$0xff]
        %v633 = vld [vmem:[%s209 + $0xa9] sm:$0xff]
        %v634 = vld [vmem:[%s209 + $0xb1] sm:$0xff]
        %v635 = vld [vmem:[%s209 + $0xc1] sm:$0xff]
        %v636 = vld [vmem:[%s209 + $0xc9] sm:$0xff]
        %v637 = vld [vmem:[%s209 + $0xd9] sm:$0xff]
        %v638 = vld [vmem:[%s209 + $0xe1] sm:$0xff]
        %v639 = vld [vmem:[%s209 + $0xf1] sm:$0xff]
        %v640 = vld [vmem:[%s209 + $0xf9] sm:$0xff]
        %v641 = vld [vmem:[%s209 + $0x109] sm:$0xff]
        %v642 = vld [vmem:[%s209 + $0x111] sm:$0xff]
        %v643 = vld [vmem:[%s209 + $0x121] sm:$0xff]
        %v644 = vld [vmem:[%s209 + $0x129] sm:$0xff]
        %v645 = vld [vmem:[%s209 + $0x139] sm:$0xff]
        %v646 = vld [vmem:[%s209 + $0x141] sm:$0xff]
        %v647 = vld [vmem:[%s209 + $0x151] sm:$0xff]
        %v648 = vld [vmem:[%s209 + $0x159] sm:$0xff]
        %v649 = vld [vmem:[%s209 + $0x169] sm:$0xff]
        %v650 = vld [vmem:[%s209 + $0x171] sm:$0xff]
        %v651 = vld [vmem:[#allocation2] sm:$0xff]
        %v652 = vld [vmem:[#allocation2 + $0x8] sm:$0xff]
        %v653 = vld [vmem:[#allocation2 + $0x10] sm:$0xff]
        %v654 = vld [vmem:[#allocation2 + $0x18] sm:$0xff]
        %v655 = vld [vmem:[#allocation2 + $0x20] sm:$0xff]
        %v656 = vld [vmem:[#allocation2 + $0x28] sm:$0xff]
        %v657 = vld [vmem:[#allocation2 + $0x30] sm:$0xff]
        %v658 = vld [vmem:[#allocation2 + $0x38] sm:$0xff]
        %v659 = vld [vmem:[#allocation2 + $0x40] sm:$0xff]
        %v660 = vld [vmem:[#allocation2 + $0x48] sm:$0xff]
        %v661 = vld [vmem:[#allocation2 + $0x50] sm:$0xff]
        %v662 = vld [vmem:[#allocation2 + $0x58] sm:$0xff]
        %v663 = vld [vmem:[#allocation2 + $0x60] sm:$0xff]
        %v664 = vld [vmem:[#allocation2 + $0x68] sm:$0xff]
        %v665 = vld [vmem:[#allocation2 + $0x70] sm:$0xff]
        %v666 = vld [vmem:[#allocation2 + $0x78] sm:$0xff]
        %v667 = vld [vmem:[#allocation2 + $0x80] sm:$0xff]
        %v668 = vld [vmem:[#allocation2 + $0x88] sm:$0xff]
        %v669 = vld [vmem:[#allocation2 + $0x90] sm:$0xff]
        %v670 = vld [vmem:[#allocation2 + $0x98] sm:$0xff]
        %v671 = vld [vmem:[#allocation2 + $0xa0] sm:$0xff]
        %v672 = vld [vmem:[#allocation2 + $0xa8] sm:$0xff]
        %v673 = vld [vmem:[#allocation2 + $0xb0] sm:$0xff]
        %v674 = vld [vmem:[#allocation2 + $0xb8] sm:$0xff]
        %v675 = vld [vmem:[#allocation2 + $0xc0] sm:$0xff]
        %v676 = vld [vmem:[#allocation2 + $0xc8] sm:$0xff]
        %v677 = vld [vmem:[#allocation2 + $0xd0] sm:$0xff]
        %v678 = vld [vmem:[#allocation2 + $0xd8] sm:$0xff]
        %v679 = vld [vmem:[#allocation2 + $0xe0] sm:$0xff]
        %v680 = vld [vmem:[#allocation2 + $0xe8] sm:$0xff]
        %v681 = vld [vmem:[#allocation2 + $0xf0] sm:$0xff]
        %v682 = vld [vmem:[#allocation2 + $0xf8] sm:$0xff]
        %s683 = sadd.s32 %s311, 1
        %s684 = smul.u32 %s683, 128
        %s685 = scalar_lea.vmem %s1, %s684
        %v686 = vld [vmem:[%s685] sm:$0xff]
        %v687 = vld [vmem:[%s685 + $0x8] sm:$0xff]
        %v688 = vld [vmem:[%s685 + $0x10] sm:$0xff]
        %v689 = vld [vmem:[%s685 + $0x18] sm:$0xff]
        %v690 = vld [vmem:[%s685 + $0x20] sm:$0xff]
        %v691 = vld [vmem:[%s685 + $0x28] sm:$0xff]
        %v692 = vld [vmem:[%s685 + $0x30] sm:$0xff]
        %v693 = vld [vmem:[%s685 + $0x38] sm:$0xff]
        %v694 = vld [vmem:[%s685 + $0x40] sm:$0xff]
        %v695 = vld [vmem:[%s685 + $0x48] sm:$0xff]
        %v696 = vld [vmem:[%s685 + $0x50] sm:$0xff]
        %v697 = vld [vmem:[%s685 + $0x58] sm:$0xff]
        %v698 = vld [vmem:[%s685 + $0x60] sm:$0xff]
        %v699 = vld [vmem:[%s685 + $0x68] sm:$0xff]
        %v700 = vld [vmem:[%s685 + $0x70] sm:$0xff]
        %v701 = vld [vmem:[%s685 + $0x78] sm:$0xff]
        %702 = vmatprep.subr.mxu0 0.0
        %703 = vmatpush1.msra.mxu0 %v701
        %704 = vmatprep.subr.mxu0 0.0
        %705 = vmatpush1.msra.mxu0 %v700
        %706 = vmatprep.subr.mxu0 0.0
        %707 = vmatpush1.msra.mxu0 %v699
        %708 = vmatprep.subr.mxu0 0.0
        %709 = vmatpush1.msra.mxu0 %v698
        %710 = vmatprep.subr.mxu0 0.0
        %711 = vmatpush1.msra.mxu0 %v697
        %712 = vmatprep.subr.mxu0 0.0
        %713 = vmatpush1.msra.mxu0 %v696
        %714 = vmatprep.subr.mxu0 0.0
        %715 = vmatpush1.msra.mxu0 %v695
        %716 = vmatprep.subr.mxu0 0.0
        %717 = vmatpush1.msra.mxu0 %v694
        %718 = vmatprep.subr.mxu0 0.0
        %719 = vmatpush1.msra.mxu0 %v693
        %720 = vmatprep.subr.mxu0 0.0
        %721 = vmatpush1.msra.mxu0 %v692
        %722 = vmatprep.subr.mxu0 0.0
        %723 = vmatpush1.msra.mxu0 %v691
        %724 = vmatprep.subr.mxu0 0.0
        %725 = vmatpush1.msra.mxu0 %v690
        %726 = vmatprep.subr.mxu0 0.0
        %727 = vmatpush1.msra.mxu0 %v689
        %728 = vmatprep.subr.mxu0 0.0
        %729 = vmatpush1.msra.mxu0 %v688
        %730 = vmatprep.subr.mxu0 0.0
        %731 = vmatpush1.msra.mxu0 %v687
        %732 = vmatprep.subr.mxu0 0.0
        %733 = vmatpush1.msra.mxu0 %v686
        %734 = vmatprep.subr.mxu0 0.0
        %735 = vmatpush2.msra.mxu0 0.0
        %736 = vmatprep.subr.mxu0 0.0
        %737 = vmatpush2.msra.mxu0 0.0
        %738 = vmatprep.subr.mxu0 0.0
        %739 = vmatpush2.msra.mxu0 0.0
        %740 = vmatprep.subr.mxu0 0.0
        %741 = vmatpush2.msra.mxu0 0.0
        %742 = vmatprep.subr.mxu0 0.0
        %743 = vmatpush2.msra.mxu0 0.0
        %744 = vmatprep.subr.mxu0 0.0
        %745 = vmatpush2.msra.mxu0 0.0
        %746 = vmatprep.subr.mxu0 0.0
        %747 = vmatpush2.msra.mxu0 0.0
        %748 = vmatprep.subr.mxu0 0.0
        %749 = vmatpush2.msra.mxu0 0.0
        %750 = vmatprep.subr.mxu0 0.0
        %751 = vmatpush2.msra.mxu0 0.0
        %752 = vmatprep.subr.mxu0 0.0
        %753 = vmatpush2.msra.mxu0 0.0
        %754 = vmatprep.subr.mxu0 0.0
        %755 = vmatpush2.msra.mxu0 0.0
        %756 = vmatprep.subr.mxu0 0.0
        %757 = vmatpush2.msra.mxu0 0.0
        %758 = vmatprep.subr.mxu0 0.0
        %759 = vmatpush2.msra.mxu0 0.0
        %760 = vmatprep.subr.mxu0 0.0
        %761 = vmatpush2.msra.mxu0 0.0
        %762 = vmatprep.subr.mxu0 0.0
        %763 = vmatpush2.msra.mxu0 0.0
        %764 = vmatprep.subr.mxu0 0.0
        %765 = vmatpush2.msra.mxu0 0.0
        %766 = vmatprep.mubr.f32.mxu0 0.0
        %767 = vmatmul.mubr.f32.gmra.mxu0 %v619
        %v768 = vpop.f32.mrf.mxu0
        %v769 = vadd.f32 0.0, %v768
        %v770 = vpop.f32.mrf.mxu0
        %771 = vmatprep.mubr.f32.mxu0 0.0
        %772 = vmatmul.mubr.f32.gmra.mxu0 %v620
        %v773 = vpop.f32.mrf.mxu0
        %v774 = vadd.f32 0.0, %v773
        %v775 = vpop.f32.mrf.mxu0
        %776 = vmatprep.mubr.f32.mxu0 0.0
        %777 = vmatmul.mubr.f32.gmra.mxu0 %v621
        %v778 = vpop.f32.mrf.mxu0
        %v779 = vadd.f32 0.0, %v778
        %v780 = vpop.f32.mrf.mxu0
        %781 = vmatprep.mubr.f32.mxu0 0.0
        %782 = vmatmul.mubr.f32.gmra.mxu0 %v622
        %v783 = vpop.f32.mrf.mxu0
        %v784 = vadd.f32 0.0, %v783
        %v785 = vpop.f32.mrf.mxu0
        %786 = vmatprep.mubr.f32.mxu0 0.0
        %787 = vmatmul.mubr.f32.gmra.mxu0 %v623
        %v788 = vpop.f32.mrf.mxu0
        %v789 = vadd.f32 0.0, %v788
        %v790 = vpop.f32.mrf.mxu0
        %791 = vmatprep.mubr.f32.mxu0 0.0
        %792 = vmatmul.mubr.f32.gmra.mxu0 %v624
        %v793 = vpop.f32.mrf.mxu0
        %v794 = vadd.f32 0.0, %v793
        %v795 = vpop.f32.mrf.mxu0
        %796 = vmatprep.mubr.f32.mxu0 0.0
        %797 = vmatmul.mubr.f32.gmra.mxu0 %v625
        %v798 = vpop.f32.mrf.mxu0
        %v799 = vadd.f32 0.0, %v798
        %v800 = vpop.f32.mrf.mxu0
        %801 = vmatprep.mubr.f32.mxu0 0.0
        %802 = vmatmul.mubr.f32.gmra.mxu0 %v626
        %v803 = vpop.f32.mrf.mxu0
        %v804 = vadd.f32 0.0, %v803
        %v805 = vpop.f32.mrf.mxu0
        %806 = vmatprep.mubr.f32.mxu0 0.0
        %807 = vmatmul.mubr.f32.gmra.mxu0 %v627
        %v808 = vpop.f32.mrf.mxu0
        %v809 = vadd.f32 0.0, %v808
        %v810 = vpop.f32.mrf.mxu0
        %811 = vmatprep.mubr.f32.mxu0 0.0
        %812 = vmatmul.mubr.f32.gmra.mxu0 %v628
        %v813 = vpop.f32.mrf.mxu0
        %v814 = vadd.f32 0.0, %v813
        %v815 = vpop.f32.mrf.mxu0
        %816 = vmatprep.mubr.f32.mxu0 0.0
        %817 = vmatmul.mubr.f32.gmra.mxu0 %v629
        %v818 = vpop.f32.mrf.mxu0
        %v819 = vadd.f32 0.0, %v818
        %v820 = vpop.f32.mrf.mxu0
        %821 = vmatprep.mubr.f32.mxu0 0.0
        %822 = vmatmul.mubr.f32.gmra.mxu0 %v630
        %v823 = vpop.f32.mrf.mxu0
        %v824 = vadd.f32 0.0, %v823
        %v825 = vpop.f32.mrf.mxu0
        %826 = vmatprep.mubr.f32.mxu0 0.0
        %827 = vmatmul.mubr.f32.gmra.mxu0 %v631
        %v828 = vpop.f32.mrf.mxu0
        %v829 = vadd.f32 0.0, %v828
        %v830 = vpop.f32.mrf.mxu0
        %831 = vmatprep.mubr.f32.mxu0 0.0
        %832 = vmatmul.mubr.f32.gmra.mxu0 %v632
        %v833 = vpop.f32.mrf.mxu0
        %v834 = vadd.f32 0.0, %v833
        %v835 = vpop.f32.mrf.mxu0
        %836 = vmatprep.mubr.f32.mxu0 0.0
        %837 = vmatmul.mubr.f32.gmra.mxu0 %v633
        %v838 = vpop.f32.mrf.mxu0
        %v839 = vadd.f32 0.0, %v838
        %v840 = vpop.f32.mrf.mxu0
        %841 = vmatprep.mubr.f32.mxu0 0.0
        %842 = vmatmul.mubr.f32.gmra.mxu0 %v634
        %v843 = vpop.f32.mrf.mxu0
        %v844 = vadd.f32 0.0, %v843
        %v845 = vpop.f32.mrf.mxu0
        %846 = vmatprep.mubr.f32.mxu0 0.0
        %847 = vmatmul.mubr.f32.gmra.mxu0 %v635
        %v848 = vpop.f32.mrf.mxu0
        %v849 = vadd.f32 0.0, %v848
        %v850 = vpop.f32.mrf.mxu0
        %851 = vmatprep.mubr.f32.mxu0 0.0
        %852 = vmatmul.mubr.f32.gmra.mxu0 %v636
        %v853 = vpop.f32.mrf.mxu0
        %v854 = vadd.f32 0.0, %v853
        %v855 = vpop.f32.mrf.mxu0
        %856 = vmatprep.mubr.f32.mxu0 0.0
        %857 = vmatmul.mubr.f32.gmra.mxu0 %v637
        %v858 = vpop.f32.mrf.mxu0
        %v859 = vadd.f32 0.0, %v858
        %v860 = vpop.f32.mrf.mxu0
        %861 = vmatprep.mubr.f32.mxu0 0.0
        %862 = vmatmul.mubr.f32.gmra.mxu0 %v638
        %v863 = vpop.f32.mrf.mxu0
        %v864 = vadd.f32 0.0, %v863
        %v865 = vpop.f32.mrf.mxu0
        %866 = vmatprep.mubr.f32.mxu0 0.0
        %867 = vmatmul.mubr.f32.gmra.mxu0 %v639
        %v868 = vpop.f32.mrf.mxu0
        %v869 = vadd.f32 0.0, %v868
        %v870 = vpop.f32.mrf.mxu0
        %871 = vmatprep.mubr.f32.mxu0 0.0
        %872 = vmatmul.mubr.f32.gmra.mxu0 %v640
        %v873 = vpop.f32.mrf.mxu0
        %v874 = vadd.f32 0.0, %v873
        %v875 = vpop.f32.mrf.mxu0
        %876 = vmatprep.mubr.f32.mxu0 0.0
        %877 = vmatmul.mubr.f32.gmra.mxu0 %v641
        %v878 = vpop.f32.mrf.mxu0
        %v879 = vadd.f32 0.0, %v878
        %v880 = vpop.f32.mrf.mxu0
        %881 = vmatprep.mubr.f32.mxu0 0.0
        %882 = vmatmul.mubr.f32.gmra.mxu0 %v642
        %v883 = vpop.f32.mrf.mxu0
        %v884 = vadd.f32 0.0, %v883
        %v885 = vpop.f32.mrf.mxu0
        %886 = vmatprep.mubr.f32.mxu0 0.0
        %887 = vmatmul.mubr.f32.gmra.mxu0 %v643
        %v888 = vpop.f32.mrf.mxu0
        %v889 = vadd.f32 0.0, %v888
        %v890 = vpop.f32.mrf.mxu0
        %891 = vmatprep.mubr.f32.mxu0 0.0
        %892 = vmatmul.mubr.f32.gmra.mxu0 %v644
        %v893 = vpop.f32.mrf.mxu0
        %v894 = vadd.f32 0.0, %v893
        %v895 = vpop.f32.mrf.mxu0
        %896 = vmatprep.mubr.f32.mxu0 0.0
        %897 = vmatmul.mubr.f32.gmra.mxu0 %v645
        %v898 = vpop.f32.mrf.mxu0
        %v899 = vadd.f32 0.0, %v898
        %v900 = vpop.f32.mrf.mxu0
        %901 = vmatprep.mubr.f32.mxu0 0.0
        %902 = vmatmul.mubr.f32.gmra.mxu0 %v646
        %v903 = vpop.f32.mrf.mxu0
        %v904 = vadd.f32 0.0, %v903
        %v905 = vpop.f32.mrf.mxu0
        %906 = vmatprep.mubr.f32.mxu0 0.0
        %907 = vmatmul.mubr.f32.gmra.mxu0 %v647
        %v908 = vpop.f32.mrf.mxu0
        %v909 = vadd.f32 0.0, %v908
        %v910 = vpop.f32.mrf.mxu0
        %911 = vmatprep.mubr.f32.mxu0 0.0
        %912 = vmatmul.mubr.f32.gmra.mxu0 %v648
        %v913 = vpop.f32.mrf.mxu0
        %v914 = vadd.f32 0.0, %v913
        %v915 = vpop.f32.mrf.mxu0
        %916 = vmatprep.mubr.f32.mxu0 0.0
        %917 = vmatmul.mubr.f32.gmra.mxu0 %v649
        %v918 = vpop.f32.mrf.mxu0
        %v919 = vadd.f32 0.0, %v918
        %v920 = vpop.f32.mrf.mxu0
        %921 = vmatprep.mubr.f32.mxu0 0.0
        %922 = vmatmul.mubr.f32.gmra.mxu0 %v650
        %v923 = vpop.f32.mrf.mxu0
        %v924 = vadd.f32 0.0, %v923
        %v925 = vpop.f32.mrf.mxu0
        %926 = vdwg.mxu0
        %v927 = vadd.f32 %v651, %v769
        %v928 = vadd.f32 %v652, %v774
        %v929 = vadd.f32 %v653, %v779
        %v930 = vadd.f32 %v654, %v784
        %v931 = vadd.f32 %v655, %v789
        %v932 = vadd.f32 %v656, %v794
        %v933 = vadd.f32 %v657, %v799
        %v934 = vadd.f32 %v658, %v804
        %v935 = vadd.f32 %v659, %v809
        %v936 = vadd.f32 %v660, %v814
        %v937 = vadd.f32 %v661, %v819
        %v938 = vadd.f32 %v662, %v824
        %v939 = vadd.f32 %v663, %v829
        %v940 = vadd.f32 %v664, %v834
        %v941 = vadd.f32 %v665, %v839
        %v942 = vadd.f32 %v666, %v844
        %v943 = vadd.f32 %v667, %v849
        %v944 = vadd.f32 %v668, %v854
        %v945 = vadd.f32 %v669, %v859
        %v946 = vadd.f32 %v670, %v864
        %v947 = vadd.f32 %v671, %v869
        %v948 = vadd.f32 %v672, %v874
        %v949 = vadd.f32 %v673, %v879
        %v950 = vadd.f32 %v674, %v884
        %v951 = vadd.f32 %v675, %v889
        %v952 = vadd.f32 %v676, %v894
        %v953 = vadd.f32 %v677, %v899
        %v954 = vadd.f32 %v678, %v904
        %v955 = vadd.f32 %v679, %v909
        %v956 = vadd.f32 %v680, %v914
        %v957 = vadd.f32 %v681, %v919
        %v958 = vadd.f32 %v682, %v924
        %959 = vst [vmem:[#allocation2] sm:$0xff] %v927
        %960 = vst [vmem:[#allocation2 + $0x8] sm:$0xff] %v928
        %961 = vst [vmem:[#allocation2 + $0x10] sm:$0xff] %v929
        %962 = vst [vmem:[#allocation2 + $0x18] sm:$0xff] %v930
        %963 = vst [vmem:[#allocation2 + $0x20] sm:$0xff] %v931
        %964 = vst [vmem:[#allocation2 + $0x28] sm:$0xff] %v932
        %965 = vst [vmem:[#allocation2 + $0x30] sm:$0xff] %v933
        %966 = vst [vmem:[#allocation2 + $0x38] sm:$0xff] %v934
        %967 = vst [vmem:[#allocation2 + $0x40] sm:$0xff] %v935
        %968 = vst [vmem:[#allocation2 + $0x48] sm:$0xff] %v936
        %969 = vst [vmem:[#allocation2 + $0x50] sm:$0xff] %v937
        %970 = vst [vmem:[#allocation2 + $0x58] sm:$0xff] %v938
        %971 = vst [vmem:[#allocation2 + $0x60] sm:$0xff] %v939
        %972 = vst [vmem:[#allocation2 + $0x68] sm:$0xff] %v940
        %973 = vst [vmem:[#allocation2 + $0x70] sm:$0xff] %v941
        %974 = vst [vmem:[#allocation2 + $0x78] sm:$0xff] %v942
        %975 = vst [vmem:[#allocation2 + $0x80] sm:$0xff] %v943
        %976 = vst [vmem:[#allocation2 + $0x88] sm:$0xff] %v944
        %977 = vst [vmem:[#allocation2 + $0x90] sm:$0xff] %v945
        %978 = vst [vmem:[#allocation2 + $0x98] sm:$0xff] %v946
        %979 = vst [vmem:[#allocation2 + $0xa0] sm:$0xff] %v947
        %980 = vst [vmem:[#allocation2 + $0xa8] sm:$0xff] %v948
        %981 = vst [vmem:[#allocation2 + $0xb0] sm:$0xff] %v949
        %982 = vst [vmem:[#allocation2 + $0xb8] sm:$0xff] %v950
        %983 = vst [vmem:[#allocation2 + $0xc0] sm:$0xff] %v951
        %984 = vst [vmem:[#allocation2 + $0xc8] sm:$0xff] %v952
        %985 = vst [vmem:[#allocation2 + $0xd0] sm:$0xff] %v953
        %986 = vst [vmem:[#allocation2 + $0xd8] sm:$0xff] %v954
        %987 = vst [vmem:[#allocation2 + $0xe0] sm:$0xff] %v955
        %988 = vst [vmem:[#allocation2 + $0xe8] sm:$0xff] %v956
        %989 = vst [vmem:[#allocation2 + $0xf0] sm:$0xff] %v957
        %990 = vst [vmem:[#allocation2 + $0xf8] sm:$0xff] %v958
        %v991 = vld [vmem:[%s209 + $0x2] sm:$0xff]
        %v992 = vld [vmem:[%s209 + $0xa] sm:$0xff]
        %v993 = vld [vmem:[%s209 + $0x1a] sm:$0xff]
        %v994 = vld [vmem:[%s209 + $0x22] sm:$0xff]
        %v995 = vld [vmem:[%s209 + $0x32] sm:$0xff]
        %v996 = vld [vmem:[%s209 + $0x3a] sm:$0xff]
        %v997 = vld [vmem:[%s209 + $0x4a] sm:$0xff]
        %v998 = vld [vmem:[%s209 + $0x52] sm:$0xff]
        %v999 = vld [vmem:[%s209 + $0x62] sm:$0xff]
        %v1000 = vld [vmem:[%s209 + $0x6a] sm:$0xff]
        %v1001 = vld [vmem:[%s209 + $0x7a] sm:$0xff]
        %v1002 = vld [vmem:[%s209 + $0x82] sm:$0xff]
        %v1003 = vld [vmem:[%s209 + $0x92] sm:$0xff]
        %v1004 = vld [vmem:[%s209 + $0x9a] sm:$0xff]
        %v1005 = vld [vmem:[%s209 + $0xaa] sm:$0xff]
        %v1006 = vld [vmem:[%s209 + $0xb2] sm:$0xff]
        %v1007 = vld [vmem:[%s209 + $0xc2] sm:$0xff]
        %v1008 = vld [vmem:[%s209 + $0xca] sm:$0xff]
        %v1009 = vld [vmem:[%s209 + $0xda] sm:$0xff]
        %v1010 = vld [vmem:[%s209 + $0xe2] sm:$0xff]
        %v1011 = vld [vmem:[%s209 + $0xf2] sm:$0xff]
        %v1012 = vld [vmem:[%s209 + $0xfa] sm:$0xff]
        %v1013 = vld [vmem:[%s209 + $0x10a] sm:$0xff]
        %v1014 = vld [vmem:[%s209 + $0x112] sm:$0xff]
        %v1015 = vld [vmem:[%s209 + $0x122] sm:$0xff]
        %v1016 = vld [vmem:[%s209 + $0x12a] sm:$0xff]
        %v1017 = vld [vmem:[%s209 + $0x13a] sm:$0xff]
        %v1018 = vld [vmem:[%s209 + $0x142] sm:$0xff]
        %v1019 = vld [vmem:[%s209 + $0x152] sm:$0xff]
        %v1020 = vld [vmem:[%s209 + $0x15a] sm:$0xff]
        %v1021 = vld [vmem:[%s209 + $0x16a] sm:$0xff]
        %v1022 = vld [vmem:[%s209 + $0x172] sm:$0xff]
        %v1023 = vld [vmem:[#allocation2] sm:$0xff]
        %v1024 = vld [vmem:[#allocation2 + $0x8] sm:$0xff]
        %v1025 = vld [vmem:[#allocation2 + $0x10] sm:$0xff]
        %v1026 = vld [vmem:[#allocation2 + $0x18] sm:$0xff]
        %v1027 = vld [vmem:[#allocation2 + $0x20] sm:$0xff]
        %v1028 = vld [vmem:[#allocation2 + $0x28] sm:$0xff]
        %v1029 = vld [vmem:[#allocation2 + $0x30] sm:$0xff]
        %v1030 = vld [vmem:[#allocation2 + $0x38] sm:$0xff]
        %v1031 = vld [vmem:[#allocation2 + $0x40] sm:$0xff]
        %v1032 = vld [vmem:[#allocation2 + $0x48] sm:$0xff]
        %v1033 = vld [vmem:[#allocation2 + $0x50] sm:$0xff]
        %v1034 = vld [vmem:[#allocation2 + $0x58] sm:$0xff]
        %v1035 = vld [vmem:[#allocation2 + $0x60] sm:$0xff]
        %v1036 = vld [vmem:[#allocation2 + $0x68] sm:$0xff]
        %v1037 = vld [vmem:[#allocation2 + $0x70] sm:$0xff]
        %v1038 = vld [vmem:[#allocation2 + $0x78] sm:$0xff]
        %v1039 = vld [vmem:[#allocation2 + $0x80] sm:$0xff]
        %v1040 = vld [vmem:[#allocation2 + $0x88] sm:$0xff]
        %v1041 = vld [vmem:[#allocation2 + $0x90] sm:$0xff]
        %v1042 = vld [vmem:[#allocation2 + $0x98] sm:$0xff]
        %v1043 = vld [vmem:[#allocation2 + $0xa0] sm:$0xff]
        %v1044 = vld [vmem:[#allocation2 + $0xa8] sm:$0xff]
        %v1045 = vld [vmem:[#allocation2 + $0xb0] sm:$0xff]
        %v1046 = vld [vmem:[#allocation2 + $0xb8] sm:$0xff]
        %v1047 = vld [vmem:[#allocation2 + $0xc0] sm:$0xff]
        %v1048 = vld [vmem:[#allocation2 + $0xc8] sm:$0xff]
        %v1049 = vld [vmem:[#allocation2 + $0xd0] sm:$0xff]
        %v1050 = vld [vmem:[#allocation2 + $0xd8] sm:$0xff]
        %v1051 = vld [vmem:[#allocation2 + $0xe0] sm:$0xff]
        %v1052 = vld [vmem:[#allocation2 + $0xe8] sm:$0xff]
        %v1053 = vld [vmem:[#allocation2 + $0xf0] sm:$0xff]
        %v1054 = vld [vmem:[#allocation2 + $0xf8] sm:$0xff]
        %s1055 = sadd.s32 %s311, 2
        %s1056 = smul.u32 %s1055, 128
        %s1057 = scalar_lea.vmem %s1, %s1056
        %v1058 = vld [vmem:[%s1057] sm:$0xff]
        %v1059 = vld [vmem:[%s1057 + $0x8] sm:$0xff]
        %v1060 = vld [vmem:[%s1057 + $0x10] sm:$0xff]
        %v1061 = vld [vmem:[%s1057 + $0x18] sm:$0xff]
        %v1062 = vld [vmem:[%s1057 + $0x20] sm:$0xff]
        %v1063 = vld [vmem:[%s1057 + $0x28] sm:$0xff]
        %v1064 = vld [vmem:[%s1057 + $0x30] sm:$0xff]
        %v1065 = vld [vmem:[%s1057 + $0x38] sm:$0xff]
        %v1066 = vld [vmem:[%s1057 + $0x40] sm:$0xff]
        %v1067 = vld [vmem:[%s1057 + $0x48] sm:$0xff]
        %v1068 = vld [vmem:[%s1057 + $0x50] sm:$0xff]
        %v1069 = vld [vmem:[%s1057 + $0x58] sm:$0xff]
        %v1070 = vld [vmem:[%s1057 + $0x60] sm:$0xff]
        %v1071 = vld [vmem:[%s1057 + $0x68] sm:$0xff]
        %v1072 = vld [vmem:[%s1057 + $0x70] sm:$0xff]
        %v1073 = vld [vmem:[%s1057 + $0x78] sm:$0xff]
        %1074 = vmatprep.subr.mxu0 0.0
        %1075 = vmatpush1.msra.mxu0 %v1073
        %1076 = vmatprep.subr.mxu0 0.0
        %1077 = vmatpush1.msra.mxu0 %v1072
        %1078 = vmatprep.subr.mxu0 0.0
        %1079 = vmatpush1.msra.mxu0 %v1071
        %1080 = vmatprep.subr.mxu0 0.0
        %1081 = vmatpush1.msra.mxu0 %v1070
        %1082 = vmatprep.subr.mxu0 0.0
        %1083 = vmatpush1.msra.mxu0 %v1069
        %1084 = vmatprep.subr.mxu0 0.0
        %1085 = vmatpush1.msra.mxu0 %v1068
        %1086 = vmatprep.subr.mxu0 0.0
        %1087 = vmatpush1.msra.mxu0 %v1067
        %1088 = vmatprep.subr.mxu0 0.0
        %1089 = vmatpush1.msra.mxu0 %v1066
        %1090 = vmatprep.subr.mxu0 0.0
        %1091 = vmatpush1.msra.mxu0 %v1065
        %1092 = vmatprep.subr.mxu0 0.0
        %1093 = vmatpush1.msra.mxu0 %v1064
        %1094 = vmatprep.subr.mxu0 0.0
        %1095 = vmatpush1.msra.mxu0 %v1063
        %1096 = vmatprep.subr.mxu0 0.0
        %1097 = vmatpush1.msra.mxu0 %v1062
        %1098 = vmatprep.subr.mxu0 0.0
        %1099 = vmatpush1.msra.mxu0 %v1061
        %1100 = vmatprep.subr.mxu0 0.0
        %1101 = vmatpush1.msra.mxu0 %v1060
        %1102 = vmatprep.subr.mxu0 0.0
        %1103 = vmatpush1.msra.mxu0 %v1059
        %1104 = vmatprep.subr.mxu0 0.0
        %1105 = vmatpush1.msra.mxu0 %v1058
        %1106 = vmatprep.subr.mxu0 0.0
        %1107 = vmatpush2.msra.mxu0 0.0
        %1108 = vmatprep.subr.mxu0 0.0
        %1109 = vmatpush2.msra.mxu0 0.0
        %1110 = vmatprep.subr.mxu0 0.0
        %1111 = vmatpush2.msra.mxu0 0.0
        %1112 = vmatprep.subr.mxu0 0.0
        %1113 = vmatpush2.msra.mxu0 0.0
        %1114 = vmatprep.subr.mxu0 0.0
        %1115 = vmatpush2.msra.mxu0 0.0
        %1116 = vmatprep.subr.mxu0 0.0
        %1117 = vmatpush2.msra.mxu0 0.0
        %1118 = vmatprep.subr.mxu0 0.0
        %1119 = vmatpush2.msra.mxu0 0.0
        %1120 = vmatprep.subr.mxu0 0.0
        %1121 = vmatpush2.msra.mxu0 0.0
        %1122 = vmatprep.subr.mxu0 0.0
        %1123 = vmatpush2.msra.mxu0 0.0
        %1124 = vmatprep.subr.mxu0 0.0
        %1125 = vmatpush2.msra.mxu0 0.0
        %1126 = vmatprep.subr.mxu0 0.0
        %1127 = vmatpush2.msra.mxu0 0.0
        %1128 = vmatprep.subr.mxu0 0.0
        %1129 = vmatpush2.msra.mxu0 0.0
        %1130 = vmatprep.subr.mxu0 0.0
        %1131 = vmatpush2.msra.mxu0 0.0
        %1132 = vmatprep.subr.mxu0 0.0
        %1133 = vmatpush2.msra.mxu0 0.0
        %1134 = vmatprep.subr.mxu0 0.0
        %1135 = vmatpush2.msra.mxu0 0.0
        %1136 = vmatprep.subr.mxu0 0.0
        %1137 = vmatpush2.msra.mxu0 0.0
        %1138 = vmatprep.mubr.f32.mxu0 0.0
        %1139 = vmatmul.mubr.f32.gmra.mxu0 %v991
        %v1140 = vpop.f32.mrf.mxu0
        %v1141 = vadd.f32 0.0, %v1140
        %v1142 = vpop.f32.mrf.mxu0
        %1143 = vmatprep.mubr.f32.mxu0 0.0
        %1144 = vmatmul.mubr.f32.gmra.mxu0 %v992
        %v1145 = vpop.f32.mrf.mxu0
        %v1146 = vadd.f32 0.0, %v1145
        %v1147 = vpop.f32.mrf.mxu0
        %1148 = vmatprep.mubr.f32.mxu0 0.0
        %1149 = vmatmul.mubr.f32.gmra.mxu0 %v993
        %v1150 = vpop.f32.mrf.mxu0
        %v1151 = vadd.f32 0.0, %v1150
        %v1152 = vpop.f32.mrf.mxu0
        %1153 = vmatprep.mubr.f32.mxu0 0.0
        %1154 = vmatmul.mubr.f32.gmra.mxu0 %v994
        %v1155 = vpop.f32.mrf.mxu0
        %v1156 = vadd.f32 0.0, %v1155
        %v1157 = vpop.f32.mrf.mxu0
        %1158 = vmatprep.mubr.f32.mxu0 0.0
        %1159 = vmatmul.mubr.f32.gmra.mxu0 %v995
        %v1160 = vpop.f32.mrf.mxu0
        %v1161 = vadd.f32 0.0, %v1160
        %v1162 = vpop.f32.mrf.mxu0
        %1163 = vmatprep.mubr.f32.mxu0 0.0
        %1164 = vmatmul.mubr.f32.gmra.mxu0 %v996
        %v1165 = vpop.f32.mrf.mxu0
        %v1166 = vadd.f32 0.0, %v1165
        %v1167 = vpop.f32.mrf.mxu0
        %1168 = vmatprep.mubr.f32.mxu0 0.0
        %1169 = vmatmul.mubr.f32.gmra.mxu0 %v997
        %v1170 = vpop.f32.mrf.mxu0
        %v1171 = vadd.f32 0.0, %v1170
        %v1172 = vpop.f32.mrf.mxu0
        %1173 = vmatprep.mubr.f32.mxu0 0.0
        %1174 = vmatmul.mubr.f32.gmra.mxu0 %v998
        %v1175 = vpop.f32.mrf.mxu0
        %v1176 = vadd.f32 0.0, %v1175
        %v1177 = vpop.f32.mrf.mxu0
        %1178 = vmatprep.mubr.f32.mxu0 0.0
        %1179 = vmatmul.mubr.f32.gmra.mxu0 %v999
        %v1180 = vpop.f32.mrf.mxu0
        %v1181 = vadd.f32 0.0, %v1180
        %v1182 = vpop.f32.mrf.mxu0
        %1183 = vmatprep.mubr.f32.mxu0 0.0
        %1184 = vmatmul.mubr.f32.gmra.mxu0 %v1000
        %v1185 = vpop.f32.mrf.mxu0
        %v1186 = vadd.f32 0.0, %v1185
        %v1187 = vpop.f32.mrf.mxu0
        %1188 = vmatprep.mubr.f32.mxu0 0.0
        %1189 = vmatmul.mubr.f32.gmra.mxu0 %v1001
        %v1190 = vpop.f32.mrf.mxu0
        %v1191 = vadd.f32 0.0, %v1190
        %v1192 = vpop.f32.mrf.mxu0
        %1193 = vmatprep.mubr.f32.mxu0 0.0
        %1194 = vmatmul.mubr.f32.gmra.mxu0 %v1002
        %v1195 = vpop.f32.mrf.mxu0
        %v1196 = vadd.f32 0.0, %v1195
        %v1197 = vpop.f32.mrf.mxu0
        %1198 = vmatprep.mubr.f32.mxu0 0.0
        %1199 = vmatmul.mubr.f32.gmra.mxu0 %v1003
        %v1200 = vpop.f32.mrf.mxu0
        %v1201 = vadd.f32 0.0, %v1200
        %v1202 = vpop.f32.mrf.mxu0
        %1203 = vmatprep.mubr.f32.mxu0 0.0
        %1204 = vmatmul.mubr.f32.gmra.mxu0 %v1004
        %v1205 = vpop.f32.mrf.mxu0
        %v1206 = vadd.f32 0.0, %v1205
        %v1207 = vpop.f32.mrf.mxu0
        %1208 = vmatprep.mubr.f32.mxu0 0.0
        %1209 = vmatmul.mubr.f32.gmra.mxu0 %v1005
        %v1210 = vpop.f32.mrf.mxu0
        %v1211 = vadd.f32 0.0, %v1210
        %v1212 = vpop.f32.mrf.mxu0
        %1213 = vmatprep.mubr.f32.mxu0 0.0
        %1214 = vmatmul.mubr.f32.gmra.mxu0 %v1006
        %v1215 = vpop.f32.mrf.mxu0
        %v1216 = vadd.f32 0.0, %v1215
        %v1217 = vpop.f32.mrf.mxu0
        %1218 = vmatprep.mubr.f32.mxu0 0.0
        %1219 = vmatmul.mubr.f32.gmra.mxu0 %v1007
        %v1220 = vpop.f32.mrf.mxu0
        %v1221 = vadd.f32 0.0, %v1220
        %v1222 = vpop.f32.mrf.mxu0
        %1223 = vmatprep.mubr.f32.mxu0 0.0
        %1224 = vmatmul.mubr.f32.gmra.mxu0 %v1008
        %v1225 = vpop.f32.mrf.mxu0
        %v1226 = vadd.f32 0.0, %v1225
        %v1227 = vpop.f32.mrf.mxu0
        %1228 = vmatprep.mubr.f32.mxu0 0.0
        %1229 = vmatmul.mubr.f32.gmra.mxu0 %v1009
        %v1230 = vpop.f32.mrf.mxu0
        %v1231 = vadd.f32 0.0, %v1230
        %v1232 = vpop.f32.mrf.mxu0
        %1233 = vmatprep.mubr.f32.mxu0 0.0
        %1234 = vmatmul.mubr.f32.gmra.mxu0 %v1010
        %v1235 = vpop.f32.mrf.mxu0
        %v1236 = vadd.f32 0.0, %v1235
        %v1237 = vpop.f32.mrf.mxu0
        %1238 = vmatprep.mubr.f32.mxu0 0.0
        %1239 = vmatmul.mubr.f32.gmra.mxu0 %v1011
        %v1240 = vpop.f32.mrf.mxu0
        %v1241 = vadd.f32 0.0, %v1240
        %v1242 = vpop.f32.mrf.mxu0
        %1243 = vmatprep.mubr.f32.mxu0 0.0
        %1244 = vmatmul.mubr.f32.gmra.mxu0 %v1012
        %v1245 = vpop.f32.mrf.mxu0
        %v1246 = vadd.f32 0.0, %v1245
        %v1247 = vpop.f32.mrf.mxu0
        %1248 = vmatprep.mubr.f32.mxu0 0.0
        %1249 = vmatmul.mubr.f32.gmra.mxu0 %v1013
        %v1250 = vpop.f32.mrf.mxu0
        %v1251 = vadd.f32 0.0, %v1250
        %v1252 = vpop.f32.mrf.mxu0
        %1253 = vmatprep.mubr.f32.mxu0 0.0
        %1254 = vmatmul.mubr.f32.gmra.mxu0 %v1014
        %v1255 = vpop.f32.mrf.mxu0
        %v1256 = vadd.f32 0.0, %v1255
        %v1257 = vpop.f32.mrf.mxu0
        %1258 = vmatprep.mubr.f32.mxu0 0.0
        %1259 = vmatmul.mubr.f32.gmra.mxu0 %v1015
        %v1260 = vpop.f32.mrf.mxu0
        %v1261 = vadd.f32 0.0, %v1260
        %v1262 = vpop.f32.mrf.mxu0
        %1263 = vmatprep.mubr.f32.mxu0 0.0
        %1264 = vmatmul.mubr.f32.gmra.mxu0 %v1016
        %v1265 = vpop.f32.mrf.mxu0
        %v1266 = vadd.f32 0.0, %v1265
        %v1267 = vpop.f32.mrf.mxu0
        %1268 = vmatprep.mubr.f32.mxu0 0.0
        %1269 = vmatmul.mubr.f32.gmra.mxu0 %v1017
        %v1270 = vpop.f32.mrf.mxu0
        %v1271 = vadd.f32 0.0, %v1270
        %v1272 = vpop.f32.mrf.mxu0
        %1273 = vmatprep.mubr.f32.mxu0 0.0
        %1274 = vmatmul.mubr.f32.gmra.mxu0 %v1018
        %v1275 = vpop.f32.mrf.mxu0
        %v1276 = vadd.f32 0.0, %v1275
        %v1277 = vpop.f32.mrf.mxu0
        %1278 = vmatprep.mubr.f32.mxu0 0.0
        %1279 = vmatmul.mubr.f32.gmra.mxu0 %v1019
        %v1280 = vpop.f32.mrf.mxu0
        %v1281 = vadd.f32 0.0, %v1280
        %v1282 = vpop.f32.mrf.mxu0
        %1283 = vmatprep.mubr.f32.mxu0 0.0
        %1284 = vmatmul.mubr.f32.gmra.mxu0 %v1020
        %v1285 = vpop.f32.mrf.mxu0
        %v1286 = vadd.f32 0.0, %v1285
        %v1287 = vpop.f32.mrf.mxu0
        %1288 = vmatprep.mubr.f32.mxu0 0.0
        %1289 = vmatmul.mubr.f32.gmra.mxu0 %v1021
        %v1290 = vpop.f32.mrf.mxu0
        %v1291 = vadd.f32 0.0, %v1290
        %v1292 = vpop.f32.mrf.mxu0
        %1293 = vmatprep.mubr.f32.mxu0 0.0
        %1294 = vmatmul.mubr.f32.gmra.mxu0 %v1022
        %v1295 = vpop.f32.mrf.mxu0
        %v1296 = vadd.f32 0.0, %v1295
        %v1297 = vpop.f32.mrf.mxu0
        %1298 = vdwg.mxu0
        %v1299 = vadd.f32 %v1023, %v1141
        %v1300 = vadd.f32 %v1024, %v1146
        %v1301 = vadd.f32 %v1025, %v1151
        %v1302 = vadd.f32 %v1026, %v1156
        %v1303 = vadd.f32 %v1027, %v1161
        %v1304 = vadd.f32 %v1028, %v1166
        %v1305 = vadd.f32 %v1029, %v1171
        %v1306 = vadd.f32 %v1030, %v1176
        %v1307 = vadd.f32 %v1031, %v1181
        %v1308 = vadd.f32 %v1032, %v1186
        %v1309 = vadd.f32 %v1033, %v1191
        %v1310 = vadd.f32 %v1034, %v1196
        %v1311 = vadd.f32 %v1035, %v1201
        %v1312 = vadd.f32 %v1036, %v1206
        %v1313 = vadd.f32 %v1037, %v1211
        %v1314 = vadd.f32 %v1038, %v1216
        %v1315 = vadd.f32 %v1039, %v1221
        %v1316 = vadd.f32 %v1040, %v1226
        %v1317 = vadd.f32 %v1041, %v1231
        %v1318 = vadd.f32 %v1042, %v1236
        %v1319 = vadd.f32 %v1043, %v1241
        %v1320 = vadd.f32 %v1044, %v1246
        %v1321 = vadd.f32 %v1045, %v1251
        %v1322 = vadd.f32 %v1046, %v1256
        %v1323 = vadd.f32 %v1047, %v1261
        %v1324 = vadd.f32 %v1048, %v1266
        %v1325 = vadd.f32 %v1049, %v1271
        %v1326 = vadd.f32 %v1050, %v1276
        %v1327 = vadd.f32 %v1051, %v1281
        %v1328 = vadd.f32 %v1052, %v1286
        %v1329 = vadd.f32 %v1053, %v1291
        %v1330 = vadd.f32 %v1054, %v1296
        %1331 = vst [vmem:[#allocation2] sm:$0xff] %v1299
        %1332 = vst [vmem:[#allocation2 + $0x8] sm:$0xff] %v1300
        %1333 = vst [vmem:[#allocation2 + $0x10] sm:$0xff] %v1301
        %1334 = vst [vmem:[#allocation2 + $0x18] sm:$0xff] %v1302
        %1335 = vst [vmem:[#allocation2 + $0x20] sm:$0xff] %v1303
        %1336 = vst [vmem:[#allocation2 + $0x28] sm:$0xff] %v1304
        %1337 = vst [vmem:[#allocation2 + $0x30] sm:$0xff] %v1305
        %1338 = vst [vmem:[#allocation2 + $0x38] sm:$0xff] %v1306
        %1339 = vst [vmem:[#allocation2 + $0x40] sm:$0xff] %v1307
        %1340 = vst [vmem:[#allocation2 + $0x48] sm:$0xff] %v1308
        %1341 = vst [vmem:[#allocation2 + $0x50] sm:$0xff] %v1309
        %1342 = vst [vmem:[#allocation2 + $0x58] sm:$0xff] %v1310
        %1343 = vst [vmem:[#allocation2 + $0x60] sm:$0xff] %v1311
        %1344 = vst [vmem:[#allocation2 + $0x68] sm:$0xff] %v1312
        %1345 = vst [vmem:[#allocation2 + $0x70] sm:$0xff] %v1313
        %1346 = vst [vmem:[#allocation2 + $0x78] sm:$0xff] %v1314
        %1347 = vst [vmem:[#allocation2 + $0x80] sm:$0xff] %v1315
        %1348 = vst [vmem:[#allocation2 + $0x88] sm:$0xff] %v1316
        %1349 = vst [vmem:[#allocation2 + $0x90] sm:$0xff] %v1317
        %1350 = vst [vmem:[#allocation2 + $0x98] sm:$0xff] %v1318
        %1351 = vst [vmem:[#allocation2 + $0xa0] sm:$0xff] %v1319
        %1352 = vst [vmem:[#allocation2 + $0xa8] sm:$0xff] %v1320
        %1353 = vst [vmem:[#allocation2 + $0xb0] sm:$0xff] %v1321
        %1354 = vst [vmem:[#allocation2 + $0xb8] sm:$0xff] %v1322
        %1355 = vst [vmem:[#allocation2 + $0xc0] sm:$0xff] %v1323
        %1356 = vst [vmem:[#allocation2 + $0xc8] sm:$0xff] %v1324
        %1357 = vst [vmem:[#allocation2 + $0xd0] sm:$0xff] %v1325
        %1358 = vst [vmem:[#allocation2 + $0xd8] sm:$0xff] %v1326
        %1359 = vst [vmem:[#allocation2 + $0xe0] sm:$0xff] %v1327
        %1360 = vst [vmem:[#allocation2 + $0xe8] sm:$0xff] %v1328
        %1361 = vst [vmem:[#allocation2 + $0xf0] sm:$0xff] %v1329
        %1362 = vst [vmem:[#allocation2 + $0xf8] sm:$0xff] %v1330
        %s1363 = scalar_lea.vmem %s209, 24
        %v1364 = vld [vmem:[%s1363] sm:$0xff]
        %v1365 = vld [vmem:[%s1363 + $0x8] sm:$0xff]
        %v1366 = vld [vmem:[%s1363 + $0x18] sm:$0xff]
        %v1367 = vld [vmem:[%s1363 + $0x20] sm:$0xff]
        %v1368 = vld [vmem:[%s1363 + $0x30] sm:$0xff]
        %v1369 = vld [vmem:[%s1363 + $0x38] sm:$0xff]
        %v1370 = vld [vmem:[%s1363 + $0x48] sm:$0xff]
        %v1371 = vld [vmem:[%s1363 + $0x50] sm:$0xff]
        %v1372 = vld [vmem:[%s1363 + $0x60] sm:$0xff]
        %v1373 = vld [vmem:[%s1363 + $0x68] sm:$0xff]
        %v1374 = vld [vmem:[%s1363 + $0x78] sm:$0xff]
        %v1375 = vld [vmem:[%s1363 + $0x80] sm:$0xff]
        %v1376 = vld [vmem:[%s1363 + $0x90] sm:$0xff]
        %v1377 = vld [vmem:[%s1363 + $0x98] sm:$0xff]
        %v1378 = vld [vmem:[%s1363 + $0xa8] sm:$0xff]
        %v1379 = vld [vmem:[%s1363 + $0xb0] sm:$0xff]
        %v1380 = vld [vmem:[%s1363 + $0xc0] sm:$0xff]
        %v1381 = vld [vmem:[%s1363 + $0xc8] sm:$0xff]
        %v1382 = vld [vmem:[%s1363 + $0xd8] sm:$0xff]
        %v1383 = vld [vmem:[%s1363 + $0xe0] sm:$0xff]
        %v1384 = vld [vmem:[%s1363 + $0xf0] sm:$0xff]
        %v1385 = vld [vmem:[%s1363 + $0xf8] sm:$0xff]
        %v1386 = vld [vmem:[%s1363 + $0x108] sm:$0xff]
        %v1387 = vld [vmem:[%s1363 + $0x110] sm:$0xff]
        %v1388 = vld [vmem:[%s1363 + $0x120] sm:$0xff]
        %v1389 = vld [vmem:[%s1363 + $0x128] sm:$0xff]
        %v1390 = vld [vmem:[%s1363 + $0x138] sm:$0xff]
        %v1391 = vld [vmem:[%s1363 + $0x140] sm:$0xff]
        %v1392 = vld [vmem:[%s1363 + $0x150] sm:$0xff]
        %v1393 = vld [vmem:[%s1363 + $0x158] sm:$0xff]
        %v1394 = vld [vmem:[%s1363 + $0x168] sm:$0xff]
        %v1395 = vld [vmem:[%s1363 + $0x170] sm:$0xff]
        %v1396 = vld [vmem:[#allocation2] sm:$0xff]
        %v1397 = vld [vmem:[#allocation2 + $0x8] sm:$0xff]
        %v1398 = vld [vmem:[#allocation2 + $0x10] sm:$0xff]
        %v1399 = vld [vmem:[#allocation2 + $0x18] sm:$0xff]
        %v1400 = vld [vmem:[#allocation2 + $0x20] sm:$0xff]
        %v1401 = vld [vmem:[#allocation2 + $0x28] sm:$0xff]
        %v1402 = vld [vmem:[#allocation2 + $0x30] sm:$0xff]
        %v1403 = vld [vmem:[#allocation2 + $0x38] sm:$0xff]
        %v1404 = vld [vmem:[#allocation2 + $0x40] sm:$0xff]
        %v1405 = vld [vmem:[#allocation2 + $0x48] sm:$0xff]
        %v1406 = vld [vmem:[#allocation2 + $0x50] sm:$0xff]
        %v1407 = vld [vmem:[#allocation2 + $0x58] sm:$0xff]
        %v1408 = vld [vmem:[#allocation2 + $0x60] sm:$0xff]
        %v1409 = vld [vmem:[#allocation2 + $0x68] sm:$0xff]
        %v1410 = vld [vmem:[#allocation2 + $0x70] sm:$0xff]
        %v1411 = vld [vmem:[#allocation2 + $0x78] sm:$0xff]
        %v1412 = vld [vmem:[#allocation2 + $0x80] sm:$0xff]
        %v1413 = vld [vmem:[#allocation2 + $0x88] sm:$0xff]
        %v1414 = vld [vmem:[#allocation2 + $0x90] sm:$0xff]
        %v1415 = vld [vmem:[#allocation2 + $0x98] sm:$0xff]
        %v1416 = vld [vmem:[#allocation2 + $0xa0] sm:$0xff]
        %v1417 = vld [vmem:[#allocation2 + $0xa8] sm:$0xff]
        %v1418 = vld [vmem:[#allocation2 + $0xb0] sm:$0xff]
        %v1419 = vld [vmem:[#allocation2 + $0xb8] sm:$0xff]
        %v1420 = vld [vmem:[#allocation2 + $0xc0] sm:$0xff]
        %v1421 = vld [vmem:[#allocation2 + $0xc8] sm:$0xff]
        %v1422 = vld [vmem:[#allocation2 + $0xd0] sm:$0xff]
        %v1423 = vld [vmem:[#allocation2 + $0xd8] sm:$0xff]
        %v1424 = vld [vmem:[#allocation2 + $0xe0] sm:$0xff]
        %v1425 = vld [vmem:[#allocation2 + $0xe8] sm:$0xff]
        %v1426 = vld [vmem:[#allocation2 + $0xf0] sm:$0xff]
        %v1427 = vld [vmem:[#allocation2 + $0xf8] sm:$0xff]
        %s1428 = sadd.s32 %s311, 3
        %s1429 = smul.u32 %s1428, 128
        %s1430 = scalar_lea.vmem %s1, %s1429
        %v1431 = vld [vmem:[%s1430] sm:$0xff]
        %v1432 = vld [vmem:[%s1430 + $0x8] sm:$0xff]
        %v1433 = vld [vmem:[%s1430 + $0x10] sm:$0xff]
        %v1434 = vld [vmem:[%s1430 + $0x18] sm:$0xff]
        %v1435 = vld [vmem:[%s1430 + $0x20] sm:$0xff]
        %v1436 = vld [vmem:[%s1430 + $0x28] sm:$0xff]
        %v1437 = vld [vmem:[%s1430 + $0x30] sm:$0xff]
        %v1438 = vld [vmem:[%s1430 + $0x38] sm:$0xff]
        %v1439 = vld [vmem:[%s1430 + $0x40] sm:$0xff]
        %v1440 = vld [vmem:[%s1430 + $0x48] sm:$0xff]
        %v1441 = vld [vmem:[%s1430 + $0x50] sm:$0xff]
        %v1442 = vld [vmem:[%s1430 + $0x58] sm:$0xff]
        %v1443 = vld [vmem:[%s1430 + $0x60] sm:$0xff]
        %v1444 = vld [vmem:[%s1430 + $0x68] sm:$0xff]
        %v1445 = vld [vmem:[%s1430 + $0x70] sm:$0xff]
        %v1446 = vld [vmem:[%s1430 + $0x78] sm:$0xff]
        %1447 = vmatprep.subr.mxu0 0.0
        %1448 = vmatpush1.msra.mxu0 %v1446
        %1449 = vmatprep.subr.mxu0 0.0
        %1450 = vmatpush1.msra.mxu0 %v1445
        %1451 = vmatprep.subr.mxu0 0.0
        %1452 = vmatpush1.msra.mxu0 %v1444
        %1453 = vmatprep.subr.mxu0 0.0
        %1454 = vmatpush1.msra.mxu0 %v1443
        %1455 = vmatprep.subr.mxu0 0.0
        %1456 = vmatpush1.msra.mxu0 %v1442
        %1457 = vmatprep.subr.mxu0 0.0
        %1458 = vmatpush1.msra.mxu0 %v1441
        %1459 = vmatprep.subr.mxu0 0.0
        %1460 = vmatpush1.msra.mxu0 %v1440
        %1461 = vmatprep.subr.mxu0 0.0
        %1462 = vmatpush1.msra.mxu0 %v1439
        %1463 = vmatprep.subr.mxu0 0.0
        %1464 = vmatpush1.msra.mxu0 %v1438
        %1465 = vmatprep.subr.mxu0 0.0
        %1466 = vmatpush1.msra.mxu0 %v1437
        %1467 = vmatprep.subr.mxu0 0.0
        %1468 = vmatpush1.msra.mxu0 %v1436
        %1469 = vmatprep.subr.mxu0 0.0
        %1470 = vmatpush1.msra.mxu0 %v1435
        %1471 = vmatprep.subr.mxu0 0.0
        %1472 = vmatpush1.msra.mxu0 %v1434
        %1473 = vmatprep.subr.mxu0 0.0
        %1474 = vmatpush1.msra.mxu0 %v1433
        %1475 = vmatprep.subr.mxu0 0.0
        %1476 = vmatpush1.msra.mxu0 %v1432
        %1477 = vmatprep.subr.mxu0 0.0
        %1478 = vmatpush1.msra.mxu0 %v1431
        %1479 = vmatprep.subr.mxu0 0.0
        %1480 = vmatpush2.msra.mxu0 0.0
        %1481 = vmatprep.subr.mxu0 0.0
        %1482 = vmatpush2.msra.mxu0 0.0
        %1483 = vmatprep.subr.mxu0 0.0
        %1484 = vmatpush2.msra.mxu0 0.0
        %1485 = vmatprep.subr.mxu0 0.0
        %1486 = vmatpush2.msra.mxu0 0.0
        %1487 = vmatprep.subr.mxu0 0.0
        %1488 = vmatpush2.msra.mxu0 0.0
        %1489 = vmatprep.subr.mxu0 0.0
        %1490 = vmatpush2.msra.mxu0 0.0
        %1491 = vmatprep.subr.mxu0 0.0
        %1492 = vmatpush2.msra.mxu0 0.0
        %1493 = vmatprep.subr.mxu0 0.0
        %1494 = vmatpush2.msra.mxu0 0.0
        %1495 = vmatprep.subr.mxu0 0.0
        %1496 = vmatpush2.msra.mxu0 0.0
        %1497 = vmatprep.subr.mxu0 0.0
        %1498 = vmatpush2.msra.mxu0 0.0
        %1499 = vmatprep.subr.mxu0 0.0
        %1500 = vmatpush2.msra.mxu0 0.0
        %1501 = vmatprep.subr.mxu0 0.0
        %1502 = vmatpush2.msra.mxu0 0.0
        %1503 = vmatprep.subr.mxu0 0.0
        %1504 = vmatpush2.msra.mxu0 0.0
        %1505 = vmatprep.subr.mxu0 0.0
        %1506 = vmatpush2.msra.mxu0 0.0
        %1507 = vmatprep.subr.mxu0 0.0
        %1508 = vmatpush2.msra.mxu0 0.0
        %1509 = vmatprep.subr.mxu0 0.0
        %1510 = vmatpush2.msra.mxu0 0.0
        %1511 = vmatprep.mubr.f32.mxu0 0.0
        %1512 = vmatmul.mubr.f32.gmra.mxu0 %v1364
        %v1513 = vpop.f32.mrf.mxu0
        %v1514 = vadd.f32 0.0, %v1513
        %v1515 = vpop.f32.mrf.mxu0
        %1516 = vmatprep.mubr.f32.mxu0 0.0
        %1517 = vmatmul.mubr.f32.gmra.mxu0 %v1365
        %v1518 = vpop.f32.mrf.mxu0
        %v1519 = vadd.f32 0.0, %v1518
        %v1520 = vpop.f32.mrf.mxu0
        %1521 = vmatprep.mubr.f32.mxu0 0.0
        %1522 = vmatmul.mubr.f32.gmra.mxu0 %v1366
        %v1523 = vpop.f32.mrf.mxu0
        %v1524 = vadd.f32 0.0, %v1523
        %v1525 = vpop.f32.mrf.mxu0
        %1526 = vmatprep.mubr.f32.mxu0 0.0
        %1527 = vmatmul.mubr.f32.gmra.mxu0 %v1367
        %v1528 = vpop.f32.mrf.mxu0
        %v1529 = vadd.f32 0.0, %v1528
        %v1530 = vpop.f32.mrf.mxu0
        %1531 = vmatprep.mubr.f32.mxu0 0.0
        %1532 = vmatmul.mubr.f32.gmra.mxu0 %v1368
        %v1533 = vpop.f32.mrf.mxu0
        %v1534 = vadd.f32 0.0, %v1533
        %v1535 = vpop.f32.mrf.mxu0
        %1536 = vmatprep.mubr.f32.mxu0 0.0
        %1537 = vmatmul.mubr.f32.gmra.mxu0 %v1369
        %v1538 = vpop.f32.mrf.mxu0
        %v1539 = vadd.f32 0.0, %v1538
        %v1540 = vpop.f32.mrf.mxu0
        %1541 = vmatprep.mubr.f32.mxu0 0.0
        %1542 = vmatmul.mubr.f32.gmra.mxu0 %v1370
        %v1543 = vpop.f32.mrf.mxu0
        %v1544 = vadd.f32 0.0, %v1543
        %v1545 = vpop.f32.mrf.mxu0
        %1546 = vmatprep.mubr.f32.mxu0 0.0
        %1547 = vmatmul.mubr.f32.gmra.mxu0 %v1371
        %v1548 = vpop.f32.mrf.mxu0
        %v1549 = vadd.f32 0.0, %v1548
        %v1550 = vpop.f32.mrf.mxu0
        %1551 = vmatprep.mubr.f32.mxu0 0.0
        %1552 = vmatmul.mubr.f32.gmra.mxu0 %v1372
        %v1553 = vpop.f32.mrf.mxu0
        %v1554 = vadd.f32 0.0, %v1553
        %v1555 = vpop.f32.mrf.mxu0
        %1556 = vmatprep.mubr.f32.mxu0 0.0
        %1557 = vmatmul.mubr.f32.gmra.mxu0 %v1373
        %v1558 = vpop.f32.mrf.mxu0
        %v1559 = vadd.f32 0.0, %v1558
        %v1560 = vpop.f32.mrf.mxu0
        %1561 = vmatprep.mubr.f32.mxu0 0.0
        %1562 = vmatmul.mubr.f32.gmra.mxu0 %v1374
        %v1563 = vpop.f32.mrf.mxu0
        %v1564 = vadd.f32 0.0, %v1563
        %v1565 = vpop.f32.mrf.mxu0
        %1566 = vmatprep.mubr.f32.mxu0 0.0
        %1567 = vmatmul.mubr.f32.gmra.mxu0 %v1375
        %v1568 = vpop.f32.mrf.mxu0
        %v1569 = vadd.f32 0.0, %v1568
        %v1570 = vpop.f32.mrf.mxu0
        %1571 = vmatprep.mubr.f32.mxu0 0.0
        %1572 = vmatmul.mubr.f32.gmra.mxu0 %v1376
        %v1573 = vpop.f32.mrf.mxu0
        %v1574 = vadd.f32 0.0, %v1573
        %v1575 = vpop.f32.mrf.mxu0
        %1576 = vmatprep.mubr.f32.mxu0 0.0
        %1577 = vmatmul.mubr.f32.gmra.mxu0 %v1377
        %v1578 = vpop.f32.mrf.mxu0
        %v1579 = vadd.f32 0.0, %v1578
        %v1580 = vpop.f32.mrf.mxu0
        %1581 = vmatprep.mubr.f32.mxu0 0.0
        %1582 = vmatmul.mubr.f32.gmra.mxu0 %v1378
        %v1583 = vpop.f32.mrf.mxu0
        %v1584 = vadd.f32 0.0, %v1583
        %v1585 = vpop.f32.mrf.mxu0
        %1586 = vmatprep.mubr.f32.mxu0 0.0
        %1587 = vmatmul.mubr.f32.gmra.mxu0 %v1379
        %v1588 = vpop.f32.mrf.mxu0
        %v1589 = vadd.f32 0.0, %v1588
        %v1590 = vpop.f32.mrf.mxu0
        %1591 = vmatprep.mubr.f32.mxu0 0.0
        %1592 = vmatmul.mubr.f32.gmra.mxu0 %v1380
        %v1593 = vpop.f32.mrf.mxu0
        %v1594 = vadd.f32 0.0, %v1593
        %v1595 = vpop.f32.mrf.mxu0
        %1596 = vmatprep.mubr.f32.mxu0 0.0
        %1597 = vmatmul.mubr.f32.gmra.mxu0 %v1381
        %v1598 = vpop.f32.mrf.mxu0
        %v1599 = vadd.f32 0.0, %v1598
        %v1600 = vpop.f32.mrf.mxu0
        %1601 = vmatprep.mubr.f32.mxu0 0.0
        %1602 = vmatmul.mubr.f32.gmra.mxu0 %v1382
        %v1603 = vpop.f32.mrf.mxu0
        %v1604 = vadd.f32 0.0, %v1603
        %v1605 = vpop.f32.mrf.mxu0
        %1606 = vmatprep.mubr.f32.mxu0 0.0
        %1607 = vmatmul.mubr.f32.gmra.mxu0 %v1383
        %v1608 = vpop.f32.mrf.mxu0
        %v1609 = vadd.f32 0.0, %v1608
        %v1610 = vpop.f32.mrf.mxu0
        %1611 = vmatprep.mubr.f32.mxu0 0.0
        %1612 = vmatmul.mubr.f32.gmra.mxu0 %v1384
        %v1613 = vpop.f32.mrf.mxu0
        %v1614 = vadd.f32 0.0, %v1613
        %v1615 = vpop.f32.mrf.mxu0
        %1616 = vmatprep.mubr.f32.mxu0 0.0
        %1617 = vmatmul.mubr.f32.gmra.mxu0 %v1385
        %v1618 = vpop.f32.mrf.mxu0
        %v1619 = vadd.f32 0.0, %v1618
        %v1620 = vpop.f32.mrf.mxu0
        %1621 = vmatprep.mubr.f32.mxu0 0.0
        %1622 = vmatmul.mubr.f32.gmra.mxu0 %v1386
        %v1623 = vpop.f32.mrf.mxu0
        %v1624 = vadd.f32 0.0, %v1623
        %v1625 = vpop.f32.mrf.mxu0
        %1626 = vmatprep.mubr.f32.mxu0 0.0
        %1627 = vmatmul.mubr.f32.gmra.mxu0 %v1387
        %v1628 = vpop.f32.mrf.mxu0
        %v1629 = vadd.f32 0.0, %v1628
        %v1630 = vpop.f32.mrf.mxu0
        %1631 = vmatprep.mubr.f32.mxu0 0.0
        %1632 = vmatmul.mubr.f32.gmra.mxu0 %v1388
        %v1633 = vpop.f32.mrf.mxu0
        %v1634 = vadd.f32 0.0, %v1633
        %v1635 = vpop.f32.mrf.mxu0
        %1636 = vmatprep.mubr.f32.mxu0 0.0
        %1637 = vmatmul.mubr.f32.gmra.mxu0 %v1389
        %v1638 = vpop.f32.mrf.mxu0
        %v1639 = vadd.f32 0.0, %v1638
        %v1640 = vpop.f32.mrf.mxu0
        %1641 = vmatprep.mubr.f32.mxu0 0.0
        %1642 = vmatmul.mubr.f32.gmra.mxu0 %v1390
        %v1643 = vpop.f32.mrf.mxu0
        %v1644 = vadd.f32 0.0, %v1643
        %v1645 = vpop.f32.mrf.mxu0
        %1646 = vmatprep.mubr.f32.mxu0 0.0
        %1647 = vmatmul.mubr.f32.gmra.mxu0 %v1391
        %v1648 = vpop.f32.mrf.mxu0
        %v1649 = vadd.f32 0.0, %v1648
        %v1650 = vpop.f32.mrf.mxu0
        %1651 = vmatprep.mubr.f32.mxu0 0.0
        %1652 = vmatmul.mubr.f32.gmra.mxu0 %v1392
        %v1653 = vpop.f32.mrf.mxu0
        %v1654 = vadd.f32 0.0, %v1653
        %v1655 = vpop.f32.mrf.mxu0
        %1656 = vmatprep.mubr.f32.mxu0 0.0
        %1657 = vmatmul.mubr.f32.gmra.mxu0 %v1393
        %v1658 = vpop.f32.mrf.mxu0
        %v1659 = vadd.f32 0.0, %v1658
        %v1660 = vpop.f32.mrf.mxu0
        %1661 = vmatprep.mubr.f32.mxu0 0.0
        %1662 = vmatmul.mubr.f32.gmra.mxu0 %v1394
        %v1663 = vpop.f32.mrf.mxu0
        %v1664 = vadd.f32 0.0, %v1663
        %v1665 = vpop.f32.mrf.mxu0
        %1666 = vmatprep.mubr.f32.mxu0 0.0
        %1667 = vmatmul.mubr.f32.gmra.mxu0 %v1395
        %v1668 = vpop.f32.mrf.mxu0
        %v1669 = vadd.f32 0.0, %v1668
        %v1670 = vpop.f32.mrf.mxu0
        %1671 = vdwg.mxu0
        %v1672 = vadd.f32 %v1396, %v1514
        %v1673 = vadd.f32 %v1397, %v1519
        %v1674 = vadd.f32 %v1398, %v1524
        %v1675 = vadd.f32 %v1399, %v1529
        %v1676 = vadd.f32 %v1400, %v1534
        %v1677 = vadd.f32 %v1401, %v1539
        %v1678 = vadd.f32 %v1402, %v1544
        %v1679 = vadd.f32 %v1403, %v1549
        %v1680 = vadd.f32 %v1404, %v1554
        %v1681 = vadd.f32 %v1405, %v1559
        %v1682 = vadd.f32 %v1406, %v1564
        %v1683 = vadd.f32 %v1407, %v1569
        %v1684 = vadd.f32 %v1408, %v1574
        %v1685 = vadd.f32 %v1409, %v1579
        %v1686 = vadd.f32 %v1410, %v1584
        %v1687 = vadd.f32 %v1411, %v1589
        %v1688 = vadd.f32 %v1412, %v1594
        %v1689 = vadd.f32 %v1413, %v1599
        %v1690 = vadd.f32 %v1414, %v1604
        %v1691 = vadd.f32 %v1415, %v1609
        %v1692 = vadd.f32 %v1416, %v1614
        %v1693 = vadd.f32 %v1417, %v1619
        %v1694 = vadd.f32 %v1418, %v1624
        %v1695 = vadd.f32 %v1419, %v1629
        %v1696 = vadd.f32 %v1420, %v1634
        %v1697 = vadd.f32 %v1421, %v1639
        %v1698 = vadd.f32 %v1422, %v1644
        %v1699 = vadd.f32 %v1423, %v1649
        %v1700 = vadd.f32 %v1424, %v1654
        %v1701 = vadd.f32 %v1425, %v1659
        %v1702 = vadd.f32 %v1426, %v1664
        %v1703 = vadd.f32 %v1427, %v1669
        %1704 = vst [vmem:[#allocation2] sm:$0xff] %v1672
        %1705 = vst [vmem:[#allocation2 + $0x8] sm:$0xff] %v1673
        %1706 = vst [vmem:[#allocation2 + $0x10] sm:$0xff] %v1674
        %1707 = vst [vmem:[#allocation2 + $0x18] sm:$0xff] %v1675
        %1708 = vst [vmem:[#allocation2 + $0x20] sm:$0xff] %v1676
        %1709 = vst [vmem:[#allocation2 + $0x28] sm:$0xff] %v1677
        %1710 = vst [vmem:[#allocation2 + $0x30] sm:$0xff] %v1678
        %1711 = vst [vmem:[#allocation2 + $0x38] sm:$0xff] %v1679
        %1712 = vst [vmem:[#allocation2 + $0x40] sm:$0xff] %v1680
        %1713 = vst [vmem:[#allocation2 + $0x48] sm:$0xff] %v1681
        %1714 = vst [vmem:[#allocation2 + $0x50] sm:$0xff] %v1682
        %1715 = vst [vmem:[#allocation2 + $0x58] sm:$0xff] %v1683
        %1716 = vst [vmem:[#allocation2 + $0x60] sm:$0xff] %v1684
        %1717 = vst [vmem:[#allocation2 + $0x68] sm:$0xff] %v1685
        %1718 = vst [vmem:[#allocation2 + $0x70] sm:$0xff] %v1686
        %1719 = vst [vmem:[#allocation2 + $0x78] sm:$0xff] %v1687
        %1720 = vst [vmem:[#allocation2 + $0x80] sm:$0xff] %v1688
        %1721 = vst [vmem:[#allocation2 + $0x88] sm:$0xff] %v1689
        %1722 = vst [vmem:[#allocation2 + $0x90] sm:$0xff] %v1690
        %1723 = vst [vmem:[#allocation2 + $0x98] sm:$0xff] %v1691
        %1724 = vst [vmem:[#allocation2 + $0xa0] sm:$0xff] %v1692
        %1725 = vst [vmem:[#allocation2 + $0xa8] sm:$0xff] %v1693
        %1726 = vst [vmem:[#allocation2 + $0xb0] sm:$0xff] %v1694
        %1727 = vst [vmem:[#allocation2 + $0xb8] sm:$0xff] %v1695
        %1728 = vst [vmem:[#allocation2 + $0xc0] sm:$0xff] %v1696
        %1729 = vst [vmem:[#allocation2 + $0xc8] sm:$0xff] %v1697
        %1730 = vst [vmem:[#allocation2 + $0xd0] sm:$0xff] %v1698
        %1731 = vst [vmem:[#allocation2 + $0xd8] sm:$0xff] %v1699
        %1732 = vst [vmem:[#allocation2 + $0xe0] sm:$0xff] %v1700
        %1733 = vst [vmem:[#allocation2 + $0xe8] sm:$0xff] %v1701
        %1734 = vst [vmem:[#allocation2 + $0xf0] sm:$0xff] %v1702
        %1735 = vst [vmem:[#allocation2 + $0xf8] sm:$0xff] %v1703
        %v1736 = vld [vmem:[%s1363 + $0x1] sm:$0xff]
        %v1737 = vld [vmem:[%s1363 + $0x9] sm:$0xff]
        %v1738 = vld [vmem:[%s1363 + $0x19] sm:$0xff]
        %v1739 = vld [vmem:[%s1363 + $0x21] sm:$0xff]
        %v1740 = vld [vmem:[%s1363 + $0x31] sm:$0xff]
        %v1741 = vld [vmem:[%s1363 + $0x39] sm:$0xff]
        %v1742 = vld [vmem:[%s1363 + $0x49] sm:$0xff]
        %v1743 = vld [vmem:[%s1363 + $0x51] sm:$0xff]
        %v1744 = vld [vmem:[%s1363 + $0x61] sm:$0xff]
        %v1745 = vld [vmem:[%s1363 + $0x69] sm:$0xff]
        %v1746 = vld [vmem:[%s1363 + $0x79] sm:$0xff]
        %v1747 = vld [vmem:[%s1363 + $0x81] sm:$0xff]
        %v1748 = vld [vmem:[%s1363 + $0x91] sm:$0xff]
        %v1749 = vld [vmem:[%s1363 + $0x99] sm:$0xff]
        %v1750 = vld [vmem:[%s1363 + $0xa9] sm:$0xff]
        %v1751 = vld [vmem:[%s1363 + $0xb1] sm:$0xff]
        %v1752 = vld [vmem:[%s1363 + $0xc1] sm:$0xff]
        %v1753 = vld [vmem:[%s1363 + $0xc9] sm:$0xff]
        %v1754 = vld [vmem:[%s1363 + $0xd9] sm:$0xff]
        %v1755 = vld [vmem:[%s1363 + $0xe1] sm:$0xff]
        %v1756 = vld [vmem:[%s1363 + $0xf1] sm:$0xff]
        %v1757 = vld [vmem:[%s1363 + $0xf9] sm:$0xff]
        %v1758 = vld [vmem:[%s1363 + $0x109] sm:$0xff]
        %v1759 = vld [vmem:[%s1363 + $0x111] sm:$0xff]
        %v1760 = vld [vmem:[%s1363 + $0x121] sm:$0xff]
        %v1761 = vld [vmem:[%s1363 + $0x129] sm:$0xff]
        %v1762 = vld [vmem:[%s1363 + $0x139] sm:$0xff]
        %v1763 = vld [vmem:[%s1363 + $0x141] sm:$0xff]
        %v1764 = vld [vmem:[%s1363 + $0x151] sm:$0xff]
        %v1765 = vld [vmem:[%s1363 + $0x159] sm:$0xff]
        %v1766 = vld [vmem:[%s1363 + $0x169] sm:$0xff]
        %v1767 = vld [vmem:[%s1363 + $0x171] sm:$0xff]
        %v1768 = vld [vmem:[#allocation2] sm:$0xff]
        %v1769 = vld [vmem:[#allocation2 + $0x8] sm:$0xff]
        %v1770 = vld [vmem:[#allocation2 + $0x10] sm:$0xff]
        %v1771 = vld [vmem:[#allocation2 + $0x18] sm:$0xff]
        %v1772 = vld [vmem:[#allocation2 + $0x20] sm:$0xff]
        %v1773 = vld [vmem:[#allocation2 + $0x28] sm:$0xff]
        %v1774 = vld [vmem:[#allocation2 + $0x30] sm:$0xff]
        %v1775 = vld [vmem:[#allocation2 + $0x38] sm:$0xff]
        %v1776 = vld [vmem:[#allocation2 + $0x40] sm:$0xff]
        %v1777 = vld [vmem:[#allocation2 + $0x48] sm:$0xff]
        %v1778 = vld [vmem:[#allocation2 + $0x50] sm:$0xff]
        %v1779 = vld [vmem:[#allocation2 + $0x58] sm:$0xff]
        %v1780 = vld [vmem:[#allocation2 + $0x60] sm:$0xff]
        %v1781 = vld [vmem:[#allocation2 + $0x68] sm:$0xff]
        %v1782 = vld [vmem:[#allocation2 + $0x70] sm:$0xff]
        %v1783 = vld [vmem:[#allocation2 + $0x78] sm:$0xff]
        %v1784 = vld [vmem:[#allocation2 + $0x80] sm:$0xff]
        %v1785 = vld [vmem:[#allocation2 + $0x88] sm:$0xff]
        %v1786 = vld [vmem:[#allocation2 + $0x90] sm:$0xff]
        %v1787 = vld [vmem:[#allocation2 + $0x98] sm:$0xff]
        %v1788 = vld [vmem:[#allocation2 + $0xa0] sm:$0xff]
        %v1789 = vld [vmem:[#allocation2 + $0xa8] sm:$0xff]
        %v1790 = vld [vmem:[#allocation2 + $0xb0] sm:$0xff]
        %v1791 = vld [vmem:[#allocation2 + $0xb8] sm:$0xff]
        %v1792 = vld [vmem:[#allocation2 + $0xc0] sm:$0xff]
        %v1793 = vld [vmem:[#allocation2 + $0xc8] sm:$0xff]
        %v1794 = vld [vmem:[#allocation2 + $0xd0] sm:$0xff]
        %v1795 = vld [vmem:[#allocation2 + $0xd8] sm:$0xff]
        %v1796 = vld [vmem:[#allocation2 + $0xe0] sm:$0xff]
        %v1797 = vld [vmem:[#allocation2 + $0xe8] sm:$0xff]
        %v1798 = vld [vmem:[#allocation2 + $0xf0] sm:$0xff]
        %v1799 = vld [vmem:[#allocation2 + $0xf8] sm:$0xff]
        %s1800 = sadd.s32 %s311, 4
        %s1801 = smul.u32 %s1800, 128
        %s1802 = scalar_lea.vmem %s1, %s1801
        %v1803 = vld [vmem:[%s1802] sm:$0xff]
        %v1804 = vld [vmem:[%s1802 + $0x8] sm:$0xff]
        %v1805 = vld [vmem:[%s1802 + $0x10] sm:$0xff]
        %v1806 = vld [vmem:[%s1802 + $0x18] sm:$0xff]
        %v1807 = vld [vmem:[%s1802 + $0x20] sm:$0xff]
        %v1808 = vld [vmem:[%s1802 + $0x28] sm:$0xff]
        %v1809 = vld [vmem:[%s1802 + $0x30] sm:$0xff]
        %v1810 = vld [vmem:[%s1802 + $0x38] sm:$0xff]
        %v1811 = vld [vmem:[%s1802 + $0x40] sm:$0xff]
        %v1812 = vld [vmem:[%s1802 + $0x48] sm:$0xff]
        %v1813 = vld [vmem:[%s1802 + $0x50] sm:$0xff]
        %v1814 = vld [vmem:[%s1802 + $0x58] sm:$0xff]
        %v1815 = vld [vmem:[%s1802 + $0x60] sm:$0xff]
        %v1816 = vld [vmem:[%s1802 + $0x68] sm:$0xff]
        %v1817 = vld [vmem:[%s1802 + $0x70] sm:$0xff]
        %v1818 = vld [vmem:[%s1802 + $0x78] sm:$0xff]
        %1819 = vmatprep.subr.mxu0 0.0
        %1820 = vmatpush1.msra.mxu0 %v1818
        %1821 = vmatprep.subr.mxu0 0.0
        %1822 = vmatpush1.msra.mxu0 %v1817
        %1823 = vmatprep.subr.mxu0 0.0
        %1824 = vmatpush1.msra.mxu0 %v1816
        %1825 = vmatprep.subr.mxu0 0.0
        %1826 = vmatpush1.msra.mxu0 %v1815
        %1827 = vmatprep.subr.mxu0 0.0
        %1828 = vmatpush1.msra.mxu0 %v1814
        %1829 = vmatprep.subr.mxu0 0.0
        %1830 = vmatpush1.msra.mxu0 %v1813
        %1831 = vmatprep.subr.mxu0 0.0
        %1832 = vmatpush1.msra.mxu0 %v1812
        %1833 = vmatprep.subr.mxu0 0.0
        %1834 = vmatpush1.msra.mxu0 %v1811
        %1835 = vmatprep.subr.mxu0 0.0
        %1836 = vmatpush1.msra.mxu0 %v1810
        %1837 = vmatprep.subr.mxu0 0.0
        %1838 = vmatpush1.msra.mxu0 %v1809
        %1839 = vmatprep.subr.mxu0 0.0
        %1840 = vmatpush1.msra.mxu0 %v1808
        %1841 = vmatprep.subr.mxu0 0.0
        %1842 = vmatpush1.msra.mxu0 %v1807
        %1843 = vmatprep.subr.mxu0 0.0
        %1844 = vmatpush1.msra.mxu0 %v1806
        %1845 = vmatprep.subr.mxu0 0.0
        %1846 = vmatpush1.msra.mxu0 %v1805
        %1847 = vmatprep.subr.mxu0 0.0
        %1848 = vmatpush1.msra.mxu0 %v1804
        %1849 = vmatprep.subr.mxu0 0.0
        %1850 = vmatpush1.msra.mxu0 %v1803
        %1851 = vmatprep.subr.mxu0 0.0
        %1852 = vmatpush2.msra.mxu0 0.0
        %1853 = vmatprep.subr.mxu0 0.0
        %1854 = vmatpush2.msra.mxu0 0.0
        %1855 = vmatprep.subr.mxu0 0.0
        %1856 = vmatpush2.msra.mxu0 0.0
        %1857 = vmatprep.subr.mxu0 0.0
        %1858 = vmatpush2.msra.mxu0 0.0
        %1859 = vmatprep.subr.mxu0 0.0
        %1860 = vmatpush2.msra.mxu0 0.0
        %1861 = vmatprep.subr.mxu0 0.0
        %1862 = vmatpush2.msra.mxu0 0.0
        %1863 = vmatprep.subr.mxu0 0.0
        %1864 = vmatpush2.msra.mxu0 0.0
        %1865 = vmatprep.subr.mxu0 0.0
        %1866 = vmatpush2.msra.mxu0 0.0
        %1867 = vmatprep.subr.mxu0 0.0
        %1868 = vmatpush2.msra.mxu0 0.0
        %1869 = vmatprep.subr.mxu0 0.0
        %1870 = vmatpush2.msra.mxu0 0.0
        %1871 = vmatprep.subr.mxu0 0.0
        %1872 = vmatpush2.msra.mxu0 0.0
        %1873 = vmatprep.subr.mxu0 0.0
        %1874 = vmatpush2.msra.mxu0 0.0
        %1875 = vmatprep.subr.mxu0 0.0
        %1876 = vmatpush2.msra.mxu0 0.0
        %1877 = vmatprep.subr.mxu0 0.0
        %1878 = vmatpush2.msra.mxu0 0.0
        %1879 = vmatprep.subr.mxu0 0.0
        %1880 = vmatpush2.msra.mxu0 0.0
        %1881 = vmatprep.subr.mxu0 0.0
        %1882 = vmatpush2.msra.mxu0 0.0
        %1883 = vmatprep.mubr.f32.mxu0 0.0
        %1884 = vmatmul.mubr.f32.gmra.mxu0 %v1736
        %v1885 = vpop.f32.mrf.mxu0
        %v1886 = vadd.f32 0.0, %v1885
        %v1887 = vpop.f32.mrf.mxu0
        %1888 = vmatprep.mubr.f32.mxu0 0.0
        %1889 = vmatmul.mubr.f32.gmra.mxu0 %v1737
        %v1890 = vpop.f32.mrf.mxu0
        %v1891 = vadd.f32 0.0, %v1890
        %v1892 = vpop.f32.mrf.mxu0
        %1893 = vmatprep.mubr.f32.mxu0 0.0
        %1894 = vmatmul.mubr.f32.gmra.mxu0 %v1738
        %v1895 = vpop.f32.mrf.mxu0
        %v1896 = vadd.f32 0.0, %v1895
        %v1897 = vpop.f32.mrf.mxu0
        %1898 = vmatprep.mubr.f32.mxu0 0.0
        %1899 = vmatmul.mubr.f32.gmra.mxu0 %v1739
        %v1900 = vpop.f32.mrf.mxu0
        %v1901 = vadd.f32 0.0, %v1900
        %v1902 = vpop.f32.mrf.mxu0
        %1903 = vmatprep.mubr.f32.mxu0 0.0
        %1904 = vmatmul.mubr.f32.gmra.mxu0 %v1740
        %v1905 = vpop.f32.mrf.mxu0
        %v1906 = vadd.f32 0.0, %v1905
        %v1907 = vpop.f32.mrf.mxu0
        %1908 = vmatprep.mubr.f32.mxu0 0.0
        %1909 = vmatmul.mubr.f32.gmra.mxu0 %v1741
        %v1910 = vpop.f32.mrf.mxu0
        %v1911 = vadd.f32 0.0, %v1910
        %v1912 = vpop.f32.mrf.mxu0
        %1913 = vmatprep.mubr.f32.mxu0 0.0
        %1914 = vmatmul.mubr.f32.gmra.mxu0 %v1742
        %v1915 = vpop.f32.mrf.mxu0
        %v1916 = vadd.f32 0.0, %v1915
        %v1917 = vpop.f32.mrf.mxu0
        %1918 = vmatprep.mubr.f32.mxu0 0.0
        %1919 = vmatmul.mubr.f32.gmra.mxu0 %v1743
        %v1920 = vpop.f32.mrf.mxu0
        %v1921 = vadd.f32 0.0, %v1920
        %v1922 = vpop.f32.mrf.mxu0
        %1923 = vmatprep.mubr.f32.mxu0 0.0
        %1924 = vmatmul.mubr.f32.gmra.mxu0 %v1744
        %v1925 = vpop.f32.mrf.mxu0
        %v1926 = vadd.f32 0.0, %v1925
        %v1927 = vpop.f32.mrf.mxu0
        %1928 = vmatprep.mubr.f32.mxu0 0.0
        %1929 = vmatmul.mubr.f32.gmra.mxu0 %v1745
        %v1930 = vpop.f32.mrf.mxu0
        %v1931 = vadd.f32 0.0, %v1930
        %v1932 = vpop.f32.mrf.mxu0
        %1933 = vmatprep.mubr.f32.mxu0 0.0
        %1934 = vmatmul.mubr.f32.gmra.mxu0 %v1746
        %v1935 = vpop.f32.mrf.mxu0
        %v1936 = vadd.f32 0.0, %v1935
        %v1937 = vpop.f32.mrf.mxu0
        %1938 = vmatprep.mubr.f32.mxu0 0.0
        %1939 = vmatmul.mubr.f32.gmra.mxu0 %v1747
        %v1940 = vpop.f32.mrf.mxu0
        %v1941 = vadd.f32 0.0, %v1940
        %v1942 = vpop.f32.mrf.mxu0
        %1943 = vmatprep.mubr.f32.mxu0 0.0
        %1944 = vmatmul.mubr.f32.gmra.mxu0 %v1748
        %v1945 = vpop.f32.mrf.mxu0
        %v1946 = vadd.f32 0.0, %v1945
        %v1947 = vpop.f32.mrf.mxu0
        %1948 = vmatprep.mubr.f32.mxu0 0.0
        %1949 = vmatmul.mubr.f32.gmra.mxu0 %v1749
        %v1950 = vpop.f32.mrf.mxu0
        %v1951 = vadd.f32 0.0, %v1950
        %v1952 = vpop.f32.mrf.mxu0
        %1953 = vmatprep.mubr.f32.mxu0 0.0
        %1954 = vmatmul.mubr.f32.gmra.mxu0 %v1750
        %v1955 = vpop.f32.mrf.mxu0
        %v1956 = vadd.f32 0.0, %v1955
        %v1957 = vpop.f32.mrf.mxu0
        %1958 = vmatprep.mubr.f32.mxu0 0.0
        %1959 = vmatmul.mubr.f32.gmra.mxu0 %v1751
        %v1960 = vpop.f32.mrf.mxu0
        %v1961 = vadd.f32 0.0, %v1960
        %v1962 = vpop.f32.mrf.mxu0
        %1963 = vmatprep.mubr.f32.mxu0 0.0
        %1964 = vmatmul.mubr.f32.gmra.mxu0 %v1752
        %v1965 = vpop.f32.mrf.mxu0
        %v1966 = vadd.f32 0.0, %v1965
        %v1967 = vpop.f32.mrf.mxu0
        %1968 = vmatprep.mubr.f32.mxu0 0.0
        %1969 = vmatmul.mubr.f32.gmra.mxu0 %v1753
        %v1970 = vpop.f32.mrf.mxu0
        %v1971 = vadd.f32 0.0, %v1970
        %v1972 = vpop.f32.mrf.mxu0
        %1973 = vmatprep.mubr.f32.mxu0 0.0
        %1974 = vmatmul.mubr.f32.gmra.mxu0 %v1754
        %v1975 = vpop.f32.mrf.mxu0
        %v1976 = vadd.f32 0.0, %v1975
        %v1977 = vpop.f32.mrf.mxu0
        %1978 = vmatprep.mubr.f32.mxu0 0.0
        %1979 = vmatmul.mubr.f32.gmra.mxu0 %v1755
        %v1980 = vpop.f32.mrf.mxu0
        %v1981 = vadd.f32 0.0, %v1980
        %v1982 = vpop.f32.mrf.mxu0
        %1983 = vmatprep.mubr.f32.mxu0 0.0
        %1984 = vmatmul.mubr.f32.gmra.mxu0 %v1756
        %v1985 = vpop.f32.mrf.mxu0
        %v1986 = vadd.f32 0.0, %v1985
        %v1987 = vpop.f32.mrf.mxu0
        %1988 = vmatprep.mubr.f32.mxu0 0.0
        %1989 = vmatmul.mubr.f32.gmra.mxu0 %v1757
        %v1990 = vpop.f32.mrf.mxu0
        %v1991 = vadd.f32 0.0, %v1990
        %v1992 = vpop.f32.mrf.mxu0
        %1993 = vmatprep.mubr.f32.mxu0 0.0
        %1994 = vmatmul.mubr.f32.gmra.mxu0 %v1758
        %v1995 = vpop.f32.mrf.mxu0
        %v1996 = vadd.f32 0.0, %v1995
        %v1997 = vpop.f32.mrf.mxu0
        %1998 = vmatprep.mubr.f32.mxu0 0.0
        %1999 = vmatmul.mubr.f32.gmra.mxu0 %v1759
        %v2000 = vpop.f32.mrf.mxu0
        %v2001 = vadd.f32 0.0, %v2000
        %v2002 = vpop.f32.mrf.mxu0
        %2003 = vmatprep.mubr.f32.mxu0 0.0
        %2004 = vmatmul.mubr.f32.gmra.mxu0 %v1760
        %v2005 = vpop.f32.mrf.mxu0
        %v2006 = vadd.f32 0.0, %v2005
        %v2007 = vpop.f32.mrf.mxu0
        %2008 = vmatprep.mubr.f32.mxu0 0.0
        %2009 = vmatmul.mubr.f32.gmra.mxu0 %v1761
        %v2010 = vpop.f32.mrf.mxu0
        %v2011 = vadd.f32 0.0, %v2010
        %v2012 = vpop.f32.mrf.mxu0
        %2013 = vmatprep.mubr.f32.mxu0 0.0
        %2014 = vmatmul.mubr.f32.gmra.mxu0 %v1762
        %v2015 = vpop.f32.mrf.mxu0
        %v2016 = vadd.f32 0.0, %v2015
        %v2017 = vpop.f32.mrf.mxu0
        %2018 = vmatprep.mubr.f32.mxu0 0.0
        %2019 = vmatmul.mubr.f32.gmra.mxu0 %v1763
        %v2020 = vpop.f32.mrf.mxu0
        %v2021 = vadd.f32 0.0, %v2020
        %v2022 = vpop.f32.mrf.mxu0
        %2023 = vmatprep.mubr.f32.mxu0 0.0
        %2024 = vmatmul.mubr.f32.gmra.mxu0 %v1764
        %v2025 = vpop.f32.mrf.mxu0
        %v2026 = vadd.f32 0.0, %v2025
        %v2027 = vpop.f32.mrf.mxu0
        %2028 = vmatprep.mubr.f32.mxu0 0.0
        %2029 = vmatmul.mubr.f32.gmra.mxu0 %v1765
        %v2030 = vpop.f32.mrf.mxu0
        %v2031 = vadd.f32 0.0, %v2030
        %v2032 = vpop.f32.mrf.mxu0
        %2033 = vmatprep.mubr.f32.mxu0 0.0
        %2034 = vmatmul.mubr.f32.gmra.mxu0 %v1766
        %v2035 = vpop.f32.mrf.mxu0
        %v2036 = vadd.f32 0.0, %v2035
        %v2037 = vpop.f32.mrf.mxu0
        %2038 = vmatprep.mubr.f32.mxu0 0.0
        %2039 = vmatmul.mubr.f32.gmra.mxu0 %v1767
        %v2040 = vpop.f32.mrf.mxu0
        %v2041 = vadd.f32 0.0, %v2040
        %v2042 = vpop.f32.mrf.mxu0
        %2043 = vdwg.mxu0
        %v2044 = vadd.f32 %v1768, %v1886
        %v2045 = vadd.f32 %v1769, %v1891
        %v2046 = vadd.f32 %v1770, %v1896
        %v2047 = vadd.f32 %v1771, %v1901
        %v2048 = vadd.f32 %v1772, %v1906
        %v2049 = vadd.f32 %v1773, %v1911
        %v2050 = vadd.f32 %v1774, %v1916
        %v2051 = vadd.f32 %v1775, %v1921
        %v2052 = vadd.f32 %v1776, %v1926
        %v2053 = vadd.f32 %v1777, %v1931
        %v2054 = vadd.f32 %v1778, %v1936
        %v2055 = vadd.f32 %v1779, %v1941
        %v2056 = vadd.f32 %v1780, %v1946
        %v2057 = vadd.f32 %v1781, %v1951
        %v2058 = vadd.f32 %v1782, %v1956
        %v2059 = vadd.f32 %v1783, %v1961
        %v2060 = vadd.f32 %v1784, %v1966
        %v2061 = vadd.f32 %v1785, %v1971
        %v2062 = vadd.f32 %v1786, %v1976
        %v2063 = vadd.f32 %v1787, %v1981
        %v2064 = vadd.f32 %v1788, %v1986
        %v2065 = vadd.f32 %v1789, %v1991
        %v2066 = vadd.f32 %v1790, %v1996
        %v2067 = vadd.f32 %v1791, %v2001
        %v2068 = vadd.f32 %v1792, %v2006
        %v2069 = vadd.f32 %v1793, %v2011
        %v2070 = vadd.f32 %v1794, %v2016
        %v2071 = vadd.f32 %v1795, %v2021
        %v2072 = vadd.f32 %v1796, %v2026
        %v2073 = vadd.f32 %v1797, %v2031
        %v2074 = vadd.f32 %v1798, %v2036
        %v2075 = vadd.f32 %v1799, %v2041
        %2076 = vst [vmem:[#allocation2] sm:$0xff] %v2044
        %2077 = vst [vmem:[#allocation2 + $0x8] sm:$0xff] %v2045
        %2078 = vst [vmem:[#allocation2 + $0x10] sm:$0xff] %v2046
        %2079 = vst [vmem:[#allocation2 + $0x18] sm:$0xff] %v2047
        %2080 = vst [vmem:[#allocation2 + $0x20] sm:$0xff] %v2048
        %2081 = vst [vmem:[#allocation2 + $0x28] sm:$0xff] %v2049
        %2082 = vst [vmem:[#allocation2 + $0x30] sm:$0xff] %v2050
        %2083 = vst [vmem:[#allocation2 + $0x38] sm:$0xff] %v2051
        %2084 = vst [vmem:[#allocation2 + $0x40] sm:$0xff] %v2052
        %2085 = vst [vmem:[#allocation2 + $0x48] sm:$0xff] %v2053
        %2086 = vst [vmem:[#allocation2 + $0x50] sm:$0xff] %v2054
        %2087 = vst [vmem:[#allocation2 + $0x58] sm:$0xff] %v2055
        %2088 = vst [vmem:[#allocation2 + $0x60] sm:$0xff] %v2056
        %2089 = vst [vmem:[#allocation2 + $0x68] sm:$0xff] %v2057
        %2090 = vst [vmem:[#allocation2 + $0x70] sm:$0xff] %v2058
        %2091 = vst [vmem:[#allocation2 + $0x78] sm:$0xff] %v2059
        %2092 = vst [vmem:[#allocation2 + $0x80] sm:$0xff] %v2060
        %2093 = vst [vmem:[#allocation2 + $0x88] sm:$0xff] %v2061
        %2094 = vst [vmem:[#allocation2 + $0x90] sm:$0xff] %v2062
        %2095 = vst [vmem:[#allocation2 + $0x98] sm:$0xff] %v2063
        %2096 = vst [vmem:[#allocation2 + $0xa0] sm:$0xff] %v2064
        %2097 = vst [vmem:[#allocation2 + $0xa8] sm:$0xff] %v2065
        %2098 = vst [vmem:[#allocation2 + $0xb0] sm:$0xff] %v2066
        %2099 = vst [vmem:[#allocation2 + $0xb8] sm:$0xff] %v2067
        %2100 = vst [vmem:[#allocation2 + $0xc0] sm:$0xff] %v2068
        %2101 = vst [vmem:[#allocation2 + $0xc8] sm:$0xff] %v2069
        %2102 = vst [vmem:[#allocation2 + $0xd0] sm:$0xff] %v2070
        %2103 = vst [vmem:[#allocation2 + $0xd8] sm:$0xff] %v2071
        %2104 = vst [vmem:[#allocation2 + $0xe0] sm:$0xff] %v2072
        %2105 = vst [vmem:[#allocation2 + $0xe8] sm:$0xff] %v2073
        %2106 = vst [vmem:[#allocation2 + $0xf0] sm:$0xff] %v2074
        %2107 = vst [vmem:[#allocation2 + $0xf8] sm:$0xff] %v2075
        %v2108 = vld [vmem:[%s1363 + $0x2] sm:$0xff]
        %v2109 = vld [vmem:[%s1363 + $0xa] sm:$0xff]
        %v2110 = vld [vmem:[%s1363 + $0x1a] sm:$0xff]
        %v2111 = vld [vmem:[%s1363 + $0x22] sm:$0xff]
        %v2112 = vld [vmem:[%s1363 + $0x32] sm:$0xff]
        %v2113 = vld [vmem:[%s1363 + $0x3a] sm:$0xff]
        %v2114 = vld [vmem:[%s1363 + $0x4a] sm:$0xff]
        %v2115 = vld [vmem:[%s1363 + $0x52] sm:$0xff]
        %v2116 = vld [vmem:[%s1363 + $0x62] sm:$0xff]
        %v2117 = vld [vmem:[%s1363 + $0x6a] sm:$0xff]
        %v2118 = vld [vmem:[%s1363 + $0x7a] sm:$0xff]
        %v2119 = vld [vmem:[%s1363 + $0x82] sm:$0xff]
        %v2120 = vld [vmem:[%s1363 + $0x92] sm:$0xff]
        %v2121 = vld [vmem:[%s1363 + $0x9a] sm:$0xff]
        %v2122 = vld [vmem:[%s1363 + $0xaa] sm:$0xff]
        %v2123 = vld [vmem:[%s1363 + $0xb2] sm:$0xff]
        %v2124 = vld [vmem:[%s1363 + $0xc2] sm:$0xff]
        %v2125 = vld [vmem:[%s1363 + $0xca] sm:$0xff]
        %v2126 = vld [vmem:[%s1363 + $0xda] sm:$0xff]
        %v2127 = vld [vmem:[%s1363 + $0xe2] sm:$0xff]
        %v2128 = vld [vmem:[%s1363 + $0xf2] sm:$0xff]
        %v2129 = vld [vmem:[%s1363 + $0xfa] sm:$0xff]
        %v2130 = vld [vmem:[%s1363 + $0x10a] sm:$0xff]
        %v2131 = vld [vmem:[%s1363 + $0x112] sm:$0xff]
        %v2132 = vld [vmem:[%s1363 + $0x122] sm:$0xff]
        %v2133 = vld [vmem:[%s1363 + $0x12a] sm:$0xff]
        %v2134 = vld [vmem:[%s1363 + $0x13a] sm:$0xff]
        %v2135 = vld [vmem:[%s1363 + $0x142] sm:$0xff]
        %v2136 = vld [vmem:[%s1363 + $0x152] sm:$0xff]
        %v2137 = vld [vmem:[%s1363 + $0x15a] sm:$0xff]
        %v2138 = vld [vmem:[%s1363 + $0x16a] sm:$0xff]
        %v2139 = vld [vmem:[%s1363 + $0x172] sm:$0xff]
        %v2140 = vld [vmem:[#allocation2] sm:$0xff]
        %v2141 = vld [vmem:[#allocation2 + $0x8] sm:$0xff]
        %v2142 = vld [vmem:[#allocation2 + $0x10] sm:$0xff]
        %v2143 = vld [vmem:[#allocation2 + $0x18] sm:$0xff]
        %v2144 = vld [vmem:[#allocation2 + $0x20] sm:$0xff]
        %v2145 = vld [vmem:[#allocation2 + $0x28] sm:$0xff]
        %v2146 = vld [vmem:[#allocation2 + $0x30] sm:$0xff]
        %v2147 = vld [vmem:[#allocation2 + $0x38] sm:$0xff]
        %v2148 = vld [vmem:[#allocation2 + $0x40] sm:$0xff]
        %v2149 = vld [vmem:[#allocation2 + $0x48] sm:$0xff]
        %v2150 = vld [vmem:[#allocation2 + $0x50] sm:$0xff]
        %v2151 = vld [vmem:[#allocation2 + $0x58] sm:$0xff]
        %v2152 = vld [vmem:[#allocation2 + $0x60] sm:$0xff]
        %v2153 = vld [vmem:[#allocation2 + $0x68] sm:$0xff]
        %v2154 = vld [vmem:[#allocation2 + $0x70] sm:$0xff]
        %v2155 = vld [vmem:[#allocation2 + $0x78] sm:$0xff]
        %v2156 = vld [vmem:[#allocation2 + $0x80] sm:$0xff]
        %v2157 = vld [vmem:[#allocation2 + $0x88] sm:$0xff]
        %v2158 = vld [vmem:[#allocation2 + $0x90] sm:$0xff]
        %v2159 = vld [vmem:[#allocation2 + $0x98] sm:$0xff]
        %v2160 = vld [vmem:[#allocation2 + $0xa0] sm:$0xff]
        %v2161 = vld [vmem:[#allocation2 + $0xa8] sm:$0xff]
        %v2162 = vld [vmem:[#allocation2 + $0xb0] sm:$0xff]
        %v2163 = vld [vmem:[#allocation2 + $0xb8] sm:$0xff]
        %v2164 = vld [vmem:[#allocation2 + $0xc0] sm:$0xff]
        %v2165 = vld [vmem:[#allocation2 + $0xc8] sm:$0xff]
        %v2166 = vld [vmem:[#allocation2 + $0xd0] sm:$0xff]
        %v2167 = vld [vmem:[#allocation2 + $0xd8] sm:$0xff]
        %v2168 = vld [vmem:[#allocation2 + $0xe0] sm:$0xff]
        %v2169 = vld [vmem:[#allocation2 + $0xe8] sm:$0xff]
        %v2170 = vld [vmem:[#allocation2 + $0xf0] sm:$0xff]
        %v2171 = vld [vmem:[#allocation2 + $0xf8] sm:$0xff]
        %s2172 = sadd.s32 %s311, 5
        %s2173 = smul.u32 %s2172, 128
        %s2174 = scalar_lea.vmem %s1, %s2173
        %v2175 = vld [vmem:[%s2174] sm:$0xff]
        %v2176 = vld [vmem:[%s2174 + $0x8] sm:$0xff]
        %v2177 = vld [vmem:[%s2174 + $0x10] sm:$0xff]
        %v2178 = vld [vmem:[%s2174 + $0x18] sm:$0xff]
        %v2179 = vld [vmem:[%s2174 + $0x20] sm:$0xff]
        %v2180 = vld [vmem:[%s2174 + $0x28] sm:$0xff]
        %v2181 = vld [vmem:[%s2174 + $0x30] sm:$0xff]
        %v2182 = vld [vmem:[%s2174 + $0x38] sm:$0xff]
        %v2183 = vld [vmem:[%s2174 + $0x40] sm:$0xff]
        %v2184 = vld [vmem:[%s2174 + $0x48] sm:$0xff]
        %v2185 = vld [vmem:[%s2174 + $0x50] sm:$0xff]
        %v2186 = vld [vmem:[%s2174 + $0x58] sm:$0xff]
        %v2187 = vld [vmem:[%s2174 + $0x60] sm:$0xff]
        %v2188 = vld [vmem:[%s2174 + $0x68] sm:$0xff]
        %v2189 = vld [vmem:[%s2174 + $0x70] sm:$0xff]
        %v2190 = vld [vmem:[%s2174 + $0x78] sm:$0xff]
        %2191 = vmatprep.subr.mxu0 0.0
        %2192 = vmatpush1.msra.mxu0 %v2190
        %2193 = vmatprep.subr.mxu0 0.0
        %2194 = vmatpush1.msra.mxu0 %v2189
        %2195 = vmatprep.subr.mxu0 0.0
        %2196 = vmatpush1.msra.mxu0 %v2188
        %2197 = vmatprep.subr.mxu0 0.0
        %2198 = vmatpush1.msra.mxu0 %v2187
        %2199 = vmatprep.subr.mxu0 0.0
        %2200 = vmatpush1.msra.mxu0 %v2186
        %2201 = vmatprep.subr.mxu0 0.0
        %2202 = vmatpush1.msra.mxu0 %v2185
        %2203 = vmatprep.subr.mxu0 0.0
        %2204 = vmatpush1.msra.mxu0 %v2184
        %2205 = vmatprep.subr.mxu0 0.0
        %2206 = vmatpush1.msra.mxu0 %v2183
        %2207 = vmatprep.subr.mxu0 0.0
        %2208 = vmatpush1.msra.mxu0 %v2182
        %2209 = vmatprep.subr.mxu0 0.0
        %2210 = vmatpush1.msra.mxu0 %v2181
        %2211 = vmatprep.subr.mxu0 0.0
        %2212 = vmatpush1.msra.mxu0 %v2180
        %2213 = vmatprep.subr.mxu0 0.0
        %2214 = vmatpush1.msra.mxu0 %v2179
        %2215 = vmatprep.subr.mxu0 0.0
        %2216 = vmatpush1.msra.mxu0 %v2178
        %2217 = vmatprep.subr.mxu0 0.0
        %2218 = vmatpush1.msra.mxu0 %v2177
        %2219 = vmatprep.subr.mxu0 0.0
        %2220 = vmatpush1.msra.mxu0 %v2176
        %2221 = vmatprep.subr.mxu0 0.0
        %2222 = vmatpush1.msra.mxu0 %v2175
        %2223 = vmatprep.subr.mxu0 0.0
        %2224 = vmatpush2.msra.mxu0 0.0
        %2225 = vmatprep.subr.mxu0 0.0
        %2226 = vmatpush2.msra.mxu0 0.0
        %2227 = vmatprep.subr.mxu0 0.0
        %2228 = vmatpush2.msra.mxu0 0.0
        %2229 = vmatprep.subr.mxu0 0.0
        %2230 = vmatpush2.msra.mxu0 0.0
        %2231 = vmatprep.subr.mxu0 0.0
        %2232 = vmatpush2.msra.mxu0 0.0
        %2233 = vmatprep.subr.mxu0 0.0
        %2234 = vmatpush2.msra.mxu0 0.0
        %2235 = vmatprep.subr.mxu0 0.0
        %2236 = vmatpush2.msra.mxu0 0.0
        %2237 = vmatprep.subr.mxu0 0.0
        %2238 = vmatpush2.msra.mxu0 0.0
        %2239 = vmatprep.subr.mxu0 0.0
        %2240 = vmatpush2.msra.mxu0 0.0
        %2241 = vmatprep.subr.mxu0 0.0
        %2242 = vmatpush2.msra.mxu0 0.0
        %2243 = vmatprep.subr.mxu0 0.0
        %2244 = vmatpush2.msra.mxu0 0.0
        %2245 = vmatprep.subr.mxu0 0.0
        %2246 = vmatpush2.msra.mxu0 0.0
        %2247 = vmatprep.subr.mxu0 0.0
        %2248 = vmatpush2.msra.mxu0 0.0
        %2249 = vmatprep.subr.mxu0 0.0
        %2250 = vmatpush2.msra.mxu0 0.0
        %2251 = vmatprep.subr.mxu0 0.0
        %2252 = vmatpush2.msra.mxu0 0.0
        %2253 = vmatprep.subr.mxu0 0.0
        %2254 = vmatpush2.msra.mxu0 0.0
        %2255 = vmatprep.mubr.f32.mxu0 0.0
        %2256 = vmatmul.mubr.f32.gmra.mxu0 %v2108
        %v2257 = vpop.f32.mrf.mxu0
        %v2258 = vadd.f32 0.0, %v2257
        %v2259 = vpop.f32.mrf.mxu0
        %2260 = vmatprep.mubr.f32.mxu0 0.0
        %2261 = vmatmul.mubr.f32.gmra.mxu0 %v2109
        %v2262 = vpop.f32.mrf.mxu0
        %v2263 = vadd.f32 0.0, %v2262
        %v2264 = vpop.f32.mrf.mxu0
        %2265 = vmatprep.mubr.f32.mxu0 0.0
        %2266 = vmatmul.mubr.f32.gmra.mxu0 %v2110
        %v2267 = vpop.f32.mrf.mxu0
        %v2268 = vadd.f32 0.0, %v2267
        %v2269 = vpop.f32.mrf.mxu0
        %2270 = vmatprep.mubr.f32.mxu0 0.0
        %2271 = vmatmul.mubr.f32.gmra.mxu0 %v2111
        %v2272 = vpop.f32.mrf.mxu0
        %v2273 = vadd.f32 0.0, %v2272
        %v2274 = vpop.f32.mrf.mxu0
        %2275 = vmatprep.mubr.f32.mxu0 0.0
        %2276 = vmatmul.mubr.f32.gmra.mxu0 %v2112
        %v2277 = vpop.f32.mrf.mxu0
        %v2278 = vadd.f32 0.0, %v2277
        %v2279 = vpop.f32.mrf.mxu0
        %2280 = vmatprep.mubr.f32.mxu0 0.0
        %2281 = vmatmul.mubr.f32.gmra.mxu0 %v2113
        %v2282 = vpop.f32.mrf.mxu0
        %v2283 = vadd.f32 0.0, %v2282
        %v2284 = vpop.f32.mrf.mxu0
        %2285 = vmatprep.mubr.f32.mxu0 0.0
        %2286 = vmatmul.mubr.f32.gmra.mxu0 %v2114
        %v2287 = vpop.f32.mrf.mxu0
        %v2288 = vadd.f32 0.0, %v2287
        %v2289 = vpop.f32.mrf.mxu0
        %2290 = vmatprep.mubr.f32.mxu0 0.0
        %2291 = vmatmul.mubr.f32.gmra.mxu0 %v2115
        %v2292 = vpop.f32.mrf.mxu0
        %v2293 = vadd.f32 0.0, %v2292
        %v2294 = vpop.f32.mrf.mxu0
        %2295 = vmatprep.mubr.f32.mxu0 0.0
        %2296 = vmatmul.mubr.f32.gmra.mxu0 %v2116
        %v2297 = vpop.f32.mrf.mxu0
        %v2298 = vadd.f32 0.0, %v2297
        %v2299 = vpop.f32.mrf.mxu0
        %2300 = vmatprep.mubr.f32.mxu0 0.0
        %2301 = vmatmul.mubr.f32.gmra.mxu0 %v2117
        %v2302 = vpop.f32.mrf.mxu0
        %v2303 = vadd.f32 0.0, %v2302
        %v2304 = vpop.f32.mrf.mxu0
        %2305 = vmatprep.mubr.f32.mxu0 0.0
        %2306 = vmatmul.mubr.f32.gmra.mxu0 %v2118
        %v2307 = vpop.f32.mrf.mxu0
        %v2308 = vadd.f32 0.0, %v2307
        %v2309 = vpop.f32.mrf.mxu0
        %2310 = vmatprep.mubr.f32.mxu0 0.0
        %2311 = vmatmul.mubr.f32.gmra.mxu0 %v2119
        %v2312 = vpop.f32.mrf.mxu0
        %v2313 = vadd.f32 0.0, %v2312
        %v2314 = vpop.f32.mrf.mxu0
        %2315 = vmatprep.mubr.f32.mxu0 0.0
        %2316 = vmatmul.mubr.f32.gmra.mxu0 %v2120
        %v2317 = vpop.f32.mrf.mxu0
        %v2318 = vadd.f32 0.0, %v2317
        %v2319 = vpop.f32.mrf.mxu0
        %2320 = vmatprep.mubr.f32.mxu0 0.0
        %2321 = vmatmul.mubr.f32.gmra.mxu0 %v2121
        %v2322 = vpop.f32.mrf.mxu0
        %v2323 = vadd.f32 0.0, %v2322
        %v2324 = vpop.f32.mrf.mxu0
        %2325 = vmatprep.mubr.f32.mxu0 0.0
        %2326 = vmatmul.mubr.f32.gmra.mxu0 %v2122
        %v2327 = vpop.f32.mrf.mxu0
        %v2328 = vadd.f32 0.0, %v2327
        %v2329 = vpop.f32.mrf.mxu0
        %2330 = vmatprep.mubr.f32.mxu0 0.0
        %2331 = vmatmul.mubr.f32.gmra.mxu0 %v2123
        %v2332 = vpop.f32.mrf.mxu0
        %v2333 = vadd.f32 0.0, %v2332
        %v2334 = vpop.f32.mrf.mxu0
        %2335 = vmatprep.mubr.f32.mxu0 0.0
        %2336 = vmatmul.mubr.f32.gmra.mxu0 %v2124
        %v2337 = vpop.f32.mrf.mxu0
        %v2338 = vadd.f32 0.0, %v2337
        %v2339 = vpop.f32.mrf.mxu0
        %2340 = vmatprep.mubr.f32.mxu0 0.0
        %2341 = vmatmul.mubr.f32.gmra.mxu0 %v2125
        %v2342 = vpop.f32.mrf.mxu0
        %v2343 = vadd.f32 0.0, %v2342
        %v2344 = vpop.f32.mrf.mxu0
        %2345 = vmatprep.mubr.f32.mxu0 0.0
        %2346 = vmatmul.mubr.f32.gmra.mxu0 %v2126
        %v2347 = vpop.f32.mrf.mxu0
        %v2348 = vadd.f32 0.0, %v2347
        %v2349 = vpop.f32.mrf.mxu0
        %2350 = vmatprep.mubr.f32.mxu0 0.0
        %2351 = vmatmul.mubr.f32.gmra.mxu0 %v2127
        %v2352 = vpop.f32.mrf.mxu0
        %v2353 = vadd.f32 0.0, %v2352
        %v2354 = vpop.f32.mrf.mxu0
        %2355 = vmatprep.mubr.f32.mxu0 0.0
        %2356 = vmatmul.mubr.f32.gmra.mxu0 %v2128
        %v2357 = vpop.f32.mrf.mxu0
        %v2358 = vadd.f32 0.0, %v2357
        %v2359 = vpop.f32.mrf.mxu0
        %2360 = vmatprep.mubr.f32.mxu0 0.0
        %2361 = vmatmul.mubr.f32.gmra.mxu0 %v2129
        %v2362 = vpop.f32.mrf.mxu0
        %v2363 = vadd.f32 0.0, %v2362
        %v2364 = vpop.f32.mrf.mxu0
        %2365 = vmatprep.mubr.f32.mxu0 0.0
        %2366 = vmatmul.mubr.f32.gmra.mxu0 %v2130
        %v2367 = vpop.f32.mrf.mxu0
        %v2368 = vadd.f32 0.0, %v2367
        %v2369 = vpop.f32.mrf.mxu0
        %2370 = vmatprep.mubr.f32.mxu0 0.0
        %2371 = vmatmul.mubr.f32.gmra.mxu0 %v2131
        %v2372 = vpop.f32.mrf.mxu0
        %v2373 = vadd.f32 0.0, %v2372
        %v2374 = vpop.f32.mrf.mxu0
        %2375 = vmatprep.mubr.f32.mxu0 0.0
        %2376 = vmatmul.mubr.f32.gmra.mxu0 %v2132
        %v2377 = vpop.f32.mrf.mxu0
        %v2378 = vadd.f32 0.0, %v2377
        %v2379 = vpop.f32.mrf.mxu0
        %2380 = vmatprep.mubr.f32.mxu0 0.0
        %2381 = vmatmul.mubr.f32.gmra.mxu0 %v2133
        %v2382 = vpop.f32.mrf.mxu0
        %v2383 = vadd.f32 0.0, %v2382
        %v2384 = vpop.f32.mrf.mxu0
        %2385 = vmatprep.mubr.f32.mxu0 0.0
        %2386 = vmatmul.mubr.f32.gmra.mxu0 %v2134
        %v2387 = vpop.f32.mrf.mxu0
        %v2388 = vadd.f32 0.0, %v2387
        %v2389 = vpop.f32.mrf.mxu0
        %2390 = vmatprep.mubr.f32.mxu0 0.0
        %2391 = vmatmul.mubr.f32.gmra.mxu0 %v2135
        %v2392 = vpop.f32.mrf.mxu0
        %v2393 = vadd.f32 0.0, %v2392
        %v2394 = vpop.f32.mrf.mxu0
        %2395 = vmatprep.mubr.f32.mxu0 0.0
        %2396 = vmatmul.mubr.f32.gmra.mxu0 %v2136
        %v2397 = vpop.f32.mrf.mxu0
        %v2398 = vadd.f32 0.0, %v2397
        %v2399 = vpop.f32.mrf.mxu0
        %2400 = vmatprep.mubr.f32.mxu0 0.0
        %2401 = vmatmul.mubr.f32.gmra.mxu0 %v2137
        %v2402 = vpop.f32.mrf.mxu0
        %v2403 = vadd.f32 0.0, %v2402
        %v2404 = vpop.f32.mrf.mxu0
        %2405 = vmatprep.mubr.f32.mxu0 0.0
        %2406 = vmatmul.mubr.f32.gmra.mxu0 %v2138
        %v2407 = vpop.f32.mrf.mxu0
        %v2408 = vadd.f32 0.0, %v2407
        %v2409 = vpop.f32.mrf.mxu0
        %2410 = vmatprep.mubr.f32.mxu0 0.0
        %2411 = vmatmul.mubr.f32.gmra.mxu0 %v2139
        %v2412 = vpop.f32.mrf.mxu0
        %v2413 = vadd.f32 0.0, %v2412
        %v2414 = vpop.f32.mrf.mxu0
        %2415 = vdwg.mxu0
        %v2416 = vadd.f32 %v2140, %v2258
        %v2417 = vadd.f32 %v2141, %v2263
        %v2418 = vadd.f32 %v2142, %v2268
        %v2419 = vadd.f32 %v2143, %v2273
        %v2420 = vadd.f32 %v2144, %v2278
        %v2421 = vadd.f32 %v2145, %v2283
        %v2422 = vadd.f32 %v2146, %v2288
        %v2423 = vadd.f32 %v2147, %v2293
        %v2424 = vadd.f32 %v2148, %v2298
        %v2425 = vadd.f32 %v2149, %v2303
        %v2426 = vadd.f32 %v2150, %v2308
        %v2427 = vadd.f32 %v2151, %v2313
        %v2428 = vadd.f32 %v2152, %v2318
        %v2429 = vadd.f32 %v2153, %v2323
        %v2430 = vadd.f32 %v2154, %v2328
        %v2431 = vadd.f32 %v2155, %v2333
        %v2432 = vadd.f32 %v2156, %v2338
        %v2433 = vadd.f32 %v2157, %v2343
        %v2434 = vadd.f32 %v2158, %v2348
        %v2435 = vadd.f32 %v2159, %v2353
        %v2436 = vadd.f32 %v2160, %v2358
        %v2437 = vadd.f32 %v2161, %v2363
        %v2438 = vadd.f32 %v2162, %v2368
        %v2439 = vadd.f32 %v2163, %v2373
        %v2440 = vadd.f32 %v2164, %v2378
        %v2441 = vadd.f32 %v2165, %v2383
        %v2442 = vadd.f32 %v2166, %v2388
        %v2443 = vadd.f32 %v2167, %v2393
        %v2444 = vadd.f32 %v2168, %v2398
        %v2445 = vadd.f32 %v2169, %v2403
        %v2446 = vadd.f32 %v2170, %v2408
        %v2447 = vadd.f32 %v2171, %v2413
        %2448 = vst [vmem:[#allocation2] sm:$0xff] %v2416
        %2449 = vst [vmem:[#allocation2 + $0x8] sm:$0xff] %v2417
        %2450 = vst [vmem:[#allocation2 + $0x10] sm:$0xff] %v2418
        %2451 = vst [vmem:[#allocation2 + $0x18] sm:$0xff] %v2419
        %2452 = vst [vmem:[#allocation2 + $0x20] sm:$0xff] %v2420
        %2453 = vst [vmem:[#allocation2 + $0x28] sm:$0xff] %v2421
        %2454 = vst [vmem:[#allocation2 + $0x30] sm:$0xff] %v2422
        %2455 = vst [vmem:[#allocation2 + $0x38] sm:$0xff] %v2423
        %2456 = vst [vmem:[#allocation2 + $0x40] sm:$0xff] %v2424
        %2457 = vst [vmem:[#allocation2 + $0x48] sm:$0xff] %v2425
        %2458 = vst [vmem:[#allocation2 + $0x50] sm:$0xff] %v2426
        %2459 = vst [vmem:[#allocation2 + $0x58] sm:$0xff] %v2427
        %2460 = vst [vmem:[#allocation2 + $0x60] sm:$0xff] %v2428
        %2461 = vst [vmem:[#allocation2 + $0x68] sm:$0xff] %v2429
        %2462 = vst [vmem:[#allocation2 + $0x70] sm:$0xff] %v2430
        %2463 = vst [vmem:[#allocation2 + $0x78] sm:$0xff] %v2431
        %2464 = vst [vmem:[#allocation2 + $0x80] sm:$0xff] %v2432
        %2465 = vst [vmem:[#allocation2 + $0x88] sm:$0xff] %v2433
        %2466 = vst [vmem:[#allocation2 + $0x90] sm:$0xff] %v2434
        %2467 = vst [vmem:[#allocation2 + $0x98] sm:$0xff] %v2435
        %2468 = vst [vmem:[#allocation2 + $0xa0] sm:$0xff] %v2436
        %2469 = vst [vmem:[#allocation2 + $0xa8] sm:$0xff] %v2437
        %2470 = vst [vmem:[#allocation2 + $0xb0] sm:$0xff] %v2438
        %2471 = vst [vmem:[#allocation2 + $0xb8] sm:$0xff] %v2439
        %2472 = vst [vmem:[#allocation2 + $0xc0] sm:$0xff] %v2440
        %2473 = vst [vmem:[#allocation2 + $0xc8] sm:$0xff] %v2441
        %2474 = vst [vmem:[#allocation2 + $0xd0] sm:$0xff] %v2442
        %2475 = vst [vmem:[#allocation2 + $0xd8] sm:$0xff] %v2443
        %2476 = vst [vmem:[#allocation2 + $0xe0] sm:$0xff] %v2444
        %2477 = vst [vmem:[#allocation2 + $0xe8] sm:$0xff] %v2445
        %2478 = vst [vmem:[#allocation2 + $0xf0] sm:$0xff] %v2446
        %2479 = vst [vmem:[#allocation2 + $0xf8] sm:$0xff] %v2447
        %s2480 = scalar_lea.vmem %s209, 48
        %v2481 = vld [vmem:[%s2480] sm:$0xff]
        %v2482 = vld [vmem:[%s2480 + $0x8] sm:$0xff]
        %v2483 = vld [vmem:[%s2480 + $0x18] sm:$0xff]
        %v2484 = vld [vmem:[%s2480 + $0x20] sm:$0xff]
        %v2485 = vld [vmem:[%s2480 + $0x30] sm:$0xff]
        %v2486 = vld [vmem:[%s2480 + $0x38] sm:$0xff]
        %v2487 = vld [vmem:[%s2480 + $0x48] sm:$0xff]
        %v2488 = vld [vmem:[%s2480 + $0x50] sm:$0xff]
        %v2489 = vld [vmem:[%s2480 + $0x60] sm:$0xff]
        %v2490 = vld [vmem:[%s2480 + $0x68] sm:$0xff]
        %v2491 = vld [vmem:[%s2480 + $0x78] sm:$0xff]
        %v2492 = vld [vmem:[%s2480 + $0x80] sm:$0xff]
        %v2493 = vld [vmem:[%s2480 + $0x90] sm:$0xff]
        %v2494 = vld [vmem:[%s2480 + $0x98] sm:$0xff]
        %v2495 = vld [vmem:[%s2480 + $0xa8] sm:$0xff]
        %v2496 = vld [vmem:[%s2480 + $0xb0] sm:$0xff]
        %v2497 = vld [vmem:[%s2480 + $0xc0] sm:$0xff]
        %v2498 = vld [vmem:[%s2480 + $0xc8] sm:$0xff]
        %v2499 = vld [vmem:[%s2480 + $0xd8] sm:$0xff]
        %v2500 = vld [vmem:[%s2480 + $0xe0] sm:$0xff]
        %v2501 = vld [vmem:[%s2480 + $0xf0] sm:$0xff]
        %v2502 = vld [vmem:[%s2480 + $0xf8] sm:$0xff]
        %v2503 = vld [vmem:[%s2480 + $0x108] sm:$0xff]
        %v2504 = vld [vmem:[%s2480 + $0x110] sm:$0xff]
        %v2505 = vld [vmem:[%s2480 + $0x120] sm:$0xff]
        %v2506 = vld [vmem:[%s2480 + $0x128] sm:$0xff]
        %v2507 = vld [vmem:[%s2480 + $0x138] sm:$0xff]
        %v2508 = vld [vmem:[%s2480 + $0x140] sm:$0xff]
        %v2509 = vld [vmem:[%s2480 + $0x150] sm:$0xff]
        %v2510 = vld [vmem:[%s2480 + $0x158] sm:$0xff]
        %v2511 = vld [vmem:[%s2480 + $0x168] sm:$0xff]
        %v2512 = vld [vmem:[%s2480 + $0x170] sm:$0xff]
        %v2513 = vld [vmem:[#allocation2] sm:$0xff]
        %v2514 = vld [vmem:[#allocation2 + $0x8] sm:$0xff]
        %v2515 = vld [vmem:[#allocation2 + $0x10] sm:$0xff]
        %v2516 = vld [vmem:[#allocation2 + $0x18] sm:$0xff]
        %v2517 = vld [vmem:[#allocation2 + $0x20] sm:$0xff]
        %v2518 = vld [vmem:[#allocation2 + $0x28] sm:$0xff]
        %v2519 = vld [vmem:[#allocation2 + $0x30] sm:$0xff]
        %v2520 = vld [vmem:[#allocation2 + $0x38] sm:$0xff]
        %v2521 = vld [vmem:[#allocation2 + $0x40] sm:$0xff]
        %v2522 = vld [vmem:[#allocation2 + $0x48] sm:$0xff]
        %v2523 = vld [vmem:[#allocation2 + $0x50] sm:$0xff]
        %v2524 = vld [vmem:[#allocation2 + $0x58] sm:$0xff]
        %v2525 = vld [vmem:[#allocation2 + $0x60] sm:$0xff]
        %v2526 = vld [vmem:[#allocation2 + $0x68] sm:$0xff]
        %v2527 = vld [vmem:[#allocation2 + $0x70] sm:$0xff]
        %v2528 = vld [vmem:[#allocation2 + $0x78] sm:$0xff]
        %v2529 = vld [vmem:[#allocation2 + $0x80] sm:$0xff]
        %v2530 = vld [vmem:[#allocation2 + $0x88] sm:$0xff]
        %v2531 = vld [vmem:[#allocation2 + $0x90] sm:$0xff]
        %v2532 = vld [vmem:[#allocation2 + $0x98] sm:$0xff]
        %v2533 = vld [vmem:[#allocation2 + $0xa0] sm:$0xff]
        %v2534 = vld [vmem:[#allocation2 + $0xa8] sm:$0xff]
        %v2535 = vld [vmem:[#allocation2 + $0xb0] sm:$0xff]
        %v2536 = vld [vmem:[#allocation2 + $0xb8] sm:$0xff]
        %v2537 = vld [vmem:[#allocation2 + $0xc0] sm:$0xff]
        %v2538 = vld [vmem:[#allocation2 + $0xc8] sm:$0xff]
        %v2539 = vld [vmem:[#allocation2 + $0xd0] sm:$0xff]
        %v2540 = vld [vmem:[#allocation2 + $0xd8] sm:$0xff]
        %v2541 = vld [vmem:[#allocation2 + $0xe0] sm:$0xff]
        %v2542 = vld [vmem:[#allocation2 + $0xe8] sm:$0xff]
        %v2543 = vld [vmem:[#allocation2 + $0xf0] sm:$0xff]
        %v2544 = vld [vmem:[#allocation2 + $0xf8] sm:$0xff]
        %s2545 = sadd.s32 %s311, 6
        %s2546 = smul.u32 %s2545, 128
        %s2547 = scalar_lea.vmem %s1, %s2546
        %v2548 = vld [vmem:[%s2547] sm:$0xff]
        %v2549 = vld [vmem:[%s2547 + $0x8] sm:$0xff]
        %v2550 = vld [vmem:[%s2547 + $0x10] sm:$0xff]
        %v2551 = vld [vmem:[%s2547 + $0x18] sm:$0xff]
        %v2552 = vld [vmem:[%s2547 + $0x20] sm:$0xff]
        %v2553 = vld [vmem:[%s2547 + $0x28] sm:$0xff]
        %v2554 = vld [vmem:[%s2547 + $0x30] sm:$0xff]
        %v2555 = vld [vmem:[%s2547 + $0x38] sm:$0xff]
        %v2556 = vld [vmem:[%s2547 + $0x40] sm:$0xff]
        %v2557 = vld [vmem:[%s2547 + $0x48] sm:$0xff]
        %v2558 = vld [vmem:[%s2547 + $0x50] sm:$0xff]
        %v2559 = vld [vmem:[%s2547 + $0x58] sm:$0xff]
        %v2560 = vld [vmem:[%s2547 + $0x60] sm:$0xff]
        %v2561 = vld [vmem:[%s2547 + $0x68] sm:$0xff]
        %v2562 = vld [vmem:[%s2547 + $0x70] sm:$0xff]
        %v2563 = vld [vmem:[%s2547 + $0x78] sm:$0xff]
        %2564 = vmatprep.subr.mxu0 0.0
        %2565 = vmatpush1.msra.mxu0 %v2563
        %2566 = vmatprep.subr.mxu0 0.0
        %2567 = vmatpush1.msra.mxu0 %v2562
        %2568 = vmatprep.subr.mxu0 0.0
        %2569 = vmatpush1.msra.mxu0 %v2561
        %2570 = vmatprep.subr.mxu0 0.0
        %2571 = vmatpush1.msra.mxu0 %v2560
        %2572 = vmatprep.subr.mxu0 0.0
        %2573 = vmatpush1.msra.mxu0 %v2559
        %2574 = vmatprep.subr.mxu0 0.0
        %2575 = vmatpush1.msra.mxu0 %v2558
        %2576 = vmatprep.subr.mxu0 0.0
        %2577 = vmatpush1.msra.mxu0 %v2557
        %2578 = vmatprep.subr.mxu0 0.0
        %2579 = vmatpush1.msra.mxu0 %v2556
        %2580 = vmatprep.subr.mxu0 0.0
        %2581 = vmatpush1.msra.mxu0 %v2555
        %2582 = vmatprep.subr.mxu0 0.0
        %2583 = vmatpush1.msra.mxu0 %v2554
        %2584 = vmatprep.subr.mxu0 0.0
        %2585 = vmatpush1.msra.mxu0 %v2553
        %2586 = vmatprep.subr.mxu0 0.0
        %2587 = vmatpush1.msra.mxu0 %v2552
        %2588 = vmatprep.subr.mxu0 0.0
        %2589 = vmatpush1.msra.mxu0 %v2551
        %2590 = vmatprep.subr.mxu0 0.0
        %2591 = vmatpush1.msra.mxu0 %v2550
        %2592 = vmatprep.subr.mxu0 0.0
        %2593 = vmatpush1.msra.mxu0 %v2549
        %2594 = vmatprep.subr.mxu0 0.0
        %2595 = vmatpush1.msra.mxu0 %v2548
        %2596 = vmatprep.subr.mxu0 0.0
        %2597 = vmatpush2.msra.mxu0 0.0
        %2598 = vmatprep.subr.mxu0 0.0
        %2599 = vmatpush2.msra.mxu0 0.0
        %2600 = vmatprep.subr.mxu0 0.0
        %2601 = vmatpush2.msra.mxu0 0.0
        %2602 = vmatprep.subr.mxu0 0.0
        %2603 = vmatpush2.msra.mxu0 0.0
        %2604 = vmatprep.subr.mxu0 0.0
        %2605 = vmatpush2.msra.mxu0 0.0
        %2606 = vmatprep.subr.mxu0 0.0
        %2607 = vmatpush2.msra.mxu0 0.0
        %2608 = vmatprep.subr.mxu0 0.0
        %2609 = vmatpush2.msra.mxu0 0.0
        %2610 = vmatprep.subr.mxu0 0.0
        %2611 = vmatpush2.msra.mxu0 0.0
        %2612 = vmatprep.subr.mxu0 0.0
        %2613 = vmatpush2.msra.mxu0 0.0
        %2614 = vmatprep.subr.mxu0 0.0
        %2615 = vmatpush2.msra.mxu0 0.0
        %2616 = vmatprep.subr.mxu0 0.0
        %2617 = vmatpush2.msra.mxu0 0.0
        %2618 = vmatprep.subr.mxu0 0.0
        %2619 = vmatpush2.msra.mxu0 0.0
        %2620 = vmatprep.subr.mxu0 0.0
        %2621 = vmatpush2.msra.mxu0 0.0
        %2622 = vmatprep.subr.mxu0 0.0
        %2623 = vmatpush2.msra.mxu0 0.0
        %2624 = vmatprep.subr.mxu0 0.0
        %2625 = vmatpush2.msra.mxu0 0.0
        %2626 = vmatprep.subr.mxu0 0.0
        %2627 = vmatpush2.msra.mxu0 0.0
        %2628 = vmatprep.mubr.f32.mxu0 0.0
        %2629 = vmatmul.mubr.f32.gmra.mxu0 %v2481
        %v2630 = vpop.f32.mrf.mxu0
        %v2631 = vadd.f32 0.0, %v2630
        %v2632 = vpop.f32.mrf.mxu0
        %2633 = vmatprep.mubr.f32.mxu0 0.0
        %2634 = vmatmul.mubr.f32.gmra.mxu0 %v2482
        %v2635 = vpop.f32.mrf.mxu0
        %v2636 = vadd.f32 0.0, %v2635
        %v2637 = vpop.f32.mrf.mxu0
        %2638 = vmatprep.mubr.f32.mxu0 0.0
        %2639 = vmatmul.mubr.f32.gmra.mxu0 %v2483
        %v2640 = vpop.f32.mrf.mxu0
        %v2641 = vadd.f32 0.0, %v2640
        %v2642 = vpop.f32.mrf.mxu0
        %2643 = vmatprep.mubr.f32.mxu0 0.0
        %2644 = vmatmul.mubr.f32.gmra.mxu0 %v2484
        %v2645 = vpop.f32.mrf.mxu0
        %v2646 = vadd.f32 0.0, %v2645
        %v2647 = vpop.f32.mrf.mxu0
        %2648 = vmatprep.mubr.f32.mxu0 0.0
        %2649 = vmatmul.mubr.f32.gmra.mxu0 %v2485
        %v2650 = vpop.f32.mrf.mxu0
        %v2651 = vadd.f32 0.0, %v2650
        %v2652 = vpop.f32.mrf.mxu0
        %2653 = vmatprep.mubr.f32.mxu0 0.0
        %2654 = vmatmul.mubr.f32.gmra.mxu0 %v2486
        %v2655 = vpop.f32.mrf.mxu0
        %v2656 = vadd.f32 0.0, %v2655
        %v2657 = vpop.f32.mrf.mxu0
        %2658 = vmatprep.mubr.f32.mxu0 0.0
        %2659 = vmatmul.mubr.f32.gmra.mxu0 %v2487
        %v2660 = vpop.f32.mrf.mxu0
        %v2661 = vadd.f32 0.0, %v2660
        %v2662 = vpop.f32.mrf.mxu0
        %2663 = vmatprep.mubr.f32.mxu0 0.0
        %2664 = vmatmul.mubr.f32.gmra.mxu0 %v2488
        %v2665 = vpop.f32.mrf.mxu0
        %v2666 = vadd.f32 0.0, %v2665
        %v2667 = vpop.f32.mrf.mxu0
        %2668 = vmatprep.mubr.f32.mxu0 0.0
        %2669 = vmatmul.mubr.f32.gmra.mxu0 %v2489
        %v2670 = vpop.f32.mrf.mxu0
        %v2671 = vadd.f32 0.0, %v2670
        %v2672 = vpop.f32.mrf.mxu0
        %2673 = vmatprep.mubr.f32.mxu0 0.0
        %2674 = vmatmul.mubr.f32.gmra.mxu0 %v2490
        %v2675 = vpop.f32.mrf.mxu0
        %v2676 = vadd.f32 0.0, %v2675
        %v2677 = vpop.f32.mrf.mxu0
        %2678 = vmatprep.mubr.f32.mxu0 0.0
        %2679 = vmatmul.mubr.f32.gmra.mxu0 %v2491
        %v2680 = vpop.f32.mrf.mxu0
        %v2681 = vadd.f32 0.0, %v2680
        %v2682 = vpop.f32.mrf.mxu0
        %2683 = vmatprep.mubr.f32.mxu0 0.0
        %2684 = vmatmul.mubr.f32.gmra.mxu0 %v2492
        %v2685 = vpop.f32.mrf.mxu0
        %v2686 = vadd.f32 0.0, %v2685
        %v2687 = vpop.f32.mrf.mxu0
        %2688 = vmatprep.mubr.f32.mxu0 0.0
        %2689 = vmatmul.mubr.f32.gmra.mxu0 %v2493
        %v2690 = vpop.f32.mrf.mxu0
        %v2691 = vadd.f32 0.0, %v2690
        %v2692 = vpop.f32.mrf.mxu0
        %2693 = vmatprep.mubr.f32.mxu0 0.0
        %2694 = vmatmul.mubr.f32.gmra.mxu0 %v2494
        %v2695 = vpop.f32.mrf.mxu0
        %v2696 = vadd.f32 0.0, %v2695
        %v2697 = vpop.f32.mrf.mxu0
        %2698 = vmatprep.mubr.f32.mxu0 0.0
        %2699 = vmatmul.mubr.f32.gmra.mxu0 %v2495
        %v2700 = vpop.f32.mrf.mxu0
        %v2701 = vadd.f32 0.0, %v2700
        %v2702 = vpop.f32.mrf.mxu0
        %2703 = vmatprep.mubr.f32.mxu0 0.0
        %2704 = vmatmul.mubr.f32.gmra.mxu0 %v2496
        %v2705 = vpop.f32.mrf.mxu0
        %v2706 = vadd.f32 0.0, %v2705
        %v2707 = vpop.f32.mrf.mxu0
        %2708 = vmatprep.mubr.f32.mxu0 0.0
        %2709 = vmatmul.mubr.f32.gmra.mxu0 %v2497
        %v2710 = vpop.f32.mrf.mxu0
        %v2711 = vadd.f32 0.0, %v2710
        %v2712 = vpop.f32.mrf.mxu0
        %2713 = vmatprep.mubr.f32.mxu0 0.0
        %2714 = vmatmul.mubr.f32.gmra.mxu0 %v2498
        %v2715 = vpop.f32.mrf.mxu0
        %v2716 = vadd.f32 0.0, %v2715
        %v2717 = vpop.f32.mrf.mxu0
        %2718 = vmatprep.mubr.f32.mxu0 0.0
        %2719 = vmatmul.mubr.f32.gmra.mxu0 %v2499
        %v2720 = vpop.f32.mrf.mxu0
        %v2721 = vadd.f32 0.0, %v2720
        %v2722 = vpop.f32.mrf.mxu0
        %2723 = vmatprep.mubr.f32.mxu0 0.0
        %2724 = vmatmul.mubr.f32.gmra.mxu0 %v2500
        %v2725 = vpop.f32.mrf.mxu0
        %v2726 = vadd.f32 0.0, %v2725
        %v2727 = vpop.f32.mrf.mxu0
        %2728 = vmatprep.mubr.f32.mxu0 0.0
        %2729 = vmatmul.mubr.f32.gmra.mxu0 %v2501
        %v2730 = vpop.f32.mrf.mxu0
        %v2731 = vadd.f32 0.0, %v2730
        %v2732 = vpop.f32.mrf.mxu0
        %2733 = vmatprep.mubr.f32.mxu0 0.0
        %2734 = vmatmul.mubr.f32.gmra.mxu0 %v2502
        %v2735 = vpop.f32.mrf.mxu0
        %v2736 = vadd.f32 0.0, %v2735
        %v2737 = vpop.f32.mrf.mxu0
        %2738 = vmatprep.mubr.f32.mxu0 0.0
        %2739 = vmatmul.mubr.f32.gmra.mxu0 %v2503
        %v2740 = vpop.f32.mrf.mxu0
        %v2741 = vadd.f32 0.0, %v2740
        %v2742 = vpop.f32.mrf.mxu0
        %2743 = vmatprep.mubr.f32.mxu0 0.0
        %2744 = vmatmul.mubr.f32.gmra.mxu0 %v2504
        %v2745 = vpop.f32.mrf.mxu0
        %v2746 = vadd.f32 0.0, %v2745
        %v2747 = vpop.f32.mrf.mxu0
        %2748 = vmatprep.mubr.f32.mxu0 0.0
        %2749 = vmatmul.mubr.f32.gmra.mxu0 %v2505
        %v2750 = vpop.f32.mrf.mxu0
        %v2751 = vadd.f32 0.0, %v2750
        %v2752 = vpop.f32.mrf.mxu0
        %2753 = vmatprep.mubr.f32.mxu0 0.0
        %2754 = vmatmul.mubr.f32.gmra.mxu0 %v2506
        %v2755 = vpop.f32.mrf.mxu0
        %v2756 = vadd.f32 0.0, %v2755
        %v2757 = vpop.f32.mrf.mxu0
        %2758 = vmatprep.mubr.f32.mxu0 0.0
        %2759 = vmatmul.mubr.f32.gmra.mxu0 %v2507
        %v2760 = vpop.f32.mrf.mxu0
        %v2761 = vadd.f32 0.0, %v2760
        %v2762 = vpop.f32.mrf.mxu0
        %2763 = vmatprep.mubr.f32.mxu0 0.0
        %2764 = vmatmul.mubr.f32.gmra.mxu0 %v2508
        %v2765 = vpop.f32.mrf.mxu0
        %v2766 = vadd.f32 0.0, %v2765
        %v2767 = vpop.f32.mrf.mxu0
        %2768 = vmatprep.mubr.f32.mxu0 0.0
        %2769 = vmatmul.mubr.f32.gmra.mxu0 %v2509
        %v2770 = vpop.f32.mrf.mxu0
        %v2771 = vadd.f32 0.0, %v2770
        %v2772 = vpop.f32.mrf.mxu0
        %2773 = vmatprep.mubr.f32.mxu0 0.0
        %2774 = vmatmul.mubr.f32.gmra.mxu0 %v2510
        %v2775 = vpop.f32.mrf.mxu0
        %v2776 = vadd.f32 0.0, %v2775
        %v2777 = vpop.f32.mrf.mxu0
        %2778 = vmatprep.mubr.f32.mxu0 0.0
        %2779 = vmatmul.mubr.f32.gmra.mxu0 %v2511
        %v2780 = vpop.f32.mrf.mxu0
        %v2781 = vadd.f32 0.0, %v2780
        %v2782 = vpop.f32.mrf.mxu0
        %2783 = vmatprep.mubr.f32.mxu0 0.0
        %2784 = vmatmul.mubr.f32.gmra.mxu0 %v2512
        %v2785 = vpop.f32.mrf.mxu0
        %v2786 = vadd.f32 0.0, %v2785
        %v2787 = vpop.f32.mrf.mxu0
        %2788 = vdwg.mxu0
        %v2789 = vadd.f32 %v2513, %v2631
        %v2790 = vadd.f32 %v2514, %v2636
        %v2791 = vadd.f32 %v2515, %v2641
        %v2792 = vadd.f32 %v2516, %v2646
        %v2793 = vadd.f32 %v2517, %v2651
        %v2794 = vadd.f32 %v2518, %v2656
        %v2795 = vadd.f32 %v2519, %v2661
        %v2796 = vadd.f32 %v2520, %v2666
        %v2797 = vadd.f32 %v2521, %v2671
        %v2798 = vadd.f32 %v2522, %v2676
        %v2799 = vadd.f32 %v2523, %v2681
        %v2800 = vadd.f32 %v2524, %v2686
        %v2801 = vadd.f32 %v2525, %v2691
        %v2802 = vadd.f32 %v2526, %v2696
        %v2803 = vadd.f32 %v2527, %v2701
        %v2804 = vadd.f32 %v2528, %v2706
        %v2805 = vadd.f32 %v2529, %v2711
        %v2806 = vadd.f32 %v2530, %v2716
        %v2807 = vadd.f32 %v2531, %v2721
        %v2808 = vadd.f32 %v2532, %v2726
        %v2809 = vadd.f32 %v2533, %v2731
        %v2810 = vadd.f32 %v2534, %v2736
        %v2811 = vadd.f32 %v2535, %v2741
        %v2812 = vadd.f32 %v2536, %v2746
        %v2813 = vadd.f32 %v2537, %v2751
        %v2814 = vadd.f32 %v2538, %v2756
        %v2815 = vadd.f32 %v2539, %v2761
        %v2816 = vadd.f32 %v2540, %v2766
        %v2817 = vadd.f32 %v2541, %v2771
        %v2818 = vadd.f32 %v2542, %v2776
        %v2819 = vadd.f32 %v2543, %v2781
        %v2820 = vadd.f32 %v2544, %v2786
        %2821 = vst [vmem:[#allocation2] sm:$0xff] %v2789
        %2822 = vst [vmem:[#allocation2 + $0x8] sm:$0xff] %v2790
        %2823 = vst [vmem:[#allocation2 + $0x10] sm:$0xff] %v2791
        %2824 = vst [vmem:[#allocation2 + $0x18] sm:$0xff] %v2792
        %2825 = vst [vmem:[#allocation2 + $0x20] sm:$0xff] %v2793
        %2826 = vst [vmem:[#allocation2 + $0x28] sm:$0xff] %v2794
        %2827 = vst [vmem:[#allocation2 + $0x30] sm:$0xff] %v2795
        %2828 = vst [vmem:[#allocation2 + $0x38] sm:$0xff] %v2796
        %2829 = vst [vmem:[#allocation2 + $0x40] sm:$0xff] %v2797
        %2830 = vst [vmem:[#allocation2 + $0x48] sm:$0xff] %v2798
        %2831 = vst [vmem:[#allocation2 + $0x50] sm:$0xff] %v2799
        %2832 = vst [vmem:[#allocation2 + $0x58] sm:$0xff] %v2800
        %2833 = vst [vmem:[#allocation2 + $0x60] sm:$0xff] %v2801
        %2834 = vst [vmem:[#allocation2 + $0x68] sm:$0xff] %v2802
        %2835 = vst [vmem:[#allocation2 + $0x70] sm:$0xff] %v2803
        %2836 = vst [vmem:[#allocation2 + $0x78] sm:$0xff] %v2804
        %2837 = vst [vmem:[#allocation2 + $0x80] sm:$0xff] %v2805
        %2838 = vst [vmem:[#allocation2 + $0x88] sm:$0xff] %v2806
        %2839 = vst [vmem:[#allocation2 + $0x90] sm:$0xff] %v2807
        %2840 = vst [vmem:[#allocation2 + $0x98] sm:$0xff] %v2808
        %2841 = vst [vmem:[#allocation2 + $0xa0] sm:$0xff] %v2809
        %2842 = vst [vmem:[#allocation2 + $0xa8] sm:$0xff] %v2810
        %2843 = vst [vmem:[#allocation2 + $0xb0] sm:$0xff] %v2811
        %2844 = vst [vmem:[#allocation2 + $0xb8] sm:$0xff] %v2812
        %2845 = vst [vmem:[#allocation2 + $0xc0] sm:$0xff] %v2813
        %2846 = vst [vmem:[#allocation2 + $0xc8] sm:$0xff] %v2814
        %2847 = vst [vmem:[#allocation2 + $0xd0] sm:$0xff] %v2815
        %2848 = vst [vmem:[#allocation2 + $0xd8] sm:$0xff] %v2816
        %2849 = vst [vmem:[#allocation2 + $0xe0] sm:$0xff] %v2817
        %2850 = vst [vmem:[#allocation2 + $0xe8] sm:$0xff] %v2818
        %2851 = vst [vmem:[#allocation2 + $0xf0] sm:$0xff] %v2819
        %2852 = vst [vmem:[#allocation2 + $0xf8] sm:$0xff] %v2820
        %v2853 = vld [vmem:[%s2480 + $0x1] sm:$0xff]
        %v2854 = vld [vmem:[%s2480 + $0x9] sm:$0xff]
        %v2855 = vld [vmem:[%s2480 + $0x19] sm:$0xff]
        %v2856 = vld [vmem:[%s2480 + $0x21] sm:$0xff]
        %v2857 = vld [vmem:[%s2480 + $0x31] sm:$0xff]
        %v2858 = vld [vmem:[%s2480 + $0x39] sm:$0xff]
        %v2859 = vld [vmem:[%s2480 + $0x49] sm:$0xff]
        %v2860 = vld [vmem:[%s2480 + $0x51] sm:$0xff]
        %v2861 = vld [vmem:[%s2480 + $0x61] sm:$0xff]
        %v2862 = vld [vmem:[%s2480 + $0x69] sm:$0xff]
        %v2863 = vld [vmem:[%s2480 + $0x79] sm:$0xff]
        %v2864 = vld [vmem:[%s2480 + $0x81] sm:$0xff]
        %v2865 = vld [vmem:[%s2480 + $0x91] sm:$0xff]
        %v2866 = vld [vmem:[%s2480 + $0x99] sm:$0xff]
        %v2867 = vld [vmem:[%s2480 + $0xa9] sm:$0xff]
        %v2868 = vld [vmem:[%s2480 + $0xb1] sm:$0xff]
        %v2869 = vld [vmem:[%s2480 + $0xc1] sm:$0xff]
        %v2870 = vld [vmem:[%s2480 + $0xc9] sm:$0xff]
        %v2871 = vld [vmem:[%s2480 + $0xd9] sm:$0xff]
        %v2872 = vld [vmem:[%s2480 + $0xe1] sm:$0xff]
        %v2873 = vld [vmem:[%s2480 + $0xf1] sm:$0xff]
        %v2874 = vld [vmem:[%s2480 + $0xf9] sm:$0xff]
        %v2875 = vld [vmem:[%s2480 + $0x109] sm:$0xff]
        %v2876 = vld [vmem:[%s2480 + $0x111] sm:$0xff]
        %v2877 = vld [vmem:[%s2480 + $0x121] sm:$0xff]
        %v2878 = vld [vmem:[%s2480 + $0x129] sm:$0xff]
        %v2879 = vld [vmem:[%s2480 + $0x139] sm:$0xff]
        %v2880 = vld [vmem:[%s2480 + $0x141] sm:$0xff]
        %v2881 = vld [vmem:[%s2480 + $0x151] sm:$0xff]
        %v2882 = vld [vmem:[%s2480 + $0x159] sm:$0xff]
        %v2883 = vld [vmem:[%s2480 + $0x169] sm:$0xff]
        %v2884 = vld [vmem:[%s2480 + $0x171] sm:$0xff]
        %v2885 = vld [vmem:[#allocation2] sm:$0xff]
        %v2886 = vld [vmem:[#allocation2 + $0x8] sm:$0xff]
        %v2887 = vld [vmem:[#allocation2 + $0x10] sm:$0xff]
        %v2888 = vld [vmem:[#allocation2 + $0x18] sm:$0xff]
        %v2889 = vld [vmem:[#allocation2 + $0x20] sm:$0xff]
        %v2890 = vld [vmem:[#allocation2 + $0x28] sm:$0xff]
        %v2891 = vld [vmem:[#allocation2 + $0x30] sm:$0xff]
        %v2892 = vld [vmem:[#allocation2 + $0x38] sm:$0xff]
        %v2893 = vld [vmem:[#allocation2 + $0x40] sm:$0xff]
        %v2894 = vld [vmem:[#allocation2 + $0x48] sm:$0xff]
        %v2895 = vld [vmem:[#allocation2 + $0x50] sm:$0xff]
        %v2896 = vld [vmem:[#allocation2 + $0x58] sm:$0xff]
        %v2897 = vld [vmem:[#allocation2 + $0x60] sm:$0xff]
        %v2898 = vld [vmem:[#allocation2 + $0x68] sm:$0xff]
        %v2899 = vld [vmem:[#allocation2 + $0x70] sm:$0xff]
        %v2900 = vld [vmem:[#allocation2 + $0x78] sm:$0xff]
        %v2901 = vld [vmem:[#allocation2 + $0x80] sm:$0xff]
        %v2902 = vld [vmem:[#allocation2 + $0x88] sm:$0xff]
        %v2903 = vld [vmem:[#allocation2 + $0x90] sm:$0xff]
        %v2904 = vld [vmem:[#allocation2 + $0x98] sm:$0xff]
        %v2905 = vld [vmem:[#allocation2 + $0xa0] sm:$0xff]
        %v2906 = vld [vmem:[#allocation2 + $0xa8] sm:$0xff]
        %v2907 = vld [vmem:[#allocation2 + $0xb0] sm:$0xff]
        %v2908 = vld [vmem:[#allocation2 + $0xb8] sm:$0xff]
        %v2909 = vld [vmem:[#allocation2 + $0xc0] sm:$0xff]
        %v2910 = vld [vmem:[#allocation2 + $0xc8] sm:$0xff]
        %v2911 = vld [vmem:[#allocation2 + $0xd0] sm:$0xff]
        %v2912 = vld [vmem:[#allocation2 + $0xd8] sm:$0xff]
        %v2913 = vld [vmem:[#allocation2 + $0xe0] sm:$0xff]
        %v2914 = vld [vmem:[#allocation2 + $0xe8] sm:$0xff]
        %v2915 = vld [vmem:[#allocation2 + $0xf0] sm:$0xff]
        %v2916 = vld [vmem:[#allocation2 + $0xf8] sm:$0xff]
        %s2917 = sadd.s32 %s311, 7
        %s2918 = smul.u32 %s2917, 128
        %s2919 = scalar_lea.vmem %s1, %s2918
        %v2920 = vld [vmem:[%s2919] sm:$0xff]
        %v2921 = vld [vmem:[%s2919 + $0x8] sm:$0xff]
        %v2922 = vld [vmem:[%s2919 + $0x10] sm:$0xff]
        %v2923 = vld [vmem:[%s2919 + $0x18] sm:$0xff]
        %v2924 = vld [vmem:[%s2919 + $0x20] sm:$0xff]
        %v2925 = vld [vmem:[%s2919 + $0x28] sm:$0xff]
        %v2926 = vld [vmem:[%s2919 + $0x30] sm:$0xff]
        %v2927 = vld [vmem:[%s2919 + $0x38] sm:$0xff]
        %v2928 = vld [vmem:[%s2919 + $0x40] sm:$0xff]
        %v2929 = vld [vmem:[%s2919 + $0x48] sm:$0xff]
        %v2930 = vld [vmem:[%s2919 + $0x50] sm:$0xff]
        %v2931 = vld [vmem:[%s2919 + $0x58] sm:$0xff]
        %v2932 = vld [vmem:[%s2919 + $0x60] sm:$0xff]
        %v2933 = vld [vmem:[%s2919 + $0x68] sm:$0xff]
        %v2934 = vld [vmem:[%s2919 + $0x70] sm:$0xff]
        %v2935 = vld [vmem:[%s2919 + $0x78] sm:$0xff]
        %2936 = vmatprep.subr.mxu0 0.0
        %2937 = vmatpush1.msra.mxu0 %v2935
        %2938 = vmatprep.subr.mxu0 0.0
        %2939 = vmatpush1.msra.mxu0 %v2934
        %2940 = vmatprep.subr.mxu0 0.0
        %2941 = vmatpush1.msra.mxu0 %v2933
        %2942 = vmatprep.subr.mxu0 0.0
        %2943 = vmatpush1.msra.mxu0 %v2932
        %2944 = vmatprep.subr.mxu0 0.0
        %2945 = vmatpush1.msra.mxu0 %v2931
        %2946 = vmatprep.subr.mxu0 0.0
        %2947 = vmatpush1.msra.mxu0 %v2930
        %2948 = vmatprep.subr.mxu0 0.0
        %2949 = vmatpush1.msra.mxu0 %v2929
        %2950 = vmatprep.subr.mxu0 0.0
        %2951 = vmatpush1.msra.mxu0 %v2928
        %2952 = vmatprep.subr.mxu0 0.0
        %2953 = vmatpush1.msra.mxu0 %v2927
        %2954 = vmatprep.subr.mxu0 0.0
        %2955 = vmatpush1.msra.mxu0 %v2926
        %2956 = vmatprep.subr.mxu0 0.0
        %2957 = vmatpush1.msra.mxu0 %v2925
        %2958 = vmatprep.subr.mxu0 0.0
        %2959 = vmatpush1.msra.mxu0 %v2924
        %2960 = vmatprep.subr.mxu0 0.0
        %2961 = vmatpush1.msra.mxu0 %v2923
        %2962 = vmatprep.subr.mxu0 0.0
        %2963 = vmatpush1.msra.mxu0 %v2922
        %2964 = vmatprep.subr.mxu0 0.0
        %2965 = vmatpush1.msra.mxu0 %v2921
        %2966 = vmatprep.subr.mxu0 0.0
        %2967 = vmatpush1.msra.mxu0 %v2920
        %2968 = vmatprep.subr.mxu0 0.0
        %2969 = vmatpush2.msra.mxu0 0.0
        %2970 = vmatprep.subr.mxu0 0.0
        %2971 = vmatpush2.msra.mxu0 0.0
        %2972 = vmatprep.subr.mxu0 0.0
        %2973 = vmatpush2.msra.mxu0 0.0
        %2974 = vmatprep.subr.mxu0 0.0
        %2975 = vmatpush2.msra.mxu0 0.0
        %2976 = vmatprep.subr.mxu0 0.0
        %2977 = vmatpush2.msra.mxu0 0.0
        %2978 = vmatprep.subr.mxu0 0.0
        %2979 = vmatpush2.msra.mxu0 0.0
        %2980 = vmatprep.subr.mxu0 0.0
        %2981 = vmatpush2.msra.mxu0 0.0
        %2982 = vmatprep.subr.mxu0 0.0
        %2983 = vmatpush2.msra.mxu0 0.0
        %2984 = vmatprep.subr.mxu0 0.0
        %2985 = vmatpush2.msra.mxu0 0.0
        %2986 = vmatprep.subr.mxu0 0.0
        %2987 = vmatpush2.msra.mxu0 0.0
        %2988 = vmatprep.subr.mxu0 0.0
        %2989 = vmatpush2.msra.mxu0 0.0
        %2990 = vmatprep.subr.mxu0 0.0
        %2991 = vmatpush2.msra.mxu0 0.0
        %2992 = vmatprep.subr.mxu0 0.0
        %2993 = vmatpush2.msra.mxu0 0.0
        %2994 = vmatprep.subr.mxu0 0.0
        %2995 = vmatpush2.msra.mxu0 0.0
        %2996 = vmatprep.subr.mxu0 0.0
        %2997 = vmatpush2.msra.mxu0 0.0
        %2998 = vmatprep.subr.mxu0 0.0
        %2999 = vmatpush2.msra.mxu0 0.0
        %3000 = vmatprep.mubr.f32.mxu0 0.0
        %3001 = vmatmul.mubr.f32.gmra.mxu0 %v2853
        %v3002 = vpop.f32.mrf.mxu0
        %v3003 = vadd.f32 0.0, %v3002
        %v3004 = vpop.f32.mrf.mxu0
        %3005 = vmatprep.mubr.f32.mxu0 0.0
        %3006 = vmatmul.mubr.f32.gmra.mxu0 %v2854
        %v3007 = vpop.f32.mrf.mxu0
        %v3008 = vadd.f32 0.0, %v3007
        %v3009 = vpop.f32.mrf.mxu0
        %3010 = vmatprep.mubr.f32.mxu0 0.0
        %3011 = vmatmul.mubr.f32.gmra.mxu0 %v2855
        %v3012 = vpop.f32.mrf.mxu0
        %v3013 = vadd.f32 0.0, %v3012
        %v3014 = vpop.f32.mrf.mxu0
        %3015 = vmatprep.mubr.f32.mxu0 0.0
        %3016 = vmatmul.mubr.f32.gmra.mxu0 %v2856
        %v3017 = vpop.f32.mrf.mxu0
        %v3018 = vadd.f32 0.0, %v3017
        %v3019 = vpop.f32.mrf.mxu0
        %3020 = vmatprep.mubr.f32.mxu0 0.0
        %3021 = vmatmul.mubr.f32.gmra.mxu0 %v2857
        %v3022 = vpop.f32.mrf.mxu0
        %v3023 = vadd.f32 0.0, %v3022
        %v3024 = vpop.f32.mrf.mxu0
        %3025 = vmatprep.mubr.f32.mxu0 0.0
        %3026 = vmatmul.mubr.f32.gmra.mxu0 %v2858
        %v3027 = vpop.f32.mrf.mxu0
        %v3028 = vadd.f32 0.0, %v3027
        %v3029 = vpop.f32.mrf.mxu0
        %3030 = vmatprep.mubr.f32.mxu0 0.0
        %3031 = vmatmul.mubr.f32.gmra.mxu0 %v2859
        %v3032 = vpop.f32.mrf.mxu0
        %v3033 = vadd.f32 0.0, %v3032
        %v3034 = vpop.f32.mrf.mxu0
        %3035 = vmatprep.mubr.f32.mxu0 0.0
        %3036 = vmatmul.mubr.f32.gmra.mxu0 %v2860
        %v3037 = vpop.f32.mrf.mxu0
        %v3038 = vadd.f32 0.0, %v3037
        %v3039 = vpop.f32.mrf.mxu0
        %3040 = vmatprep.mubr.f32.mxu0 0.0
        %3041 = vmatmul.mubr.f32.gmra.mxu0 %v2861
        %v3042 = vpop.f32.mrf.mxu0
        %v3043 = vadd.f32 0.0, %v3042
        %v3044 = vpop.f32.mrf.mxu0
        %3045 = vmatprep.mubr.f32.mxu0 0.0
        %3046 = vmatmul.mubr.f32.gmra.mxu0 %v2862
        %v3047 = vpop.f32.mrf.mxu0
        %v3048 = vadd.f32 0.0, %v3047
        %v3049 = vpop.f32.mrf.mxu0
        %3050 = vmatprep.mubr.f32.mxu0 0.0
        %3051 = vmatmul.mubr.f32.gmra.mxu0 %v2863
        %v3052 = vpop.f32.mrf.mxu0
        %v3053 = vadd.f32 0.0, %v3052
        %v3054 = vpop.f32.mrf.mxu0
        %3055 = vmatprep.mubr.f32.mxu0 0.0
        %3056 = vmatmul.mubr.f32.gmra.mxu0 %v2864
        %v3057 = vpop.f32.mrf.mxu0
        %v3058 = vadd.f32 0.0, %v3057
        %v3059 = vpop.f32.mrf.mxu0
        %3060 = vmatprep.mubr.f32.mxu0 0.0
        %3061 = vmatmul.mubr.f32.gmra.mxu0 %v2865
        %v3062 = vpop.f32.mrf.mxu0
        %v3063 = vadd.f32 0.0, %v3062
        %v3064 = vpop.f32.mrf.mxu0
        %3065 = vmatprep.mubr.f32.mxu0 0.0
        %3066 = vmatmul.mubr.f32.gmra.mxu0 %v2866
        %v3067 = vpop.f32.mrf.mxu0
        %v3068 = vadd.f32 0.0, %v3067
        %v3069 = vpop.f32.mrf.mxu0
        %3070 = vmatprep.mubr.f32.mxu0 0.0
        %3071 = vmatmul.mubr.f32.gmra.mxu0 %v2867
        %v3072 = vpop.f32.mrf.mxu0
        %v3073 = vadd.f32 0.0, %v3072
        %v3074 = vpop.f32.mrf.mxu0
        %3075 = vmatprep.mubr.f32.mxu0 0.0
        %3076 = vmatmul.mubr.f32.gmra.mxu0 %v2868
        %v3077 = vpop.f32.mrf.mxu0
        %v3078 = vadd.f32 0.0, %v3077
        %v3079 = vpop.f32.mrf.mxu0
        %3080 = vmatprep.mubr.f32.mxu0 0.0
        %3081 = vmatmul.mubr.f32.gmra.mxu0 %v2869
        %v3082 = vpop.f32.mrf.mxu0
        %v3083 = vadd.f32 0.0, %v3082
        %v3084 = vpop.f32.mrf.mxu0
        %3085 = vmatprep.mubr.f32.mxu0 0.0
        %3086 = vmatmul.mubr.f32.gmra.mxu0 %v2870
        %v3087 = vpop.f32.mrf.mxu0
        %v3088 = vadd.f32 0.0, %v3087
        %v3089 = vpop.f32.mrf.mxu0
        %3090 = vmatprep.mubr.f32.mxu0 0.0
        %3091 = vmatmul.mubr.f32.gmra.mxu0 %v2871
        %v3092 = vpop.f32.mrf.mxu0
        %v3093 = vadd.f32 0.0, %v3092
        %v3094 = vpop.f32.mrf.mxu0
        %3095 = vmatprep.mubr.f32.mxu0 0.0
        %3096 = vmatmul.mubr.f32.gmra.mxu0 %v2872
        %v3097 = vpop.f32.mrf.mxu0
        %v3098 = vadd.f32 0.0, %v3097
        %v3099 = vpop.f32.mrf.mxu0
        %3100 = vmatprep.mubr.f32.mxu0 0.0
        %3101 = vmatmul.mubr.f32.gmra.mxu0 %v2873
        %v3102 = vpop.f32.mrf.mxu0
        %v3103 = vadd.f32 0.0, %v3102
        %v3104 = vpop.f32.mrf.mxu0
        %3105 = vmatprep.mubr.f32.mxu0 0.0
        %3106 = vmatmul.mubr.f32.gmra.mxu0 %v2874
        %v3107 = vpop.f32.mrf.mxu0
        %v3108 = vadd.f32 0.0, %v3107
        %v3109 = vpop.f32.mrf.mxu0
        %3110 = vmatprep.mubr.f32.mxu0 0.0
        %3111 = vmatmul.mubr.f32.gmra.mxu0 %v2875
        %v3112 = vpop.f32.mrf.mxu0
        %v3113 = vadd.f32 0.0, %v3112
        %v3114 = vpop.f32.mrf.mxu0
        %3115 = vmatprep.mubr.f32.mxu0 0.0
        %3116 = vmatmul.mubr.f32.gmra.mxu0 %v2876
        %v3117 = vpop.f32.mrf.mxu0
        %v3118 = vadd.f32 0.0, %v3117
        %v3119 = vpop.f32.mrf.mxu0
        %3120 = vmatprep.mubr.f32.mxu0 0.0
        %3121 = vmatmul.mubr.f32.gmra.mxu0 %v2877
        %v3122 = vpop.f32.mrf.mxu0
        %v3123 = vadd.f32 0.0, %v3122
        %v3124 = vpop.f32.mrf.mxu0
        %3125 = vmatprep.mubr.f32.mxu0 0.0
        %3126 = vmatmul.mubr.f32.gmra.mxu0 %v2878
        %v3127 = vpop.f32.mrf.mxu0
        %v3128 = vadd.f32 0.0, %v3127
        %v3129 = vpop.f32.mrf.mxu0
        %3130 = vmatprep.mubr.f32.mxu0 0.0
        %3131 = vmatmul.mubr.f32.gmra.mxu0 %v2879
        %v3132 = vpop.f32.mrf.mxu0
        %v3133 = vadd.f32 0.0, %v3132
        %v3134 = vpop.f32.mrf.mxu0
        %3135 = vmatprep.mubr.f32.mxu0 0.0
        %3136 = vmatmul.mubr.f32.gmra.mxu0 %v2880
        %v3137 = vpop.f32.mrf.mxu0
        %v3138 = vadd.f32 0.0, %v3137
        %v3139 = vpop.f32.mrf.mxu0
        %3140 = vmatprep.mubr.f32.mxu0 0.0
        %3141 = vmatmul.mubr.f32.gmra.mxu0 %v2881
        %v3142 = vpop.f32.mrf.mxu0
        %v3143 = vadd.f32 0.0, %v3142
        %v3144 = vpop.f32.mrf.mxu0
        %3145 = vmatprep.mubr.f32.mxu0 0.0
        %3146 = vmatmul.mubr.f32.gmra.mxu0 %v2882
        %v3147 = vpop.f32.mrf.mxu0
        %v3148 = vadd.f32 0.0, %v3147
        %v3149 = vpop.f32.mrf.mxu0
        %3150 = vmatprep.mubr.f32.mxu0 0.0
        %3151 = vmatmul.mubr.f32.gmra.mxu0 %v2883
        %v3152 = vpop.f32.mrf.mxu0
        %v3153 = vadd.f32 0.0, %v3152
        %v3154 = vpop.f32.mrf.mxu0
        %3155 = vmatprep.mubr.f32.mxu0 0.0
        %3156 = vmatmul.mubr.f32.gmra.mxu0 %v2884
        %v3157 = vpop.f32.mrf.mxu0
        %v3158 = vadd.f32 0.0, %v3157
        %v3159 = vpop.f32.mrf.mxu0
        %3160 = vdwg.mxu0
        %v3161 = vadd.f32 %v2885, %v3003
        %v3162 = vadd.f32 %v2886, %v3008
        %v3163 = vadd.f32 %v2887, %v3013
        %v3164 = vadd.f32 %v2888, %v3018
        %v3165 = vadd.f32 %v2889, %v3023
        %v3166 = vadd.f32 %v2890, %v3028
        %v3167 = vadd.f32 %v2891, %v3033
        %v3168 = vadd.f32 %v2892, %v3038
        %v3169 = vadd.f32 %v2893, %v3043
        %v3170 = vadd.f32 %v2894, %v3048
        %v3171 = vadd.f32 %v2895, %v3053
        %v3172 = vadd.f32 %v2896, %v3058
        %v3173 = vadd.f32 %v2897, %v3063
        %v3174 = vadd.f32 %v2898, %v3068
        %v3175 = vadd.f32 %v2899, %v3073
        %v3176 = vadd.f32 %v2900, %v3078
        %v3177 = vadd.f32 %v2901, %v3083
        %v3178 = vadd.f32 %v2902, %v3088
        %v3179 = vadd.f32 %v2903, %v3093
        %v3180 = vadd.f32 %v2904, %v3098
        %v3181 = vadd.f32 %v2905, %v3103
        %v3182 = vadd.f32 %v2906, %v3108
        %v3183 = vadd.f32 %v2907, %v3113
        %v3184 = vadd.f32 %v2908, %v3118
        %v3185 = vadd.f32 %v2909, %v3123
        %v3186 = vadd.f32 %v2910, %v3128
        %v3187 = vadd.f32 %v2911, %v3133
        %v3188 = vadd.f32 %v2912, %v3138
        %v3189 = vadd.f32 %v2913, %v3143
        %v3190 = vadd.f32 %v2914, %v3148
        %v3191 = vadd.f32 %v2915, %v3153
        %v3192 = vadd.f32 %v2916, %v3158
        %3193 = vst [vmem:[#allocation2] sm:$0xff] %v3161
        %3194 = vst [vmem:[#allocation2 + $0x8] sm:$0xff] %v3162
        %3195 = vst [vmem:[#allocation2 + $0x10] sm:$0xff] %v3163
        %3196 = vst [vmem:[#allocation2 + $0x18] sm:$0xff] %v3164
        %3197 = vst [vmem:[#allocation2 + $0x20] sm:$0xff] %v3165
        %3198 = vst [vmem:[#allocation2 + $0x28] sm:$0xff] %v3166
        %3199 = vst [vmem:[#allocation2 + $0x30] sm:$0xff] %v3167
        %3200 = vst [vmem:[#allocation2 + $0x38] sm:$0xff] %v3168
        %3201 = vst [vmem:[#allocation2 + $0x40] sm:$0xff] %v3169
        %3202 = vst [vmem:[#allocation2 + $0x48] sm:$0xff] %v3170
        %3203 = vst [vmem:[#allocation2 + $0x50] sm:$0xff] %v3171
        %3204 = vst [vmem:[#allocation2 + $0x58] sm:$0xff] %v3172
        %3205 = vst [vmem:[#allocation2 + $0x60] sm:$0xff] %v3173
        %3206 = vst [vmem:[#allocation2 + $0x68] sm:$0xff] %v3174
        %3207 = vst [vmem:[#allocation2 + $0x70] sm:$0xff] %v3175
        %3208 = vst [vmem:[#allocation2 + $0x78] sm:$0xff] %v3176
        %3209 = vst [vmem:[#allocation2 + $0x80] sm:$0xff] %v3177
        %3210 = vst [vmem:[#allocation2 + $0x88] sm:$0xff] %v3178
        %3211 = vst [vmem:[#allocation2 + $0x90] sm:$0xff] %v3179
        %3212 = vst [vmem:[#allocation2 + $0x98] sm:$0xff] %v3180
        %3213 = vst [vmem:[#allocation2 + $0xa0] sm:$0xff] %v3181
        %3214 = vst [vmem:[#allocation2 + $0xa8] sm:$0xff] %v3182
        %3215 = vst [vmem:[#allocation2 + $0xb0] sm:$0xff] %v3183
        %3216 = vst [vmem:[#allocation2 + $0xb8] sm:$0xff] %v3184
        %3217 = vst [vmem:[#allocation2 + $0xc0] sm:$0xff] %v3185
        %3218 = vst [vmem:[#allocation2 + $0xc8] sm:$0xff] %v3186
        %3219 = vst [vmem:[#allocation2 + $0xd0] sm:$0xff] %v3187
        %3220 = vst [vmem:[#allocation2 + $0xd8] sm:$0xff] %v3188
        %3221 = vst [vmem:[#allocation2 + $0xe0] sm:$0xff] %v3189
        %3222 = vst [vmem:[#allocation2 + $0xe8] sm:$0xff] %v3190
        %3223 = vst [vmem:[#allocation2 + $0xf0] sm:$0xff] %v3191
        %3224 = vst [vmem:[#allocation2 + $0xf8] sm:$0xff] %v3192
        %v3225 = vld [vmem:[%s2480 + $0x2] sm:$0xff]
        %v3226 = vld [vmem:[%s2480 + $0xa] sm:$0xff]
        %v3227 = vld [vmem:[%s2480 + $0x1a] sm:$0xff]
        %v3228 = vld [vmem:[%s2480 + $0x22] sm:$0xff]
        %v3229 = vld [vmem:[%s2480 + $0x32] sm:$0xff]
        %v3230 = vld [vmem:[%s2480 + $0x3a] sm:$0xff]
        %v3231 = vld [vmem:[%s2480 + $0x4a] sm:$0xff]
        %v3232 = vld [vmem:[%s2480 + $0x52] sm:$0xff]
        %v3233 = vld [vmem:[%s2480 + $0x62] sm:$0xff]
        %v3234 = vld [vmem:[%s2480 + $0x6a] sm:$0xff]
        %v3235 = vld [vmem:[%s2480 + $0x7a] sm:$0xff]
        %v3236 = vld [vmem:[%s2480 + $0x82] sm:$0xff]
        %v3237 = vld [vmem:[%s2480 + $0x92] sm:$0xff]
        %v3238 = vld [vmem:[%s2480 + $0x9a] sm:$0xff]
        %v3239 = vld [vmem:[%s2480 + $0xaa] sm:$0xff]
        %v3240 = vld [vmem:[%s2480 + $0xb2] sm:$0xff]
        %v3241 = vld [vmem:[%s2480 + $0xc2] sm:$0xff]
        %v3242 = vld [vmem:[%s2480 + $0xca] sm:$0xff]
        %v3243 = vld [vmem:[%s2480 + $0xda] sm:$0xff]
        %v3244 = vld [vmem:[%s2480 + $0xe2] sm:$0xff]
        %v3245 = vld [vmem:[%s2480 + $0xf2] sm:$0xff]
        %v3246 = vld [vmem:[%s2480 + $0xfa] sm:$0xff]
        %v3247 = vld [vmem:[%s2480 + $0x10a] sm:$0xff]
        %v3248 = vld [vmem:[%s2480 + $0x112] sm:$0xff]
        %v3249 = vld [vmem:[%s2480 + $0x122] sm:$0xff]
        %v3250 = vld [vmem:[%s2480 + $0x12a] sm:$0xff]
        %v3251 = vld [vmem:[%s2480 + $0x13a] sm:$0xff]
        %v3252 = vld [vmem:[%s2480 + $0x142] sm:$0xff]
        %v3253 = vld [vmem:[%s2480 + $0x152] sm:$0xff]
        %v3254 = vld [vmem:[%s2480 + $0x15a] sm:$0xff]
        %v3255 = vld [vmem:[%s2480 + $0x16a] sm:$0xff]
        %v3256 = vld [vmem:[%s2480 + $0x172] sm:$0xff]
        %v3257 = vld [vmem:[#allocation2] sm:$0xff]
        %v3258 = vld [vmem:[#allocation2 + $0x8] sm:$0xff]
        %v3259 = vld [vmem:[#allocation2 + $0x10] sm:$0xff]
        %v3260 = vld [vmem:[#allocation2 + $0x18] sm:$0xff]
        %v3261 = vld [vmem:[#allocation2 + $0x20] sm:$0xff]
        %v3262 = vld [vmem:[#allocation2 + $0x28] sm:$0xff]
        %v3263 = vld [vmem:[#allocation2 + $0x30] sm:$0xff]
        %v3264 = vld [vmem:[#allocation2 + $0x38] sm:$0xff]
        %v3265 = vld [vmem:[#allocation2 + $0x40] sm:$0xff]
        %v3266 = vld [vmem:[#allocation2 + $0x48] sm:$0xff]
        %v3267 = vld [vmem:[#allocation2 + $0x50] sm:$0xff]
        %v3268 = vld [vmem:[#allocation2 + $0x58] sm:$0xff]
        %v3269 = vld [vmem:[#allocation2 + $0x60] sm:$0xff]
        %v3270 = vld [vmem:[#allocation2 + $0x68] sm:$0xff]
        %v3271 = vld [vmem:[#allocation2 + $0x70] sm:$0xff]
        %v3272 = vld [vmem:[#allocation2 + $0x78] sm:$0xff]
        %v3273 = vld [vmem:[#allocation2 + $0x80] sm:$0xff]
        %v3274 = vld [vmem:[#allocation2 + $0x88] sm:$0xff]
        %v3275 = vld [vmem:[#allocation2 + $0x90] sm:$0xff]
        %v3276 = vld [vmem:[#allocation2 + $0x98] sm:$0xff]
        %v3277 = vld [vmem:[#allocation2 + $0xa0] sm:$0xff]
        %v3278 = vld [vmem:[#allocation2 + $0xa8] sm:$0xff]
        %v3279 = vld [vmem:[#allocation2 + $0xb0] sm:$0xff]
        %v3280 = vld [vmem:[#allocation2 + $0xb8] sm:$0xff]
        %v3281 = vld [vmem:[#allocation2 + $0xc0] sm:$0xff]
        %v3282 = vld [vmem:[#allocation2 + $0xc8] sm:$0xff]
        %v3283 = vld [vmem:[#allocation2 + $0xd0] sm:$0xff]
        %v3284 = vld [vmem:[#allocation2 + $0xd8] sm:$0xff]
        %v3285 = vld [vmem:[#allocation2 + $0xe0] sm:$0xff]
        %v3286 = vld [vmem:[#allocation2 + $0xe8] sm:$0xff]
        %v3287 = vld [vmem:[#allocation2 + $0xf0] sm:$0xff]
        %v3288 = vld [vmem:[#allocation2 + $0xf8] sm:$0xff]
        %s3289 = sadd.s32 %s311, 8
        %s3290 = smul.u32 %s3289, 128
        %s3291 = scalar_lea.vmem %s1, %s3290
        %v3292 = vld [vmem:[%s3291] sm:$0xff]
        %v3293 = vld [vmem:[%s3291 + $0x8] sm:$0xff]
        %v3294 = vld [vmem:[%s3291 + $0x10] sm:$0xff]
        %v3295 = vld [vmem:[%s3291 + $0x18] sm:$0xff]
        %v3296 = vld [vmem:[%s3291 + $0x20] sm:$0xff]
        %v3297 = vld [vmem:[%s3291 + $0x28] sm:$0xff]
        %v3298 = vld [vmem:[%s3291 + $0x30] sm:$0xff]
        %v3299 = vld [vmem:[%s3291 + $0x38] sm:$0xff]
        %v3300 = vld [vmem:[%s3291 + $0x40] sm:$0xff]
        %v3301 = vld [vmem:[%s3291 + $0x48] sm:$0xff]
        %v3302 = vld [vmem:[%s3291 + $0x50] sm:$0xff]
        %v3303 = vld [vmem:[%s3291 + $0x58] sm:$0xff]
        %v3304 = vld [vmem:[%s3291 + $0x60] sm:$0xff]
        %v3305 = vld [vmem:[%s3291 + $0x68] sm:$0xff]
        %v3306 = vld [vmem:[%s3291 + $0x70] sm:$0xff]
        %v3307 = vld [vmem:[%s3291 + $0x78] sm:$0xff]
        %3308 = vmatprep.subr.mxu0 0.0
        %3309 = vmatpush1.msra.mxu0 %v3307
        %3310 = vmatprep.subr.mxu0 0.0
        %3311 = vmatpush1.msra.mxu0 %v3306
        %3312 = vmatprep.subr.mxu0 0.0
        %3313 = vmatpush1.msra.mxu0 %v3305
        %3314 = vmatprep.subr.mxu0 0.0
        %3315 = vmatpush1.msra.mxu0 %v3304
        %3316 = vmatprep.subr.mxu0 0.0
        %3317 = vmatpush1.msra.mxu0 %v3303
        %3318 = vmatprep.subr.mxu0 0.0
        %3319 = vmatpush1.msra.mxu0 %v3302
        %3320 = vmatprep.subr.mxu0 0.0
        %3321 = vmatpush1.msra.mxu0 %v3301
        %3322 = vmatprep.subr.mxu0 0.0
        %3323 = vmatpush1.msra.mxu0 %v3300
        %3324 = vmatprep.subr.mxu0 0.0
        %3325 = vmatpush1.msra.mxu0 %v3299
        %3326 = vmatprep.subr.mxu0 0.0
        %3327 = vmatpush1.msra.mxu0 %v3298
        %3328 = vmatprep.subr.mxu0 0.0
        %3329 = vmatpush1.msra.mxu0 %v3297
        %3330 = vmatprep.subr.mxu0 0.0
        %3331 = vmatpush1.msra.mxu0 %v3296
        %3332 = vmatprep.subr.mxu0 0.0
        %3333 = vmatpush1.msra.mxu0 %v3295
        %3334 = vmatprep.subr.mxu0 0.0
        %3335 = vmatpush1.msra.mxu0 %v3294
        %3336 = vmatprep.subr.mxu0 0.0
        %3337 = vmatpush1.msra.mxu0 %v3293
        %3338 = vmatprep.subr.mxu0 0.0
        %3339 = vmatpush1.msra.mxu0 %v3292
        %3340 = vmatprep.subr.mxu0 0.0
        %3341 = vmatpush2.msra.mxu0 0.0
        %3342 = vmatprep.subr.mxu0 0.0
        %3343 = vmatpush2.msra.mxu0 0.0
        %3344 = vmatprep.subr.mxu0 0.0
        %3345 = vmatpush2.msra.mxu0 0.0
        %3346 = vmatprep.subr.mxu0 0.0
        %3347 = vmatpush2.msra.mxu0 0.0
        %3348 = vmatprep.subr.mxu0 0.0
        %3349 = vmatpush2.msra.mxu0 0.0
        %3350 = vmatprep.subr.mxu0 0.0
        %3351 = vmatpush2.msra.mxu0 0.0
        %3352 = vmatprep.subr.mxu0 0.0
        %3353 = vmatpush2.msra.mxu0 0.0
        %3354 = vmatprep.subr.mxu0 0.0
        %3355 = vmatpush2.msra.mxu0 0.0
        %3356 = vmatprep.subr.mxu0 0.0
        %3357 = vmatpush2.msra.mxu0 0.0
        %3358 = vmatprep.subr.mxu0 0.0
        %3359 = vmatpush2.msra.mxu0 0.0
        %3360 = vmatprep.subr.mxu0 0.0
        %3361 = vmatpush2.msra.mxu0 0.0
        %3362 = vmatprep.subr.mxu0 0.0
        %3363 = vmatpush2.msra.mxu0 0.0
        %3364 = vmatprep.subr.mxu0 0.0
        %3365 = vmatpush2.msra.mxu0 0.0
        %3366 = vmatprep.subr.mxu0 0.0
        %3367 = vmatpush2.msra.mxu0 0.0
        %3368 = vmatprep.subr.mxu0 0.0
        %3369 = vmatpush2.msra.mxu0 0.0
        %3370 = vmatprep.subr.mxu0 0.0
        %3371 = vmatpush2.msra.mxu0 0.0
        %3372 = vmatprep.mubr.f32.mxu0 0.0
        %3373 = vmatmul.mubr.f32.gmra.mxu0 %v3225
        %v3374 = vpop.f32.mrf.mxu0
        %v3375 = vadd.f32 0.0, %v3374
        %v3376 = vpop.f32.mrf.mxu0
        %3377 = vmatprep.mubr.f32.mxu0 0.0
        %3378 = vmatmul.mubr.f32.gmra.mxu0 %v3226
        %v3379 = vpop.f32.mrf.mxu0
        %v3380 = vadd.f32 0.0, %v3379
        %v3381 = vpop.f32.mrf.mxu0
        %3382 = vmatprep.mubr.f32.mxu0 0.0
        %3383 = vmatmul.mubr.f32.gmra.mxu0 %v3227
        %v3384 = vpop.f32.mrf.mxu0
        %v3385 = vadd.f32 0.0, %v3384
        %v3386 = vpop.f32.mrf.mxu0
        %3387 = vmatprep.mubr.f32.mxu0 0.0
        %3388 = vmatmul.mubr.f32.gmra.mxu0 %v3228
        %v3389 = vpop.f32.mrf.mxu0
        %v3390 = vadd.f32 0.0, %v3389
        %v3391 = vpop.f32.mrf.mxu0
        %3392 = vmatprep.mubr.f32.mxu0 0.0
        %3393 = vmatmul.mubr.f32.gmra.mxu0 %v3229
        %v3394 = vpop.f32.mrf.mxu0
        %v3395 = vadd.f32 0.0, %v3394
        %v3396 = vpop.f32.mrf.mxu0
        %3397 = vmatprep.mubr.f32.mxu0 0.0
        %3398 = vmatmul.mubr.f32.gmra.mxu0 %v3230
        %v3399 = vpop.f32.mrf.mxu0
        %v3400 = vadd.f32 0.0, %v3399
        %v3401 = vpop.f32.mrf.mxu0
        %3402 = vmatprep.mubr.f32.mxu0 0.0
        %3403 = vmatmul.mubr.f32.gmra.mxu0 %v3231
        %v3404 = vpop.f32.mrf.mxu0
        %v3405 = vadd.f32 0.0, %v3404
        %v3406 = vpop.f32.mrf.mxu0
        %3407 = vmatprep.mubr.f32.mxu0 0.0
        %3408 = vmatmul.mubr.f32.gmra.mxu0 %v3232
        %v3409 = vpop.f32.mrf.mxu0
        %v3410 = vadd.f32 0.0, %v3409
        %v3411 = vpop.f32.mrf.mxu0
        %3412 = vmatprep.mubr.f32.mxu0 0.0
        %3413 = vmatmul.mubr.f32.gmra.mxu0 %v3233
        %v3414 = vpop.f32.mrf.mxu0
        %v3415 = vadd.f32 0.0, %v3414
        %v3416 = vpop.f32.mrf.mxu0
        %3417 = vmatprep.mubr.f32.mxu0 0.0
        %3418 = vmatmul.mubr.f32.gmra.mxu0 %v3234
        %v3419 = vpop.f32.mrf.mxu0
        %v3420 = vadd.f32 0.0, %v3419
        %v3421 = vpop.f32.mrf.mxu0
        %3422 = vmatprep.mubr.f32.mxu0 0.0
        %3423 = vmatmul.mubr.f32.gmra.mxu0 %v3235
        %v3424 = vpop.f32.mrf.mxu0
        %v3425 = vadd.f32 0.0, %v3424
        %v3426 = vpop.f32.mrf.mxu0
        %3427 = vmatprep.mubr.f32.mxu0 0.0
        %3428 = vmatmul.mubr.f32.gmra.mxu0 %v3236
        %v3429 = vpop.f32.mrf.mxu0
        %v3430 = vadd.f32 0.0, %v3429
        %v3431 = vpop.f32.mrf.mxu0
        %3432 = vmatprep.mubr.f32.mxu0 0.0
        %3433 = vmatmul.mubr.f32.gmra.mxu0 %v3237
        %v3434 = vpop.f32.mrf.mxu0
        %v3435 = vadd.f32 0.0, %v3434
        %v3436 = vpop.f32.mrf.mxu0
        %3437 = vmatprep.mubr.f32.mxu0 0.0
        %3438 = vmatmul.mubr.f32.gmra.mxu0 %v3238
        %v3439 = vpop.f32.mrf.mxu0
        %v3440 = vadd.f32 0.0, %v3439
        %v3441 = vpop.f32.mrf.mxu0
        %3442 = vmatprep.mubr.f32.mxu0 0.0
        %3443 = vmatmul.mubr.f32.gmra.mxu0 %v3239
        %v3444 = vpop.f32.mrf.mxu0
        %v3445 = vadd.f32 0.0, %v3444
        %v3446 = vpop.f32.mrf.mxu0
        %3447 = vmatprep.mubr.f32.mxu0 0.0
        %3448 = vmatmul.mubr.f32.gmra.mxu0 %v3240
        %v3449 = vpop.f32.mrf.mxu0
        %v3450 = vadd.f32 0.0, %v3449
        %v3451 = vpop.f32.mrf.mxu0
        %3452 = vmatprep.mubr.f32.mxu0 0.0
        %3453 = vmatmul.mubr.f32.gmra.mxu0 %v3241
        %v3454 = vpop.f32.mrf.mxu0
        %v3455 = vadd.f32 0.0, %v3454
        %v3456 = vpop.f32.mrf.mxu0
        %3457 = vmatprep.mubr.f32.mxu0 0.0
        %3458 = vmatmul.mubr.f32.gmra.mxu0 %v3242
        %v3459 = vpop.f32.mrf.mxu0
        %v3460 = vadd.f32 0.0, %v3459
        %v3461 = vpop.f32.mrf.mxu0
        %3462 = vmatprep.mubr.f32.mxu0 0.0
        %3463 = vmatmul.mubr.f32.gmra.mxu0 %v3243
        %v3464 = vpop.f32.mrf.mxu0
        %v3465 = vadd.f32 0.0, %v3464
        %v3466 = vpop.f32.mrf.mxu0
        %3467 = vmatprep.mubr.f32.mxu0 0.0
        %3468 = vmatmul.mubr.f32.gmra.mxu0 %v3244
        %v3469 = vpop.f32.mrf.mxu0
        %v3470 = vadd.f32 0.0, %v3469
        %v3471 = vpop.f32.mrf.mxu0
        %3472 = vmatprep.mubr.f32.mxu0 0.0
        %3473 = vmatmul.mubr.f32.gmra.mxu0 %v3245
        %v3474 = vpop.f32.mrf.mxu0
        %v3475 = vadd.f32 0.0, %v3474
        %v3476 = vpop.f32.mrf.mxu0
        %3477 = vmatprep.mubr.f32.mxu0 0.0
        %3478 = vmatmul.mubr.f32.gmra.mxu0 %v3246
        %v3479 = vpop.f32.mrf.mxu0
        %v3480 = vadd.f32 0.0, %v3479
        %v3481 = vpop.f32.mrf.mxu0
        %3482 = vmatprep.mubr.f32.mxu0 0.0
        %3483 = vmatmul.mubr.f32.gmra.mxu0 %v3247
        %v3484 = vpop.f32.mrf.mxu0
        %v3485 = vadd.f32 0.0, %v3484
        %v3486 = vpop.f32.mrf.mxu0
        %3487 = vmatprep.mubr.f32.mxu0 0.0
        %3488 = vmatmul.mubr.f32.gmra.mxu0 %v3248
        %v3489 = vpop.f32.mrf.mxu0
        %v3490 = vadd.f32 0.0, %v3489
        %v3491 = vpop.f32.mrf.mxu0
        %3492 = vmatprep.mubr.f32.mxu0 0.0
        %3493 = vmatmul.mubr.f32.gmra.mxu0 %v3249
        %v3494 = vpop.f32.mrf.mxu0
        %v3495 = vadd.f32 0.0, %v3494
        %v3496 = vpop.f32.mrf.mxu0
        %3497 = vmatprep.mubr.f32.mxu0 0.0
        %3498 = vmatmul.mubr.f32.gmra.mxu0 %v3250
        %v3499 = vpop.f32.mrf.mxu0
        %v3500 = vadd.f32 0.0, %v3499
        %v3501 = vpop.f32.mrf.mxu0
        %3502 = vmatprep.mubr.f32.mxu0 0.0
        %3503 = vmatmul.mubr.f32.gmra.mxu0 %v3251
        %v3504 = vpop.f32.mrf.mxu0
        %v3505 = vadd.f32 0.0, %v3504
        %v3506 = vpop.f32.mrf.mxu0
        %3507 = vmatprep.mubr.f32.mxu0 0.0
        %3508 = vmatmul.mubr.f32.gmra.mxu0 %v3252
        %v3509 = vpop.f32.mrf.mxu0
        %v3510 = vadd.f32 0.0, %v3509
        %v3511 = vpop.f32.mrf.mxu0
        %3512 = vmatprep.mubr.f32.mxu0 0.0
        %3513 = vmatmul.mubr.f32.gmra.mxu0 %v3253
        %v3514 = vpop.f32.mrf.mxu0
        %v3515 = vadd.f32 0.0, %v3514
        %v3516 = vpop.f32.mrf.mxu0
        %3517 = vmatprep.mubr.f32.mxu0 0.0
        %3518 = vmatmul.mubr.f32.gmra.mxu0 %v3254
        %v3519 = vpop.f32.mrf.mxu0
        %v3520 = vadd.f32 0.0, %v3519
        %v3521 = vpop.f32.mrf.mxu0
        %3522 = vmatprep.mubr.f32.mxu0 0.0
        %3523 = vmatmul.mubr.f32.gmra.mxu0 %v3255
        %v3524 = vpop.f32.mrf.mxu0
        %v3525 = vadd.f32 0.0, %v3524
        %v3526 = vpop.f32.mrf.mxu0
        %3527 = vmatprep.mubr.f32.mxu0 0.0
        %3528 = vmatmul.mubr.f32.gmra.mxu0 %v3256
        %v3529 = vpop.f32.mrf.mxu0
        %v3530 = vadd.f32 0.0, %v3529
        %v3531 = vpop.f32.mrf.mxu0
        %3532 = vdwg.mxu0
        %v3533 = vadd.f32 %v3257, %v3375
        %v3534 = vadd.f32 %v3258, %v3380
        %v3535 = vadd.f32 %v3259, %v3385
        %v3536 = vadd.f32 %v3260, %v3390
        %v3537 = vadd.f32 %v3261, %v3395
        %v3538 = vadd.f32 %v3262, %v3400
        %v3539 = vadd.f32 %v3263, %v3405
        %v3540 = vadd.f32 %v3264, %v3410
        %v3541 = vadd.f32 %v3265, %v3415
        %v3542 = vadd.f32 %v3266, %v3420
        %v3543 = vadd.f32 %v3267, %v3425
        %v3544 = vadd.f32 %v3268, %v3430
        %v3545 = vadd.f32 %v3269, %v3435
        %v3546 = vadd.f32 %v3270, %v3440
        %v3547 = vadd.f32 %v3271, %v3445
        %v3548 = vadd.f32 %v3272, %v3450
        %v3549 = vadd.f32 %v3273, %v3455
        %v3550 = vadd.f32 %v3274, %v3460
        %v3551 = vadd.f32 %v3275, %v3465
        %v3552 = vadd.f32 %v3276, %v3470
        %v3553 = vadd.f32 %v3277, %v3475
        %v3554 = vadd.f32 %v3278, %v3480
        %v3555 = vadd.f32 %v3279, %v3485
        %v3556 = vadd.f32 %v3280, %v3490
        %v3557 = vadd.f32 %v3281, %v3495
        %v3558 = vadd.f32 %v3282, %v3500
        %v3559 = vadd.f32 %v3283, %v3505
        %v3560 = vadd.f32 %v3284, %v3510
        %v3561 = vadd.f32 %v3285, %v3515
        %v3562 = vadd.f32 %v3286, %v3520
        %v3563 = vadd.f32 %v3287, %v3525
        %v3564 = vadd.f32 %v3288, %v3530
        %3565 = vst [vmem:[#allocation2] sm:$0xff] %v3533
        %3566 = vst [vmem:[#allocation2 + $0x8] sm:$0xff] %v3534
        %3567 = vst [vmem:[#allocation2 + $0x10] sm:$0xff] %v3535
        %3568 = vst [vmem:[#allocation2 + $0x18] sm:$0xff] %v3536
        %3569 = vst [vmem:[#allocation2 + $0x20] sm:$0xff] %v3537
        %3570 = vst [vmem:[#allocation2 + $0x28] sm:$0xff] %v3538
        %3571 = vst [vmem:[#allocation2 + $0x30] sm:$0xff] %v3539
        %3572 = vst [vmem:[#allocation2 + $0x38] sm:$0xff] %v3540
        %3573 = vst [vmem:[#allocation2 + $0x40] sm:$0xff] %v3541
        %3574 = vst [vmem:[#allocation2 + $0x48] sm:$0xff] %v3542
        %3575 = vst [vmem:[#allocation2 + $0x50] sm:$0xff] %v3543
        %3576 = vst [vmem:[#allocation2 + $0x58] sm:$0xff] %v3544
        %3577 = vst [vmem:[#allocation2 + $0x60] sm:$0xff] %v3545
        %3578 = vst [vmem:[#allocation2 + $0x68] sm:$0xff] %v3546
        %3579 = vst [vmem:[#allocation2 + $0x70] sm:$0xff] %v3547
        %3580 = vst [vmem:[#allocation2 + $0x78] sm:$0xff] %v3548
        %3581 = vst [vmem:[#allocation2 + $0x80] sm:$0xff] %v3549
        %3582 = vst [vmem:[#allocation2 + $0x88] sm:$0xff] %v3550
        %3583 = vst [vmem:[#allocation2 + $0x90] sm:$0xff] %v3551
        %3584 = vst [vmem:[#allocation2 + $0x98] sm:$0xff] %v3552
        %3585 = vst [vmem:[#allocation2 + $0xa0] sm:$0xff] %v3553
        %3586 = vst [vmem:[#allocation2 + $0xa8] sm:$0xff] %v3554
        %3587 = vst [vmem:[#allocation2 + $0xb0] sm:$0xff] %v3555
        %3588 = vst [vmem:[#allocation2 + $0xb8] sm:$0xff] %v3556
        %3589 = vst [vmem:[#allocation2 + $0xc0] sm:$0xff] %v3557
        %3590 = vst [vmem:[#allocation2 + $0xc8] sm:$0xff] %v3558
        %3591 = vst [vmem:[#allocation2 + $0xd0] sm:$0xff] %v3559
        %3592 = vst [vmem:[#allocation2 + $0xd8] sm:$0xff] %v3560
        %3593 = vst [vmem:[#allocation2 + $0xe0] sm:$0xff] %v3561
        %3594 = vst [vmem:[#allocation2 + $0xe8] sm:$0xff] %v3562
        %3595 = vst [vmem:[#allocation2 + $0xf0] sm:$0xff] %v3563
        %3596 = vst [vmem:[#allocation2 + $0xf8] sm:$0xff] %v3564
        %p3597 = scmp.eq.s32.totalorder %s24, 2
        // Predicated region
        $region37: #{tpu_custom_call.1} parent=31 // pred_check
          %p3598 = pneg %p3597
        $region38: #{tpu_custom_call.1} parent=31 // pred_check_branch
          %3600 = sbr.rel (%p3598) target = $region40
        $region39: #{tpu_custom_call.1} parent=31 // pred_region
          %v3601 = vld [vmem:[#allocation2] sm:$0xff]
          %v3602 = vld [vmem:[#allocation2 + $0x8] sm:$0xff]
          %v3603 = vld [vmem:[#allocation2 + $0x10] sm:$0xff]
          %v3604 = vld [vmem:[#allocation2 + $0x18] sm:$0xff]
          %v3605 = vld [vmem:[#allocation2 + $0x20] sm:$0xff]
          %v3606 = vld [vmem:[#allocation2 + $0x28] sm:$0xff]
          %v3607 = vld [vmem:[#allocation2 + $0x30] sm:$0xff]
          %v3608 = vld [vmem:[#allocation2 + $0x38] sm:$0xff]
          %v3609 = vld [vmem:[#allocation2 + $0x40] sm:$0xff]
          %v3610 = vld [vmem:[#allocation2 + $0x48] sm:$0xff]
          %v3611 = vld [vmem:[#allocation2 + $0x50] sm:$0xff]
          %v3612 = vld [vmem:[#allocation2 + $0x58] sm:$0xff]
          %v3613 = vld [vmem:[#allocation2 + $0x60] sm:$0xff]
          %v3614 = vld [vmem:[#allocation2 + $0x68] sm:$0xff]
          %v3615 = vld [vmem:[#allocation2 + $0x70] sm:$0xff]
          %v3616 = vld [vmem:[#allocation2 + $0x78] sm:$0xff]
          %v3617 = vld [vmem:[#allocation2 + $0x80] sm:$0xff]
          %v3618 = vld [vmem:[#allocation2 + $0x88] sm:$0xff]
          %v3619 = vld [vmem:[#allocation2 + $0x90] sm:$0xff]
          %v3620 = vld [vmem:[#allocation2 + $0x98] sm:$0xff]
          %v3621 = vld [vmem:[#allocation2 + $0xa0] sm:$0xff]
          %v3622 = vld [vmem:[#allocation2 + $0xa8] sm:$0xff]
          %v3623 = vld [vmem:[#allocation2 + $0xb0] sm:$0xff]
          %v3624 = vld [vmem:[#allocation2 + $0xb8] sm:$0xff]
          %v3625 = vld [vmem:[#allocation2 + $0xc0] sm:$0xff]
          %v3626 = vld [vmem:[#allocation2 + $0xc8] sm:$0xff]
          %v3627 = vld [vmem:[#allocation2 + $0xd0] sm:$0xff]
          %v3628 = vld [vmem:[#allocation2 + $0xd8] sm:$0xff]
          %v3629 = vld [vmem:[#allocation2 + $0xe0] sm:$0xff]
          %v3630 = vld [vmem:[#allocation2 + $0xe8] sm:$0xff]
          %v3631 = vld [vmem:[#allocation2 + $0xf0] sm:$0xff]
          %v3632 = vld [vmem:[#allocation2 + $0xf8] sm:$0xff]
          %v3633 = vld [vmem:[%s2] sm:$0x1]
          %v3635 = vlaneseq
          %v3636 = vshrl.u32 %v3635, 7
          %v3637 = vsub.s32 0, %v3636
          %v3638 = vrot.slane %v3633, %v3637
          %v3640 = vadd.f32 %v3601, %v3638
          %v3641 = vadd.f32 %v3602, %v3638
          %v3642 = vadd.f32 %v3603, %v3638
          %v3643 = vadd.f32 %v3604, %v3638
          %v3644 = vadd.f32 %v3605, %v3638
          %v3645 = vadd.f32 %v3606, %v3638
          %v3646 = vadd.f32 %v3607, %v3638
          %v3647 = vadd.f32 %v3608, %v3638
          %v3648 = vadd.f32 %v3609, %v3638
          %v3649 = vadd.f32 %v3610, %v3638
          %v3650 = vadd.f32 %v3611, %v3638
          %v3651 = vadd.f32 %v3612, %v3638
          %v3652 = vadd.f32 %v3613, %v3638
          %v3653 = vadd.f32 %v3614, %v3638
          %v3654 = vadd.f32 %v3615, %v3638
          %v3655 = vadd.f32 %v3616, %v3638
          %v3656 = vadd.f32 %v3617, %v3638
          %v3657 = vadd.f32 %v3618, %v3638
          %v3658 = vadd.f32 %v3619, %v3638
          %v3659 = vadd.f32 %v3620, %v3638
          %v3660 = vadd.f32 %v3621, %v3638
          %v3661 = vadd.f32 %v3622, %v3638
          %v3662 = vadd.f32 %v3623, %v3638
          %v3663 = vadd.f32 %v3624, %v3638
          %v3664 = vadd.f32 %v3625, %v3638
          %v3665 = vadd.f32 %v3626, %v3638
          %v3666 = vadd.f32 %v3627, %v3638
          %v3667 = vadd.f32 %v3628, %v3638
          %v3668 = vadd.f32 %v3629, %v3638
          %v3669 = vadd.f32 %v3630, %v3638
          %v3670 = vadd.f32 %v3631, %v3638
          %v3671 = vadd.f32 %v3632, %v3638
          %3672 = vst [vmem:[%s199] sm:$0xff] %v3640
          %3673 = vst [vmem:[%s199 + $0x8] sm:$0xff] %v3641
          %3674 = vst [vmem:[%s199 + $0x10] sm:$0xff] %v3642
          %3675 = vst [vmem:[%s199 + $0x18] sm:$0xff] %v3643
          %3676 = vst [vmem:[%s199 + $0x20] sm:$0xff] %v3644
          %3677 = vst [vmem:[%s199 + $0x28] sm:$0xff] %v3645
          %3678 = vst [vmem:[%s199 + $0x30] sm:$0xff] %v3646
          %3679 = vst [vmem:[%s199 + $0x38] sm:$0xff] %v3647
          %3680 = vst [vmem:[%s199 + $0x40] sm:$0xff] %v3648
          %3681 = vst [vmem:[%s199 + $0x48] sm:$0xff] %v3649
          %3682 = vst [vmem:[%s199 + $0x50] sm:$0xff] %v3650
          %3683 = vst [vmem:[%s199 + $0x58] sm:$0xff] %v3651
          %3684 = vst [vmem:[%s199 + $0x60] sm:$0xff] %v3652
          %3685 = vst [vmem:[%s199 + $0x68] sm:$0xff] %v3653
          %3686 = vst [vmem:[%s199 + $0x70] sm:$0xff] %v3654
          %3687 = vst [vmem:[%s199 + $0x78] sm:$0xff] %v3655
          %3688 = vst [vmem:[%s199 + $0x80] sm:$0xff] %v3656
          %3689 = vst [vmem:[%s199 + $0x88] sm:$0xff] %v3657
          %3690 = vst [vmem:[%s199 + $0x90] sm:$0xff] %v3658
          %3691 = vst [vmem:[%s199 + $0x98] sm:$0xff] %v3659
          %3692 = vst [vmem:[%s199 + $0xa0] sm:$0xff] %v3660
          %3693 = vst [vmem:[%s199 + $0xa8] sm:$0xff] %v3661
          %3694 = vst [vmem:[%s199 + $0xb0] sm:$0xff] %v3662
          %3695 = vst [vmem:[%s199 + $0xb8] sm:$0xff] %v3663
          %3696 = vst [vmem:[%s199 + $0xc0] sm:$0xff] %v3664
          %3697 = vst [vmem:[%s199 + $0xc8] sm:$0xff] %v3665
          %3698 = vst [vmem:[%s199 + $0xd0] sm:$0xff] %v3666
          %3699 = vst [vmem:[%s199 + $0xd8] sm:$0xff] %v3667
          %3700 = vst [vmem:[%s199 + $0xe0] sm:$0xff] %v3668
          %3701 = vst [vmem:[%s199 + $0xe8] sm:$0xff] %v3669
          %3702 = vst [vmem:[%s199 + $0xf0] sm:$0xff] %v3670
          %3703 = vst [vmem:[%s199 + $0xf8] sm:$0xff] %v3671
        $region40: #{tpu_custom_call.1} parent=31 // pred_fallthru
          _
        %s3704 = sand.u32 %s118, 1
        %s3705 = scalar_lea.sflag [#allocation4], %s3704
        %s3706 = sand.u32 %s118, 1
        %s3707 = smul.addr %s3706, 256
        %s3708 = scalar_lea.vmem [#allocation3], %s3707
        // Predicated region
        $region41: #{tpu_custom_call.1} parent=31 // pred_check
          %p3709 = pneg %p128
        $region42: #{tpu_custom_call.1} parent=31 // pred_check_branch
          %3711 = sbr.rel (%p3709) target = $region44
        $region43: #{tpu_custom_call.1} parent=31 // pred_region
          %s3713 = ssub.s32 4096, 4096
          %3714 = vsyncadd %s3705, %s3713
          %s3715 = smul.addr %s23, 32
          %s3716 = smul.addr %s22, 512
          %s3717 = sadd.s32 %s3715, %s3716
          %s3718 = smul.addr %s3717, 128
          %s3719 = scalar_lea.hbm %s3, %s3718
          %s3720 = sshll.u32 %s3708, 4
          %s3721 = int_to_ptr.vmem [resolvable:$true] %s3720
          %3726 = dma.vmem_to_hbm [thread:$0]  %s3721, 4096, %s3719, %s3705, 128, 128, 8
        $region44: #{tpu_custom_call.1} parent=31 // pred_fallthru
          _
      $region32: #{tpu_custom_call.1} parent=5 // pred_fallthru
        _
      %p3727 = scmp.le.s32.totalorder 2, %s12
      // Predicated region
      $region45: #{tpu_custom_call.1} parent=5 // pred_check
        %p3728 = pneg %p3727
      $region46: #{tpu_custom_call.1} parent=5 // pred_check_branch
        %3730 = sbr.rel (%p3728) target = $region48
      $region47: #{tpu_custom_call.1} parent=5 // pred_region
        %s3731 = ssub.s32 %s12, 2
        // Predicated region
        $region49: #{tpu_custom_call.1} parent=47 // pred_check
          %p3732 = pneg %p134
        $region50: #{tpu_custom_call.1} parent=47 // pred_check_branch
          %3734 = sbr.rel (%p3732) target = $region52
        $region51: #{tpu_custom_call.1} parent=47 // pred_region
          %s3735 = sand.u32 %s119, 1
          %s3736 = scalar_lea.sflag [#allocation4], %s3735
          %s3737 = sand.u32 %s119, 1
          %s3738 = smul.addr %s3737, 256
          %s3739 = scalar_lea.vmem [#allocation3], %s3738
          %3740 = dma.done %s3736, 4096
        $region52: #{tpu_custom_call.1} parent=47 // pred_fallthru
          _
      $region48: #{tpu_custom_call.1} parent=5 // pred_fallthru
        _
    $region6: #{tpu_custom_call.1} parent=1 // loop_footer
      %s16 = sadd.s32 1, %s12
    $region7: #{tpu_custom_call.1} parent=1 // loop_footer_branch
      %11 = sbr.rel target = $region3
    $region8: #{tpu_custom_call.1} parent=1 // loop_exit
      _
    %3741 = vsyncpa [#allocation4], 1
    %s3742 = scalar_lea.sflag [#allocation4], 1
    %3743 = vsyncpa %s3742, 1

</llo_original>
